<compile_context>
chip_gen: v5e
topology: v5e:2x2
jax: 0.10.0
libtpu: 0.0.40
codegen_flags: <defaults>
</compile_context>

<pallas_src>
import math
import functools

import jax
import jax.numpy as jnp
from jax.experimental import pallas as pl
from jax.experimental.pallas import tpu as pltpu


# ----------------------------------------------------------------------------
# Fused encoder-layer kernel
# grid = (N, L // TQ, F // TF); axes: batch (parallel), query tile (parallel),
# FFN chunk (arbitrary / reduction).
# ----------------------------------------------------------------------------

def _layernorm(x, gamma, beta, eps):
    mean = jnp.mean(x, axis=-1, keepdims=True)
    c = x - mean
    var = jnp.mean(c * c, axis=-1, keepdims=True)
    return c * jax.lax.rsqrt(var + eps) * gamma + beta


def _encoder_layer_kernel(xq_ref, xkv_ref, wq_ref, bq_ref, wkv_ref, bkv_ref,
                          wo_ref, bo_ref, g1_ref, be1_ref,
                          w1_ref, b1_ref, w2_ref, b2_ref, g2_ref, be2_ref,
                          o_ref, y_scr, acc_scr, *, nhead, eps):
    ft = pl.program_id(2)
    n_ft = pl.num_programs(2)

    _, TQ, E = xq_ref.shape
    Dh = E // nhead

    # ---- attention + out-proj + residual + LayerNorm1 (only at first FFN chunk) ----
    @pl.when(ft == 0)
    def _attention_and_norm1():
        xq = xq_ref[0]                                   # (TQ, E) f32 (residual)
        xkv = xkv_ref[0]                                 # (L,  E) f32

        # Projections on the MXU: bf16 operands, f32 accumulation.
        # 1/sqrt(Dh) is pre-folded into wq/bq at parameter-prep time.
        q = jnp.dot(xq.astype(jnp.bfloat16), wq_ref[...],
                    preferred_element_type=jnp.float32) + bq_ref[...]        # (TQ, E)
        kv = jnp.dot(xkv.astype(jnp.bfloat16), wkv_ref[...],
                     preferred_element_type=jnp.float32) + bkv_ref[...]      # (L, 2E)
        k = kv[:, :E]
        v = kv[:, E:]

        kT = k.T.astype(jnp.bfloat16)                    # one transpose for all heads
        q_b = q.astype(jnp.bfloat16)
        v_b = v.astype(jnp.bfloat16)

        # Per-head softmax(q kT) v with the out-projection folded into the loop
        # (no lane-dim concat of head outputs).
        attn = jnp.zeros((TQ, E), jnp.float32)
        for h in range(nhead):
            lo = h * Dh
            qh = q_b[:, lo:lo + Dh]                      # (TQ, Dh)
            khT = kT[lo:lo + Dh, :]                      # (Dh, L)
            vh = v_b[:, lo:lo + Dh]                      # (L, Dh)
            s = jnp.dot(qh, khT, preferred_element_type=jnp.float32)         # (TQ, L)
            s = s - jnp.max(s, axis=-1, keepdims=True)
            p = jnp.exp(s)
            p = p * pl.reciprocal(jnp.sum(p, axis=-1, keepdims=True),
                                  approx=True)           # EUP slot
            oh = jnp.dot(p.astype(jnp.bfloat16), vh,
                         preferred_element_type=jnp.float32)                 # (TQ, Dh)
            attn = attn + jnp.dot(oh.astype(jnp.bfloat16), wo_ref[lo:lo + Dh, :],
                                  preferred_element_type=jnp.float32)        # (TQ, E)
        attn = attn + bo_ref[...]

        y_scr[...] = _layernorm(xq + attn, g1_ref[...], be1_ref[...], eps)
        acc_scr[...] = jnp.zeros_like(acc_scr)

    # ---- FFN chunk over F (every step): relu(y @ w1_chunk) @ w2_chunk ----
    y_b = y_scr[...].astype(jnp.bfloat16)                                    # (TQ, E)
    hmid = jnp.dot(y_b, w1_ref[...], preferred_element_type=jnp.float32) + b1_ref[...]
    hmid = jnp.maximum(hmid, 0.0)                                            # (TQ, TF)
    acc_scr[...] += jnp.dot(hmid.astype(jnp.bfloat16), w2_ref[...],
                            preferred_element_type=jnp.float32)              # (TQ, E)

    # ---- residual + LayerNorm2 + write (only at last FFN chunk) ----
    @pl.when(ft == n_ft - 1)
    def _norm2_and_write():
        ff = acc_scr[...] + b2_ref[...]
        o_ref[0] = _layernorm(y_scr[...] + ff, g2_ref[...], be2_ref[...], eps)


# ----------------------------------------------------------------------------
# One-time parameter preparation (hoisted out of the forward pass):
# transpose, cast to bf16, fold 1/sqrt(Dh) into the Q projection.
# ----------------------------------------------------------------------------

def prepare_params(params, nhead):
    E = params["out_w"].shape[0]
    Dh = E // nhead
    scale = 1.0 / math.sqrt(Dh)

    wq, wk, wv = jnp.split(params["in_proj_w"], 3, axis=0)        # each (E, E)
    bq, bk, bv = jnp.split(params["in_proj_b"], 3, axis=0)

    f32 = jnp.float32
    return {
        "wq": (wq.T * scale).astype(jnp.bfloat16),                 # (E, E), scale folded
        "bq": (bq * scale).reshape(1, E).astype(f32),
        "wkv": jnp.concatenate([wk.T, wv.T], axis=1).astype(jnp.bfloat16),   # (E, 2E)
        "bkv": jnp.concatenate([bk, bv]).reshape(1, 2 * E).astype(f32),
        "wo": params["out_w"].T.astype(jnp.bfloat16),              # (E, E)
        "bo": params["out_b"].reshape(1, E).astype(f32),
        "w1": params["lin1_w"].T.astype(jnp.bfloat16),             # (E, F)
        "b1": params["lin1_b"].reshape(1, -1).astype(f32),
        "w2": params["lin2_w"].T.astype(jnp.bfloat16),             # (F, E)
        "b2": params["lin2_b"].reshape(1, E).astype(f32),
        "g1": params["norm1_g"].reshape(1, E).astype(f32),
        "be1": params["norm1_b"].reshape(1, E).astype(f32),
        "g2": params["norm2_g"].reshape(1, E).astype(f32),
        "be2": params["norm2_b"].reshape(1, E).astype(f32),
    }


def _vmem_limit_bytes():
    # Explicit scoped-VMEM limit with headroom; safe default if the query fails.
    try:
        cap = pltpu.get_tpu_info().vmem_capacity_bytes
    except Exception:
        cap = 64 * 1024 * 1024
    return min(int(cap * 0.8), 100 * 1024 * 1024)


def transformer_encoder_layer(src, prep, nhead, eps=1e-5, tq=128, tf=512):
    """src: (L, N, E) seq-first (PyTorch convention). prep: prepare_params output."""
    L, N, E = src.shape
    F = prep["w1"].shape[1]

    TQ = tq if (L > tq and L % tq == 0) else L       # query tile (rows of the output)
    TF = tf if (F > tf and F % tf == 0) else F       # FFN hidden chunk
    grid = (N, L // TQ, F // TF)

    # Single layout transform at the boundary: batch-major for the grid.
    x = jnp.transpose(src, (1, 0, 2))                # (N, L, E)

    kernel = functools.partial(_encoder_layer_kernel, nhead=nhead, eps=eps)
    args = (x, x, prep["wq"], prep["bq"], prep["wkv"], prep["bkv"],
            prep["wo"], prep["bo"], prep["g1"], prep["be1"],
            prep["w1"], prep["b1"], prep["w2"], prep["b2"], prep["g2"], prep["be2"])

    def _build(single_buffer_weights):
        def const_spec(shape):
            nd = len(shape)
            if single_buffer_weights:
                # Constant block index -> fetched once, single-buffered (halves weight VMEM).
                return pl.BlockSpec(shape, lambda n, qi, ft: (0,) * nd,
                                    pipeline_mode=pl.Buffered(1))
            return pl.BlockSpec(shape, lambda n, qi, ft: (0,) * nd)

        return pl.pallas_call(
            kernel,
            out_shape=jax.ShapeDtypeStruct((N, L, E), jnp.float32),
            grid=grid,
            in_specs=[
                pl.BlockSpec((1, TQ, E), lambda n, qi, ft: (n, qi, 0)),   # query rows
                pl.BlockSpec((1, L, E), lambda n, qi, ft: (n, 0, 0)),     # full seq (K/V)
                const_spec((E, E)),        # wq (bf16, scale folded)
                const_spec((1, E)),        # bq
                const_spec((E, 2 * E)),    # wkv (bf16)
                const_spec((1, 2 * E)),    # bkv
                const_spec((E, E)),        # wo (bf16)
                const_spec((1, E)),        # bo
                const_spec((1, E)),        # norm1 gamma
                const_spec((1, E)),        # norm1 beta
                pl.BlockSpec((E, TF), lambda n, qi, ft: (0, ft)),         # w1 chunk (bf16)
                pl.BlockSpec((1, TF), lambda n, qi, ft: (0, ft)),         # b1 chunk
                pl.BlockSpec((TF, E), lambda n, qi, ft: (ft, 0)),         # w2 chunk (bf16)
                const_spec((1, E)),        # b2
                const_spec((1, E)),        # norm2 gamma
                const_spec((1, E)),        # norm2 beta
            ],
            out_specs=pl.BlockSpec((1, TQ, E), lambda n, qi, ft: (n, qi, 0)),
            scratch_shapes=[pltpu.VMEM((TQ, E), jnp.float32),   # y (post-norm1), persists over ft
                            pltpu.VMEM((TQ, E), jnp.float32)],  # FFN f32 accumulator
            compiler_params=pltpu.CompilerParams(
                dimension_semantics=("parallel", "parallel", "arbitrary"),
                vmem_limit_bytes=_vmem_limit_bytes()),
        )

    try:
        out = _build(True)(*args)
    except Exception:
        # Fallback: same kernel/specs with default double-buffered weights
        # (in case pipeline_mode=pl.Buffered(1) is unsupported by this jax build).
        out = _build(False)(*args)

    return jnp.transpose(out, (1, 0, 2))             # back to (L, N, E)


# ----------------------------------------------------------------------------
# Pure-JAX reference (mirrors PyTorch semantics, dropout = identity, f32)
# ----------------------------------------------------------------------------

def _ref_layer(src, p, nhead, eps=1e-5):
    L, N, E = src.shape
    Dh = E // nhead
    x2 = src.reshape(L * N, E)
    wq, wk, wv = jnp.split(p["in_proj_w"], 3, axis=0)
    bq, bk, bv = jnp.split(p["in_proj_b"], 3, axis=0)
    q = (x2 @ wq.T + bq).reshape(L, N * nhead, Dh).transpose(1, 0, 2) / math.sqrt(Dh)
    k = (x2 @ wk.T + bk).reshape(L, N * nhead, Dh).transpose(1, 0, 2)
    v = (x2 @ wv.T + bv).reshape(L, N * nhead, Dh).transpose(1, 0, 2)
    s = jnp.einsum("bld,bsd->bls", q, k)
    a = jax.nn.softmax(s, axis=-1)
    o = jnp.einsum("bls,bsd->bld", a, v).transpose(1, 0, 2).reshape(L * N, E)
    o = o @ p["out_w"].T + p["out_b"]

    def ln(y, g, b):
        m = jnp.mean(y, axis=-1, keepdims=True)
        var = jnp.mean((y - m) ** 2, axis=-1, keepdims=True)
        return (y - m) / jnp.sqrt(var + eps) * g + b

    y = ln(x2 + o, p["norm1_g"], p["norm1_b"])
    h = jnp.maximum(y @ p["lin1_w"].T + p["lin1_b"], 0.0)
    ff = h @ p["lin2_w"].T + p["lin2_b"]
    return ln(y + ff, p["norm2_g"], p["norm2_b"]).reshape(L, N, E)


# ----------------------------------------------------------------------------
# Deterministic parameter init + driver
# ----------------------------------------------------------------------------

def init_params(key, d_model, nhead, dim_feedforward):
    ks = jax.random.split(key, 8)
    return {
        "in_proj_w": jax.random.normal(ks[0], (3 * d_model, d_model), jnp.float32) * 0.05,
        "in_proj_b": jax.random.normal(ks[1], (3 * d_model,), jnp.float32) * 0.01,
        "out_w": jax.random.normal(ks[2], (d_model, d_model), jnp.float32) * 0.05,
        "out_b": jax.random.normal(ks[3], (d_model,), jnp.float32) * 0.01,
        "lin1_w": jax.random.normal(ks[4], (dim_feedforward, d_model), jnp.float32) * 0.05,
        "lin1_b": jax.random.normal(ks[5], (dim_feedforward,), jnp.float32) * 0.01,
        "lin2_w": jax.random.normal(ks[6], (d_model, dim_feedforward), jnp.float32) * 0.05,
        "lin2_b": jax.random.normal(ks[7], (d_model,), jnp.float32) * 0.01,
        "norm1_g": jnp.ones((d_model,), jnp.float32),
        "norm1_b": jnp.zeros((d_model,), jnp.float32),
        "norm2_g": jnp.ones((d_model,), jnp.float32),
        "norm2_b": jnp.zeros((d_model,), jnp.float32),
    }


if __name__ == "__main__":
    d_model, nhead, dim_feedforward = 32, 4, 64
    L, N = 8, 2                      # seq len, batch

    root = jax.random.PRNGKey(0)
    k_p, k_s = jax.random.split(root, 2)
    params = init_params(k_p, d_model, nhead, dim_feedforward)
    src = jax.random.normal(k_s, (L, N, d_model), jnp.float32)

    prep = prepare_params(params, nhead)          # one-time weight prep (hoisted)
    out = transformer_encoder_layer(src, prep, nhead)
    out = jax.block_until_ready(out)

    ref = _ref_layer(src, params, nhead)
    assert out.shape == (L, N, d_model)
    # bf16 matmul operands (f32 accumulation) + approx softmax reciprocal -> loose tolerance
    diff = float(jnp.max(jnp.abs(out - ref)))
    assert jnp.allclose(out, ref, rtol=2e-2, atol=2e-2), (
        f"Pallas output mismatch vs JAX reference (max|diff|={diff})")

    print("KERNEL_OK")
</pallas_src>

<mosaic_0001>
module attributes {stable_mosaic.version = 11 : i64} {
  func.func @_encoder_layer_kernel(%arg0: i32, %arg1: i32, %arg2: i32, %arg3: memref<1x8x32xf32, #tpu.memory_space<vmem>>, %arg4: memref<1x8x32xf32, #tpu.memory_space<vmem>>, %arg5: memref<32x32xbf16, #tpu.memory_space<vmem>>, %arg6: memref<1x32xf32, #tpu.memory_space<vmem>>, %arg7: memref<32x64xbf16, #tpu.memory_space<vmem>>, %arg8: memref<1x64xf32, #tpu.memory_space<vmem>>, %arg9: memref<32x32xbf16, #tpu.memory_space<vmem>>, %arg10: memref<1x32xf32, #tpu.memory_space<vmem>>, %arg11: memref<1x32xf32, #tpu.memory_space<vmem>>, %arg12: memref<1x32xf32, #tpu.memory_space<vmem>>, %arg13: memref<32x64xbf16, #tpu.memory_space<vmem>>, %arg14: memref<1x64xf32, #tpu.memory_space<vmem>>, %arg15: memref<64x32xbf16, #tpu.memory_space<vmem>>, %arg16: memref<1x32xf32, #tpu.memory_space<vmem>>, %arg17: memref<1x32xf32, #tpu.memory_space<vmem>>, %arg18: memref<1x32xf32, #tpu.memory_space<vmem>>, %arg19: memref<1x8x32xf32, #tpu.memory_space<vmem>>, %arg20: memref<8x32xf32, #tpu.memory_space<vmem>>, %arg21: memref<8x32xf32, #tpu.memory_space<vmem>>) attributes {dimension_semantics = [#tpu.dimension_semantics<parallel>, #tpu.dimension_semantics<parallel>, #tpu.dimension_semantics<arbitrary>], iteration_bounds = array<i64: 2, 1, 1>, scalar_prefetch = 0 : i64, scratch_operands = 2 : i64, tpu.core_type = #tpu.core_type<tc>, window_params = [{transform_indices = @transform_0, window_bounds = array<i64: 1, 8, 32>}, {transform_indices = @transform_1, window_bounds = array<i64: 1, 8, 32>}, {pipeline_mode = #tpu.pipeline_mode<synchronous>, transform_indices = @transform_2, window_bounds = array<i64: 32, 32>}, {pipeline_mode = #tpu.pipeline_mode<synchronous>, transform_indices = @transform_3, window_bounds = array<i64: 1, 32>}, {pipeline_mode = #tpu.pipeline_mode<synchronous>, transform_indices = @transform_4, window_bounds = array<i64: 32, 64>}, {pipeline_mode = #tpu.pipeline_mode<synchronous>, transform_indices = @transform_5, window_bounds = array<i64: 1, 64>}, {pipeline_mode = #tpu.pipeline_mode<synchronous>, transform_indices = @transform_6, window_bounds = array<i64: 32, 32>}, {pipeline_mode = #tpu.pipeline_mode<synchronous>, transform_indices = @transform_7, window_bounds = array<i64: 1, 32>}, {pipeline_mode = #tpu.pipeline_mode<synchronous>, transform_indices = @transform_8, window_bounds = array<i64: 1, 32>}, {pipeline_mode = #tpu.pipeline_mode<synchronous>, transform_indices = @transform_9, window_bounds = array<i64: 1, 32>}, {transform_indices = @transform_10, window_bounds = array<i64: 32, 64>}, {transform_indices = @transform_11, window_bounds = array<i64: 1, 64>}, {transform_indices = @transform_12, window_bounds = array<i64: 64, 32>}, {pipeline_mode = #tpu.pipeline_mode<synchronous>, transform_indices = @transform_13, window_bounds = array<i64: 1, 32>}, {pipeline_mode = #tpu.pipeline_mode<synchronous>, transform_indices = @transform_14, window_bounds = array<i64: 1, 32>}, {pipeline_mode = #tpu.pipeline_mode<synchronous>, transform_indices = @transform_15, window_bounds = array<i64: 1, 32>}, {transform_indices = @transform_16, window_bounds = array<i64: 1, 8, 32>}]} {
    %c0_i32 = arith.constant 0 : i32
    %0 = arith.cmpi eq, %arg2, %c0_i32 : i32
    %1 = arith.extui %0 : i1 to i32
    %c0_i32_0 = arith.constant 0 : i32
    %2 = arith.cmpi ne, %1, %c0_i32_0 : i32
    scf.if %2 {
      %c0_16 = arith.constant 0 : index
      %c0_17 = arith.constant 0 : index
      %c0_18 = arith.constant 0 : index
      %21 = vector.load %arg3[%c0_16, %c0_17, %c0_18] : memref<1x8x32xf32, #tpu.memory_space<vmem>>, vector<1x8x32xf32>
      %22 = vector.shape_cast %21 : vector<1x8x32xf32> to vector<8x32xf32>
      %c0_19 = arith.constant 0 : index
      %c0_20 = arith.constant 0 : index
      %c0_21 = arith.constant 0 : index
      %23 = vector.load %arg4[%c0_19, %c0_20, %c0_21] : memref<1x8x32xf32, #tpu.memory_space<vmem>>, vector<1x8x32xf32>
      %24 = vector.shape_cast %23 : vector<1x8x32xf32> to vector<8x32xf32>
      %25 = arith.truncf %22 : vector<8x32xf32> to vector<8x32xbf16>
      %c0_22 = arith.constant 0 : index
      %c0_23 = arith.constant 0 : index
      %26 = vector.load %arg5[%c0_22, %c0_23] : memref<32x32xbf16, #tpu.memory_space<vmem>>, vector<32x32xbf16>
      %cst_24 = arith.constant dense<0.000000e+00> : vector<8x32xf32>
      %27 = tpu.matmul %25, %26, %cst_24 {dimension_numbers = #tpu.dot_dimension_numbers<[1], [0], [0], [1], [0, 0, 1, 1], [], []>} : vector<8x32xbf16>, vector<32x32xbf16>, vector<8x32xf32> -> vector<8x32xf32>
      %c0_25 = arith.constant 0 : index
      %c0_26 = arith.constant 0 : index
      %28 = vector.load %arg6[%c0_25, %c0_26] : memref<1x32xf32, #tpu.memory_space<vmem>>, vector<1x32xf32>
      %29 = vector.broadcast %28 : vector<1x32xf32> to vector<8x32xf32>
      %30 = arith.addf %27, %29 : vector<8x32xf32>
      %31 = arith.truncf %24 : vector<8x32xf32> to vector<8x32xbf16>
      %c0_27 = arith.constant 0 : index
      %c0_28 = arith.constant 0 : index
      %32 = vector.load %arg7[%c0_27, %c0_28] : memref<32x64xbf16, #tpu.memory_space<vmem>>, vector<32x64xbf16>
      %cst_29 = arith.constant dense<0.000000e+00> : vector<8x64xf32>
      %33 = tpu.matmul %31, %32, %cst_29 {dimension_numbers = #tpu.dot_dimension_numbers<[1], [0], [0], [1], [0, 0, 1, 1], [], []>} : vector<8x32xbf16>, vector<32x64xbf16>, vector<8x64xf32> -> vector<8x64xf32>
      %c0_30 = arith.constant 0 : index
      %c0_31 = arith.constant 0 : index
      %34 = vector.load %arg8[%c0_30, %c0_31] : memref<1x64xf32, #tpu.memory_space<vmem>>, vector<1x64xf32>
      %35 = vector.broadcast %34 : vector<1x64xf32> to vector<8x64xf32>
      %36 = arith.addf %33, %35 : vector<8x64xf32>
      %37 = vector.extract_strided_slice %36 {offsets = [0, 0], sizes = [8, 32], strides = [1, 1]} : vector<8x64xf32> to vector<8x32xf32>
      %38 = vector.extract_strided_slice %36 {offsets = [0, 32], sizes = [8, 32], strides = [1, 1]} : vector<8x64xf32> to vector<8x32xf32>
      %39 = tpu.transpose %37, [1, 0] : vector<8x32xf32> -> vector<32x8xf32>
      %40 = arith.truncf %39 : vector<32x8xf32> to vector<32x8xbf16>
      %41 = arith.truncf %30 : vector<8x32xf32> to vector<8x32xbf16>
      %42 = arith.truncf %38 : vector<8x32xf32> to vector<8x32xbf16>
      %cst_32 = arith.constant 0.000000e+00 : f32
      %43 = vector.broadcast %cst_32 : f32 to vector<8x32xf32>
      %44 = vector.extract_strided_slice %41 {offsets = [0, 0], sizes = [8, 8], strides = [1, 1]} : vector<8x32xbf16> to vector<8x8xbf16>
      %45 = vector.extract_strided_slice %40 {offsets = [0, 0], sizes = [8, 8], strides = [1, 1]} : vector<32x8xbf16> to vector<8x8xbf16>
      %46 = vector.extract_strided_slice %42 {offsets = [0, 0], sizes = [8, 8], strides = [1, 1]} : vector<8x32xbf16> to vector<8x8xbf16>
      %cst_33 = arith.constant dense<0.000000e+00> : vector<8x8xf32>
      %47 = tpu.matmul %44, %45, %cst_33 {dimension_numbers = #tpu.dot_dimension_numbers<[1], [0], [0], [1], [0, 0, 1, 1], [], []>} : vector<8x8xbf16>, vector<8x8xbf16>, vector<8x8xf32> -> vector<8x8xf32>
      %cst_34 = arith.constant dense<0xFF800000> : vector<8xf32>
      %48 = vector.multi_reduction <maximumf>, %47, %cst_34 [1] : vector<8x8xf32> to vector<8xf32>
      %49 = vector.shape_cast %48 : vector<8xf32> to vector<8x1xf32>
      %50 = vector.broadcast %49 : vector<8x1xf32> to vector<8x8xf32>
      %51 = arith.subf %47, %50 : vector<8x8xf32>
      %52 = math.exp %51 : vector<8x8xf32>
      %cst_35 = arith.constant dense<0.000000e+00> : vector<8xf32>
      %53 = vector.multi_reduction <add>, %52, %cst_35 [1] : vector<8x8xf32> to vector<8xf32>
      %54 = vector.shape_cast %53 : vector<8xf32> to vector<8x1xf32>
      %55 = tpu.reciprocal %54 {approx = true} : vector<8x1xf32> -> vector<8x1xf32>
      %56 = vector.broadcast %55 : vector<8x1xf32> to vector<8x8xf32>
      %57 = arith.mulf %52, %56 : vector<8x8xf32>
      %58 = arith.truncf %57 : vector<8x8xf32> to vector<8x8xbf16>
      %cst_36 = arith.constant dense<0.000000e+00> : vector<8x8xf32>
      %59 = tpu.matmul %58, %46, %cst_36 {dimension_numbers = #tpu.dot_dimension_numbers<[1], [0], [0], [1], [0, 0, 1, 1], [], []>} : vector<8x8xbf16>, vector<8x8xbf16>, vector<8x8xf32> -> vector<8x8xf32>
      %60 = arith.truncf %59 : vector<8x8xf32> to vector<8x8xbf16>
      %c0_37 = arith.constant 0 : index
      %c0_38 = arith.constant 0 : index
      %61 = vector.load %arg9[%c0_37, %c0_38] : memref<32x32xbf16, #tpu.memory_space<vmem>>, vector<8x32xbf16>
      %cst_39 = arith.constant dense<0.000000e+00> : vector<8x32xf32>
      %62 = tpu.matmul %60, %61, %cst_39 {dimension_numbers = #tpu.dot_dimension_numbers<[1], [0], [0], [1], [0, 0, 1, 1], [], []>} : vector<8x8xbf16>, vector<8x32xbf16>, vector<8x32xf32> -> vector<8x32xf32>
      %63 = arith.addf %43, %62 : vector<8x32xf32>
      %64 = vector.extract_strided_slice %41 {offsets = [0, 8], sizes = [8, 8], strides = [1, 1]} : vector<8x32xbf16> to vector<8x8xbf16>
      %65 = vector.extract_strided_slice %40 {offsets = [8, 0], sizes = [8, 8], strides = [1, 1]} : vector<32x8xbf16> to vector<8x8xbf16>
      %66 = vector.extract_strided_slice %42 {offsets = [0, 8], sizes = [8, 8], strides = [1, 1]} : vector<8x32xbf16> to vector<8x8xbf16>
      %cst_40 = arith.constant dense<0.000000e+00> : vector<8x8xf32>
      %67 = tpu.matmul %64, %65, %cst_40 {dimension_numbers = #tpu.dot_dimension_numbers<[1], [0], [0], [1], [0, 0, 1, 1], [], []>} : vector<8x8xbf16>, vector<8x8xbf16>, vector<8x8xf32> -> vector<8x8xf32>
      %cst_41 = arith.constant dense<0xFF800000> : vector<8xf32>
      %68 = vector.multi_reduction <maximumf>, %67, %cst_41 [1] : vector<8x8xf32> to vector<8xf32>
      %69 = vector.shape_cast %68 : vector<8xf32> to vector<8x1xf32>
      %70 = vector.broadcast %69 : vector<8x1xf32> to vector<8x8xf32>
      %71 = arith.subf %67, %70 : vector<8x8xf32>
      %72 = math.exp %71 : vector<8x8xf32>
      %cst_42 = arith.constant dense<0.000000e+00> : vector<8xf32>
      %73 = vector.multi_reduction <add>, %72, %cst_42 [1] : vector<8x8xf32> to vector<8xf32>
      %74 = vector.shape_cast %73 : vector<8xf32> to vector<8x1xf32>
      %75 = tpu.reciprocal %74 {approx = true} : vector<8x1xf32> -> vector<8x1xf32>
      %76 = vector.broadcast %75 : vector<8x1xf32> to vector<8x8xf32>
      %77 = arith.mulf %72, %76 : vector<8x8xf32>
      %78 = arith.truncf %77 : vector<8x8xf32> to vector<8x8xbf16>
      %cst_43 = arith.constant dense<0.000000e+00> : vector<8x8xf32>
      %79 = tpu.matmul %78, %66, %cst_43 {dimension_numbers = #tpu.dot_dimension_numbers<[1], [0], [0], [1], [0, 0, 1, 1], [], []>} : vector<8x8xbf16>, vector<8x8xbf16>, vector<8x8xf32> -> vector<8x8xf32>
      %80 = arith.truncf %79 : vector<8x8xf32> to vector<8x8xbf16>
      %c8 = arith.constant 8 : index
      %c0_44 = arith.constant 0 : index
      %81 = vector.load %arg9[%c8, %c0_44] : memref<32x32xbf16, #tpu.memory_space<vmem>>, vector<8x32xbf16>
      %cst_45 = arith.constant dense<0.000000e+00> : vector<8x32xf32>
      %82 = tpu.matmul %80, %81, %cst_45 {dimension_numbers = #tpu.dot_dimension_numbers<[1], [0], [0], [1], [0, 0, 1, 1], [], []>} : vector<8x8xbf16>, vector<8x32xbf16>, vector<8x32xf32> -> vector<8x32xf32>
      %83 = arith.addf %63, %82 : vector<8x32xf32>
      %84 = vector.extract_strided_slice %41 {offsets = [0, 16], sizes = [8, 8], strides = [1, 1]} : vector<8x32xbf16> to vector<8x8xbf16>
      %85 = vector.extract_strided_slice %40 {offsets = [16, 0], sizes = [8, 8], strides = [1, 1]} : vector<32x8xbf16> to vector<8x8xbf16>
      %86 = vector.extract_strided_slice %42 {offsets = [0, 16], sizes = [8, 8], strides = [1, 1]} : vector<8x32xbf16> to vector<8x8xbf16>
      %cst_46 = arith.constant dense<0.000000e+00> : vector<8x8xf32>
      %87 = tpu.matmul %84, %85, %cst_46 {dimension_numbers = #tpu.dot_dimension_numbers<[1], [0], [0], [1], [0, 0, 1, 1], [], []>} : vector<8x8xbf16>, vector<8x8xbf16>, vector<8x8xf32> -> vector<8x8xf32>
      %cst_47 = arith.constant dense<0xFF800000> : vector<8xf32>
      %88 = vector.multi_reduction <maximumf>, %87, %cst_47 [1] : vector<8x8xf32> to vector<8xf32>
      %89 = vector.shape_cast %88 : vector<8xf32> to vector<8x1xf32>
      %90 = vector.broadcast %89 : vector<8x1xf32> to vector<8x8xf32>
      %91 = arith.subf %87, %90 : vector<8x8xf32>
      %92 = math.exp %91 : vector<8x8xf32>
      %cst_48 = arith.constant dense<0.000000e+00> : vector<8xf32>
      %93 = vector.multi_reduction <add>, %92, %cst_48 [1] : vector<8x8xf32> to vector<8xf32>
      %94 = vector.shape_cast %93 : vector<8xf32> to vector<8x1xf32>
      %95 = tpu.reciprocal %94 {approx = true} : vector<8x1xf32> -> vector<8x1xf32>
      %96 = vector.broadcast %95 : vector<8x1xf32> to vector<8x8xf32>
      %97 = arith.mulf %92, %96 : vector<8x8xf32>
      %98 = arith.truncf %97 : vector<8x8xf32> to vector<8x8xbf16>
      %cst_49 = arith.constant dense<0.000000e+00> : vector<8x8xf32>
      %99 = tpu.matmul %98, %86, %cst_49 {dimension_numbers = #tpu.dot_dimension_numbers<[1], [0], [0], [1], [0, 0, 1, 1], [], []>} : vector<8x8xbf16>, vector<8x8xbf16>, vector<8x8xf32> -> vector<8x8xf32>
      %100 = arith.truncf %99 : vector<8x8xf32> to vector<8x8xbf16>
      %c16 = arith.constant 16 : index
      %c0_50 = arith.constant 0 : index
      %101 = vector.load %arg9[%c16, %c0_50] : memref<32x32xbf16, #tpu.memory_space<vmem>>, vector<8x32xbf16>
      %cst_51 = arith.constant dense<0.000000e+00> : vector<8x32xf32>
      %102 = tpu.matmul %100, %101, %cst_51 {dimension_numbers = #tpu.dot_dimension_numbers<[1], [0], [0], [1], [0, 0, 1, 1], [], []>} : vector<8x8xbf16>, vector<8x32xbf16>, vector<8x32xf32> -> vector<8x32xf32>
      %103 = arith.addf %83, %102 : vector<8x32xf32>
      %104 = vector.extract_strided_slice %41 {offsets = [0, 24], sizes = [8, 8], strides = [1, 1]} : vector<8x32xbf16> to vector<8x8xbf16>
      %105 = vector.extract_strided_slice %40 {offsets = [24, 0], sizes = [8, 8], strides = [1, 1]} : vector<32x8xbf16> to vector<8x8xbf16>
      %106 = vector.extract_strided_slice %42 {offsets = [0, 24], sizes = [8, 8], strides = [1, 1]} : vector<8x32xbf16> to vector<8x8xbf16>
      %cst_52 = arith.constant dense<0.000000e+00> : vector<8x8xf32>
      %107 = tpu.matmul %104, %105, %cst_52 {dimension_numbers = #tpu.dot_dimension_numbers<[1], [0], [0], [1], [0, 0, 1, 1], [], []>} : vector<8x8xbf16>, vector<8x8xbf16>, vector<8x8xf32> -> vector<8x8xf32>
      %cst_53 = arith.constant dense<0xFF800000> : vector<8xf32>
      %108 = vector.multi_reduction <maximumf>, %107, %cst_53 [1] : vector<8x8xf32> to vector<8xf32>
      %109 = vector.shape_cast %108 : vector<8xf32> to vector<8x1xf32>
      %110 = vector.broadcast %109 : vector<8x1xf32> to vector<8x8xf32>
      %111 = arith.subf %107, %110 : vector<8x8xf32>
      %112 = math.exp %111 : vector<8x8xf32>
      %cst_54 = arith.constant dense<0.000000e+00> : vector<8xf32>
      %113 = vector.multi_reduction <add>, %112, %cst_54 [1] : vector<8x8xf32> to vector<8xf32>
      %114 = vector.shape_cast %113 : vector<8xf32> to vector<8x1xf32>
      %115 = tpu.reciprocal %114 {approx = true} : vector<8x1xf32> -> vector<8x1xf32>
      %116 = vector.broadcast %115 : vector<8x1xf32> to vector<8x8xf32>
      %117 = arith.mulf %112, %116 : vector<8x8xf32>
      %118 = arith.truncf %117 : vector<8x8xf32> to vector<8x8xbf16>
      %cst_55 = arith.constant dense<0.000000e+00> : vector<8x8xf32>
      %119 = tpu.matmul %118, %106, %cst_55 {dimension_numbers = #tpu.dot_dimension_numbers<[1], [0], [0], [1], [0, 0, 1, 1], [], []>} : vector<8x8xbf16>, vector<8x8xbf16>, vector<8x8xf32> -> vector<8x8xf32>
      %120 = arith.truncf %119 : vector<8x8xf32> to vector<8x8xbf16>
      %c24 = arith.constant 24 : index
      %c0_56 = arith.constant 0 : index
      %121 = vector.load %arg9[%c24, %c0_56] : memref<32x32xbf16, #tpu.memory_space<vmem>>, vector<8x32xbf16>
      %cst_57 = arith.constant dense<0.000000e+00> : vector<8x32xf32>
      %122 = tpu.matmul %120, %121, %cst_57 {dimension_numbers = #tpu.dot_dimension_numbers<[1], [0], [0], [1], [0, 0, 1, 1], [], []>} : vector<8x8xbf16>, vector<8x32xbf16>, vector<8x32xf32> -> vector<8x32xf32>
      %123 = arith.addf %103, %122 : vector<8x32xf32>
      %c0_58 = arith.constant 0 : index
      %c0_59 = arith.constant 0 : index
      %124 = vector.load %arg10[%c0_58, %c0_59] : memref<1x32xf32, #tpu.memory_space<vmem>>, vector<1x32xf32>
      %125 = vector.broadcast %124 : vector<1x32xf32> to vector<8x32xf32>
      %126 = arith.addf %123, %125 : vector<8x32xf32>
      %127 = arith.addf %22, %126 : vector<8x32xf32>
      %c0_60 = arith.constant 0 : index
      %c0_61 = arith.constant 0 : index
      %128 = vector.load %arg11[%c0_60, %c0_61] : memref<1x32xf32, #tpu.memory_space<vmem>>, vector<1x32xf32>
      %c0_62 = arith.constant 0 : index
      %c0_63 = arith.constant 0 : index
      %129 = vector.load %arg12[%c0_62, %c0_63] : memref<1x32xf32, #tpu.memory_space<vmem>>, vector<1x32xf32>
      %cst_64 = arith.constant dense<0.000000e+00> : vector<8xf32>
      %130 = vector.multi_reduction <add>, %127, %cst_64 [1] : vector<8x32xf32> to vector<8xf32>
      %131 = vector.shape_cast %130 : vector<8xf32> to vector<8x1xf32>
      %cst_65 = arith.constant 3.200000e+01 : f32
      %132 = vector.broadcast %cst_65 : f32 to vector<8x1xf32>
      %133 = arith.divf %131, %132 : vector<8x1xf32>
      %134 = vector.broadcast %133 : vector<8x1xf32> to vector<8x32xf32>
      %135 = arith.subf %127, %134 : vector<8x32xf32>
      %136 = arith.mulf %135, %135 : vector<8x32xf32>
      %cst_66 = arith.constant dense<0.000000e+00> : vector<8xf32>
      %137 = vector.multi_reduction <add>, %136, %cst_66 [1] : vector<8x32xf32> to vector<8xf32>
      %138 = vector.shape_cast %137 : vector<8xf32> to vector<8x1xf32>
      %cst_67 = arith.constant 3.200000e+01 : f32
      %139 = vector.broadcast %cst_67 : f32 to vector<8x1xf32>
      %140 = arith.divf %138, %139 : vector<8x1xf32>
      %cst_68 = arith.constant 9.99999974E-6 : f32
      %141 = vector.broadcast %cst_68 : f32 to vector<8x1xf32>
      %142 = arith.addf %140, %141 : vector<8x1xf32>
      %143 = math.rsqrt %142 : vector<8x1xf32>
      %144 = vector.broadcast %143 : vector<8x1xf32> to vector<8x32xf32>
      %145 = arith.mulf %135, %144 : vector<8x32xf32>
      %146 = vector.broadcast %128 : vector<1x32xf32> to vector<8x32xf32>
      %147 = arith.mulf %145, %146 : vector<8x32xf32>
      %148 = vector.broadcast %129 : vector<1x32xf32> to vector<8x32xf32>
      %149 = arith.addf %147, %148 : vector<8x32xf32>
      %c0_69 = arith.constant 0 : index
      %c0_70 = arith.constant 0 : index
      %150 = vector.load %arg20[%c0_69, %c0_70] : memref<8x32xf32, #tpu.memory_space<vmem>>, vector<8x32xf32>
      tpu.vector_store %arg20[%c0_69, %c0_70], %149 {strides = array<i32>} : memref<8x32xf32, #tpu.memory_space<vmem>>, vector<8x32xf32>,
      %cst_71 = arith.constant 0.000000e+00 : f32
      %151 = vector.broadcast %cst_71 : f32 to vector<8x32xf32>
      %c0_72 = arith.constant 0 : index
      %c0_73 = arith.constant 0 : index
      %152 = vector.load %arg21[%c0_72, %c0_73] : memref<8x32xf32, #tpu.memory_space<vmem>>, vector<8x32xf32>
      tpu.vector_store %arg21[%c0_72, %c0_73], %151 {strides = array<i32>} : memref<8x32xf32, #tpu.memory_space<vmem>>, vector<8x32xf32>,
    } else {
    }
    %c0 = arith.constant 0 : index
    %c0_1 = arith.constant 0 : index
    %3 = vector.load %arg20[%c0, %c0_1] : memref<8x32xf32, #tpu.memory_space<vmem>>, vector<8x32xf32>
    %4 = arith.truncf %3 : vector<8x32xf32> to vector<8x32xbf16>
    %c0_2 = arith.constant 0 : index
    %c0_3 = arith.constant 0 : index
    %5 = vector.load %arg13[%c0_2, %c0_3] : memref<32x64xbf16, #tpu.memory_space<vmem>>, vector<32x64xbf16>
    %cst = arith.constant dense<0.000000e+00> : vector<8x64xf32>
    %6 = tpu.matmul %4, %5, %cst {dimension_numbers = #tpu.dot_dimension_numbers<[1], [0], [0], [1], [0, 0, 1, 1], [], []>} : vector<8x32xbf16>, vector<32x64xbf16>, vector<8x64xf32> -> vector<8x64xf32>
    %c0_4 = arith.constant 0 : index
    %c0_5 = arith.constant 0 : index
    %7 = vector.load %arg14[%c0_4, %c0_5] : memref<1x64xf32, #tpu.memory_space<vmem>>, vector<1x64xf32>
    %8 = vector.broadcast %7 : vector<1x64xf32> to vector<8x64xf32>
    %9 = arith.addf %6, %8 : vector<8x64xf32>
    %cst_6 = arith.constant 0.000000e+00 : f32
    %10 = vector.broadcast %cst_6 : f32 to vector<8x64xf32>
    %11 = arith.maximumf %9, %10 : vector<8x64xf32>
    %c0_7 = arith.constant 0 : index
    %c0_8 = arith.constant 0 : index
    %12 = vector.load %arg21[%c0_7, %c0_8] : memref<8x32xf32, #tpu.memory_space<vmem>>, vector<8x32xf32>
    %13 = arith.truncf %11 : vector<8x64xf32> to vector<8x64xbf16>
    %c0_9 = arith.constant 0 : index
    %c0_10 = arith.constant 0 : index
    %14 = vector.load %arg15[%c0_9, %c0_10] : memref<64x32xbf16, #tpu.memory_space<vmem>>, vector<64x32xbf16>
    %cst_11 = arith.constant dense<0.000000e+00> : vector<8x32xf32>
    %15 = tpu.matmul %13, %14, %cst_11 {dimension_numbers = #tpu.dot_dimension_numbers<[1], [0], [0], [1], [0, 0, 1, 1], [], []>} : vector<8x64xbf16>, vector<64x32xbf16>, vector<8x32xf32> -> vector<8x32xf32>
    %16 = arith.addf %12, %15 : vector<8x32xf32>
    %c0_12 = arith.constant 0 : index
    %c0_13 = arith.constant 0 : index
    %17 = vector.load %arg21[%c0_12, %c0_13] : memref<8x32xf32, #tpu.memory_space<vmem>>, vector<8x32xf32>
    tpu.vector_store %arg21[%c0_12, %c0_13], %16 {strides = array<i32>} : memref<8x32xf32, #tpu.memory_space<vmem>>, vector<8x32xf32>,
    %c0_i32_14 = arith.constant 0 : i32
    %18 = arith.cmpi eq, %arg2, %c0_i32_14 : i32
    %19 = arith.extui %18 : i1 to i32
    %c0_i32_15 = arith.constant 0 : i32
    %20 = arith.cmpi ne, %19, %c0_i32_15 : i32
    scf.if %20 {
      %c0_16 = arith.constant 0 : index
      %c0_17 = arith.constant 0 : index
      %21 = vector.load %arg21[%c0_16, %c0_17] : memref<8x32xf32, #tpu.memory_space<vmem>>, vector<8x32xf32>
      %c0_18 = arith.constant 0 : index
      %c0_19 = arith.constant 0 : index
      %22 = vector.load %arg16[%c0_18, %c0_19] : memref<1x32xf32, #tpu.memory_space<vmem>>, vector<1x32xf32>
      %23 = vector.broadcast %22 : vector<1x32xf32> to vector<8x32xf32>
      %24 = arith.addf %21, %23 : vector<8x32xf32>
      %c0_20 = arith.constant 0 : index
      %c0_21 = arith.constant 0 : index
      %25 = vector.load %arg20[%c0_20, %c0_21] : memref<8x32xf32, #tpu.memory_space<vmem>>, vector<8x32xf32>
      %26 = arith.addf %25, %24 : vector<8x32xf32>
      %c0_22 = arith.constant 0 : index
      %c0_23 = arith.constant 0 : index
      %27 = vector.load %arg17[%c0_22, %c0_23] : memref<1x32xf32, #tpu.memory_space<vmem>>, vector<1x32xf32>
      %c0_24 = arith.constant 0 : index
      %c0_25 = arith.constant 0 : index
      %28 = vector.load %arg18[%c0_24, %c0_25] : memref<1x32xf32, #tpu.memory_space<vmem>>, vector<1x32xf32>
      %cst_26 = arith.constant dense<0.000000e+00> : vector<8xf32>
      %29 = vector.multi_reduction <add>, %26, %cst_26 [1] : vector<8x32xf32> to vector<8xf32>
      %30 = vector.shape_cast %29 : vector<8xf32> to vector<8x1xf32>
      %cst_27 = arith.constant 3.200000e+01 : f32
      %31 = vector.broadcast %cst_27 : f32 to vector<8x1xf32>
      %32 = arith.divf %30, %31 : vector<8x1xf32>
      %33 = vector.broadcast %32 : vector<8x1xf32> to vector<8x32xf32>
      %34 = arith.subf %26, %33 : vector<8x32xf32>
      %35 = arith.mulf %34, %34 : vector<8x32xf32>
      %cst_28 = arith.constant dense<0.000000e+00> : vector<8xf32>
      %36 = vector.multi_reduction <add>, %35, %cst_28 [1] : vector<8x32xf32> to vector<8xf32>
      %37 = vector.shape_cast %36 : vector<8xf32> to vector<8x1xf32>
      %cst_29 = arith.constant 3.200000e+01 : f32
      %38 = vector.broadcast %cst_29 : f32 to vector<8x1xf32>
      %39 = arith.divf %37, %38 : vector<8x1xf32>
      %cst_30 = arith.constant 9.99999974E-6 : f32
      %40 = vector.broadcast %cst_30 : f32 to vector<8x1xf32>
      %41 = arith.addf %39, %40 : vector<8x1xf32>
      %42 = math.rsqrt %41 : vector<8x1xf32>
      %43 = vector.broadcast %42 : vector<8x1xf32> to vector<8x32xf32>
      %44 = arith.mulf %34, %43 : vector<8x32xf32>
      %45 = vector.broadcast %27 : vector<1x32xf32> to vector<8x32xf32>
      %46 = arith.mulf %44, %45 : vector<8x32xf32>
      %47 = vector.broadcast %28 : vector<1x32xf32> to vector<8x32xf32>
      %48 = arith.addf %46, %47 : vector<8x32xf32>
      %c0_31 = arith.constant 0 : index
      %c0_32 = arith.constant 0 : index
      %c0_33 = arith.constant 0 : index
      %49 = vector.load %arg19[%c0_31, %c0_32, %c0_33] : memref<1x8x32xf32, #tpu.memory_space<vmem>>, vector<1x8x32xf32>
      %50 = vector.shape_cast %49 : vector<1x8x32xf32> to vector<8x32xf32>
      %51 = vector.shape_cast %48 : vector<8x32xf32> to vector<1x8x32xf32>
      tpu.vector_store %arg19[%c0_31, %c0_32, %c0_33], %51 {strides = array<i32>} : memref<1x8x32xf32, #tpu.memory_space<vmem>>, vector<1x8x32xf32>,
    } else {
    }
    return
  }
  func.func @transform_0(%arg0: i32, %arg1: i32, %arg2: i32) -> (i32, i32, i32) {
    %c0_i32 = arith.constant 0 : i32
    %c0_i32_0 = arith.constant 0 : i32
    return %arg0, %arg1, %c0_i32 : i32, i32, i32
  }
  func.func @transform_1(%arg0: i32, %arg1: i32, %arg2: i32) -> (i32, i32, i32) {
    %c0_i32 = arith.constant 0 : i32
    %c0_i32_0 = arith.constant 0 : i32
    %c0_i32_1 = arith.constant 0 : i32
    return %arg0, %c0_i32, %c0_i32_0 : i32, i32, i32
  }
  func.func @transform_2(%arg0: i32, %arg1: i32, %arg2: i32) -> (i32, i32) {
    %c0_i32 = arith.constant 0 : i32
    %c0_i32_0 = arith.constant 0 : i32
    %c0_i32_1 = arith.constant 0 : i32
    return %c0_i32, %c0_i32_0 : i32, i32
  }
  func.func @transform_3(%arg0: i32, %arg1: i32, %arg2: i32) -> (i32, i32) {
    %c0_i32 = arith.constant 0 : i32
    %c0_i32_0 = arith.constant 0 : i32
    %c0_i32_1 = arith.constant 0 : i32
    return %c0_i32, %c0_i32_0 : i32, i32
  }
  func.func @transform_4(%arg0: i32, %arg1: i32, %arg2: i32) -> (i32, i32) {
    %c0_i32 = arith.constant 0 : i32
    %c0_i32_0 = arith.constant 0 : i32
    %c0_i32_1 = arith.constant 0 : i32
    return %c0_i32, %c0_i32_0 : i32, i32
  }
  func.func @transform_5(%arg0: i32, %arg1: i32, %arg2: i32) -> (i32, i32) {
    %c0_i32 = arith.constant 0 : i32
    %c0_i32_0 = arith.constant 0 : i32
    %c0_i32_1 = arith.constant 0 : i32
    return %c0_i32, %c0_i32_0 : i32, i32
  }
  func.func @transform_6(%arg0: i32, %arg1: i32, %arg2: i32) -> (i32, i32) {
    %c0_i32 = arith.constant 0 : i32
    %c0_i32_0 = arith.constant 0 : i32
    %c0_i32_1 = arith.constant 0 : i32
    return %c0_i32, %c0_i32_0 : i32, i32
  }
  func.func @transform_7(%arg0: i32, %arg1: i32, %arg2: i32) -> (i32, i32) {
    %c0_i32 = arith.constant 0 : i32
    %c0_i32_0 = arith.constant 0 : i32
    %c0_i32_1 = arith.constant 0 : i32
    return %c0_i32, %c0_i32_0 : i32, i32
  }
  func.func @transform_8(%arg0: i32, %arg1: i32, %arg2: i32) -> (i32, i32) {
    %c0_i32 = arith.constant 0 : i32
    %c0_i32_0 = arith.constant 0 : i32
    %c0_i32_1 = arith.constant 0 : i32
    return %c0_i32, %c0_i32_0 : i32, i32
  }
  func.func @transform_9(%arg0: i32, %arg1: i32, %arg2: i32) -> (i32, i32) {
    %c0_i32 = arith.constant 0 : i32
    %c0_i32_0 = arith.constant 0 : i32
    %c0_i32_1 = arith.constant 0 : i32
    return %c0_i32, %c0_i32_0 : i32, i32
  }
  func.func @transform_10(%arg0: i32, %arg1: i32, %arg2: i32) -> (i32, i32) {
    %c0_i32 = arith.constant 0 : i32
    %c0_i32_0 = arith.constant 0 : i32
    return %c0_i32, %arg2 : i32, i32
  }
  func.func @transform_11(%arg0: i32, %arg1: i32, %arg2: i32) -> (i32, i32) {
    %c0_i32 = arith.constant 0 : i32
    %c0_i32_0 = arith.constant 0 : i32
    return %c0_i32, %arg2 : i32, i32
  }
  func.func @transform_12(%arg0: i32, %arg1: i32, %arg2: i32) -> (i32, i32) {
    %c0_i32 = arith.constant 0 : i32
    %c0_i32_0 = arith.constant 0 : i32
    return %arg2, %c0_i32 : i32, i32
  }
  func.func @transform_13(%arg0: i32, %arg1: i32, %arg2: i32) -> (i32, i32) {
    %c0_i32 = arith.constant 0 : i32
    %c0_i32_0 = arith.constant 0 : i32
    %c0_i32_1 = arith.constant 0 : i32
    return %c0_i32, %c0_i32_0 : i32, i32
  }
  func.func @transform_14(%arg0: i32, %arg1: i32, %arg2: i32) -> (i32, i32) {
    %c0_i32 = arith.constant 0 : i32
    %c0_i32_0 = arith.constant 0 : i32
    %c0_i32_1 = arith.constant 0 : i32
    return %c0_i32, %c0_i32_0 : i32, i32
  }
  func.func @transform_15(%arg0: i32, %arg1: i32, %arg2: i32) -> (i32, i32) {
    %c0_i32 = arith.constant 0 : i32
    %c0_i32_0 = arith.constant 0 : i32
    %c0_i32_1 = arith.constant 0 : i32
    return %c0_i32, %c0_i32_0 : i32, i32
  }
  func.func @transform_16(%arg0: i32, %arg1: i32, %arg2: i32) -> (i32, i32, i32) {
    %c0_i32 = arith.constant 0 : i32
    %c0_i32_0 = arith.constant 0 : i32
    return %arg0, %arg1, %c0_i32 : i32, i32, i32
  }
}

module attributes {stable_mosaic.version = 11 : i64} {
  func.func @_encoder_layer_kernel(%arg0: i32, %arg1: i32, %arg2: i32, %arg3: memref<1x8x32xf32, #tpu.memory_space<vmem>>, %arg4: memref<1x8x32xf32, #tpu.memory_space<vmem>>, %arg5: memref<32x32xbf16, #tpu.memory_space<vmem>>, %arg6: memref<1x32xf32, #tpu.memory_space<vmem>>, %arg7: memref<32x64xbf16, #tpu.memory_space<vmem>>, %arg8: memref<1x64xf32, #tpu.memory_space<vmem>>, %arg9: memref<32x32xbf16, #tpu.memory_space<vmem>>, %arg10: memref<1x32xf32, #tpu.memory_space<vmem>>, %arg11: memref<1x32xf32, #tpu.memory_space<vmem>>, %arg12: memref<1x32xf32, #tpu.memory_space<vmem>>, %arg13: memref<32x64xbf16, #tpu.memory_space<vmem>>, %arg14: memref<1x64xf32, #tpu.memory_space<vmem>>, %arg15: memref<64x32xbf16, #tpu.memory_space<vmem>>, %arg16: memref<1x32xf32, #tpu.memory_space<vmem>>, %arg17: memref<1x32xf32, #tpu.memory_space<vmem>>, %arg18: memref<1x32xf32, #tpu.memory_space<vmem>>, %arg19: memref<1x8x32xf32, #tpu.memory_space<vmem>>, %arg20: memref<8x32xf32, #tpu.memory_space<vmem>>, %arg21: memref<8x32xf32, #tpu.memory_space<vmem>>) attributes {dimension_semantics = [#tpu.dimension_semantics<parallel>, #tpu.dimension_semantics<parallel>, #tpu.dimension_semantics<arbitrary>], iteration_bounds = array<i64: 2, 1, 1>, scalar_prefetch = 0 : i64, scratch_operands = 2 : i64, tpu.core_type = #tpu.core_type<tc>, window_params = [{transform_indices = @transform_0, window_bounds = array<i64: 1, 8, 32>}, {transform_indices = @transform_1, window_bounds = array<i64: 1, 8, 32>}, {pipeline_mode = #tpu.pipeline_mode<synchronous>, transform_indices = @transform_2, window_bounds = array<i64: 32, 32>}, {pipeline_mode = #tpu.pipeline_mode<synchronous>, transform_indices = @transform_3, window_bounds = array<i64: 1, 32>}, {pipeline_mode = #tpu.pipeline_mode<synchronous>, transform_indices = @transform_4, window_bounds = array<i64: 32, 64>}, {pipeline_mode = #tpu.pipeline_mode<synchronous>, transform_indices = @transform_5, window_bounds = array<i64: 1, 64>}, {pipeline_mode = #tpu.pipeline_mode<synchronous>, transform_indices = @transform_6, window_bounds = array<i64: 32, 32>}, {pipeline_mode = #tpu.pipeline_mode<synchronous>, transform_indices = @transform_7, window_bounds = array<i64: 1, 32>}, {pipeline_mode = #tpu.pipeline_mode<synchronous>, transform_indices = @transform_8, window_bounds = array<i64: 1, 32>}, {pipeline_mode = #tpu.pipeline_mode<synchronous>, transform_indices = @transform_9, window_bounds = array<i64: 1, 32>}, {transform_indices = @transform_10, window_bounds = array<i64: 32, 64>}, {transform_indices = @transform_11, window_bounds = array<i64: 1, 64>}, {transform_indices = @transform_12, window_bounds = array<i64: 64, 32>}, {pipeline_mode = #tpu.pipeline_mode<synchronous>, transform_indices = @transform_13, window_bounds = array<i64: 1, 32>}, {pipeline_mode = #tpu.pipeline_mode<synchronous>, transform_indices = @transform_14, window_bounds = array<i64: 1, 32>}, {pipeline_mode = #tpu.pipeline_mode<synchronous>, transform_indices = @transform_15, window_bounds = array<i64: 1, 32>}, {transform_indices = @transform_16, window_bounds = array<i64: 1, 8, 32>}]} {
    %c0_i32 = arith.constant 0 : i32
    %0 = arith.cmpi eq, %arg2, %c0_i32 : i32
    %1 = arith.extui %0 : i1 to i32
    %c0_i32_0 = arith.constant 0 : i32
    %2 = arith.cmpi ne, %1, %c0_i32_0 : i32
    scf.if %2 {
      %c0_16 = arith.constant 0 : index
      %c0_17 = arith.constant 0 : index
      %c0_18 = arith.constant 0 : index
      %21 = vector.load %arg3[%c0_16, %c0_17, %c0_18] : memref<1x8x32xf32, #tpu.memory_space<vmem>>, vector<1x8x32xf32>
      %22 = vector.shape_cast %21 : vector<1x8x32xf32> to vector<8x32xf32>
      %c0_19 = arith.constant 0 : index
      %c0_20 = arith.constant 0 : index
      %c0_21 = arith.constant 0 : index
      %23 = vector.load %arg4[%c0_19, %c0_20, %c0_21] : memref<1x8x32xf32, #tpu.memory_space<vmem>>, vector<1x8x32xf32>
      %24 = vector.shape_cast %23 : vector<1x8x32xf32> to vector<8x32xf32>
      %25 = arith.truncf %22 : vector<8x32xf32> to vector<8x32xbf16>
      %c0_22 = arith.constant 0 : index
      %c0_23 = arith.constant 0 : index
      %26 = vector.load %arg5[%c0_22, %c0_23] : memref<32x32xbf16, #tpu.memory_space<vmem>>, vector<32x32xbf16>
      %cst_24 = arith.constant dense<0.000000e+00> : vector<8x32xf32>
      %27 = tpu.matmul %25, %26, %cst_24 {dimension_numbers = #tpu.dot_dimension_numbers<[1], [0], [0], [1], [0, 0, 1, 1], [], []>} : vector<8x32xbf16>, vector<32x32xbf16>, vector<8x32xf32> -> vector<8x32xf32>
      %c0_25 = arith.constant 0 : index
      %c0_26 = arith.constant 0 : index
      %28 = vector.load %arg6[%c0_25, %c0_26] : memref<1x32xf32, #tpu.memory_space<vmem>>, vector<1x32xf32>
      %29 = vector.broadcast %28 : vector<1x32xf32> to vector<8x32xf32>
      %30 = arith.addf %27, %29 : vector<8x32xf32>
      %31 = arith.truncf %24 : vector<8x32xf32> to vector<8x32xbf16>
      %c0_27 = arith.constant 0 : index
      %c0_28 = arith.constant 0 : index
      %32 = vector.load %arg7[%c0_27, %c0_28] : memref<32x64xbf16, #tpu.memory_space<vmem>>, vector<32x64xbf16>
      %cst_29 = arith.constant dense<0.000000e+00> : vector<8x64xf32>
      %33 = tpu.matmul %31, %32, %cst_29 {dimension_numbers = #tpu.dot_dimension_numbers<[1], [0], [0], [1], [0, 0, 1, 1], [], []>} : vector<8x32xbf16>, vector<32x64xbf16>, vector<8x64xf32> -> vector<8x64xf32>
      %c0_30 = arith.constant 0 : index
      %c0_31 = arith.constant 0 : index
      %34 = vector.load %arg8[%c0_30, %c0_31] : memref<1x64xf32, #tpu.memory_space<vmem>>, vector<1x64xf32>
      %35 = vector.broadcast %34 : vector<1x64xf32> to vector<8x64xf32>
      %36 = arith.addf %33, %35 : vector<8x64xf32>
      %37 = vector.extract_strided_slice %36 {offsets = [0, 0], sizes = [8, 32], strides = [1, 1]} : vector<8x64xf32> to vector<8x32xf32>
      %38 = vector.extract_strided_slice %36 {offsets = [0, 32], sizes = [8, 32], strides = [1, 1]} : vector<8x64xf32> to vector<8x32xf32>
      %39 = tpu.transpose %37, [1, 0] : vector<8x32xf32> -> vector<32x8xf32>
      %40 = arith.truncf %39 : vector<32x8xf32> to vector<32x8xbf16>
      %41 = arith.truncf %30 : vector<8x32xf32> to vector<8x32xbf16>
      %42 = arith.truncf %38 : vector<8x32xf32> to vector<8x32xbf16>
      %cst_32 = arith.constant 0.000000e+00 : f32
      %43 = vector.broadcast %cst_32 : f32 to vector<8x32xf32>
      %44 = vector.extract_strided_slice %41 {offsets = [0, 0], sizes = [8, 8], strides = [1, 1]} : vector<8x32xbf16> to vector<8x8xbf16>
      %45 = vector.extract_strided_slice %40 {offsets = [0, 0], sizes = [8, 8], strides = [1, 1]} : vector<32x8xbf16> to vector<8x8xbf16>
      %46 = vector.extract_strided_slice %42 {offsets = [0, 0], sizes = [8, 8], strides = [1, 1]} : vector<8x32xbf16> to vector<8x8xbf16>
      %cst_33 = arith.constant dense<0.000000e+00> : vector<8x8xf32>
      %47 = tpu.matmul %44, %45, %cst_33 {dimension_numbers = #tpu.dot_dimension_numbers<[1], [0], [0], [1], [0, 0, 1, 1], [], []>} : vector<8x8xbf16>, vector<8x8xbf16>, vector<8x8xf32> -> vector<8x8xf32>
      %cst_34 = arith.constant dense<0xFF800000> : vector<8xf32>
      %48 = vector.multi_reduction <maximumf>, %47, %cst_34 [1] : vector<8x8xf32> to vector<8xf32>
      %49 = vector.shape_cast %48 : vector<8xf32> to vector<8x1xf32>
      %50 = vector.broadcast %49 : vector<8x1xf32> to vector<8x8xf32>
      %51 = arith.subf %47, %50 : vector<8x8xf32>
      %52 = math.exp %51 : vector<8x8xf32>
      %cst_35 = arith.constant dense<0.000000e+00> : vector<8xf32>
      %53 = vector.multi_reduction <add>, %52, %cst_35 [1] : vector<8x8xf32> to vector<8xf32>
      %54 = vector.shape_cast %53 : vector<8xf32> to vector<8x1xf32>
      %55 = tpu.reciprocal %54 {approx = true} : vector<8x1xf32> -> vector<8x1xf32>
      %56 = vector.broadcast %55 : vector<8x1xf32> to vector<8x8xf32>
      %57 = arith.mulf %52, %56 : vector<8x8xf32>
      %58 = arith.truncf %57 : vector<8x8xf32> to vector<8x8xbf16>
      %cst_36 = arith.constant dense<0.000000e+00> : vector<8x8xf32>
      %59 = tpu.matmul %58, %46, %cst_36 {dimension_numbers = #tpu.dot_dimension_numbers<[1], [0], [0], [1], [0, 0, 1, 1], [], []>} : vector<8x8xbf16>, vector<8x8xbf16>, vector<8x8xf32> -> vector<8x8xf32>
      %60 = arith.truncf %59 : vector<8x8xf32> to vector<8x8xbf16>
      %c0_37 = arith.constant 0 : index
      %c0_38 = arith.constant 0 : index
      %61 = vector.load %arg9[%c0_37, %c0_38] : memref<32x32xbf16, #tpu.memory_space<vmem>>, vector<8x32xbf16>
      %cst_39 = arith.constant dense<0.000000e+00> : vector<8x32xf32>
      %62 = tpu.matmul %60, %61, %cst_39 {dimension_numbers = #tpu.dot_dimension_numbers<[1], [0], [0], [1], [0, 0, 1, 1], [], []>} : vector<8x8xbf16>, vector<8x32xbf16>, vector<8x32xf32> -> vector<8x32xf32>
      %63 = arith.addf %43, %62 : vector<8x32xf32>
      %64 = vector.extract_strided_slice %41 {offsets = [0, 8], sizes = [8, 8], strides = [1, 1]} : vector<8x32xbf16> to vector<8x8xbf16>
      %65 = vector.extract_strided_slice %40 {offsets = [8, 0], sizes = [8, 8], strides = [1, 1]} : vector<32x8xbf16> to vector<8x8xbf16>
      %66 = vector.extract_strided_slice %42 {offsets = [0, 8], sizes = [8, 8], strides = [1, 1]} : vector<8x32xbf16> to vector<8x8xbf16>
      %cst_40 = arith.constant dense<0.000000e+00> : vector<8x8xf32>
      %67 = tpu.matmul %64, %65, %cst_40 {dimension_numbers = #tpu.dot_dimension_numbers<[1], [0], [0], [1], [0, 0, 1, 1], [], []>} : vector<8x8xbf16>, vector<8x8xbf16>, vector<8x8xf32> -> vector<8x8xf32>
      %cst_41 = arith.constant dense<0xFF800000> : vector<8xf32>
      %68 = vector.multi_reduction <maximumf>, %67, %cst_41 [1] : vector<8x8xf32> to vector<8xf32>
      %69 = vector.shape_cast %68 : vector<8xf32> to vector<8x1xf32>
      %70 = vector.broadcast %69 : vector<8x1xf32> to vector<8x8xf32>
      %71 = arith.subf %67, %70 : vector<8x8xf32>
      %72 = math.exp %71 : vector<8x8xf32>
      %cst_42 = arith.constant dense<0.000000e+00> : vector<8xf32>
      %73 = vector.multi_reduction <add>, %72, %cst_42 [1] : vector<8x8xf32> to vector<8xf32>
      %74 = vector.shape_cast %73 : vector<8xf32> to vector<8x1xf32>
      %75 = tpu.reciprocal %74 {approx = true} : vector<8x1xf32> -> vector<8x1xf32>
      %76 = vector.broadcast %75 : vector<8x1xf32> to vector<8x8xf32>
      %77 = arith.mulf %72, %76 : vector<8x8xf32>
      %78 = arith.truncf %77 : vector<8x8xf32> to vector<8x8xbf16>
      %cst_43 = arith.constant dense<0.000000e+00> : vector<8x8xf32>
      %79 = tpu.matmul %78, %66, %cst_43 {dimension_numbers = #tpu.dot_dimension_numbers<[1], [0], [0], [1], [0, 0, 1, 1], [], []>} : vector<8x8xbf16>, vector<8x8xbf16>, vector<8x8xf32> -> vector<8x8xf32>
      %80 = arith.truncf %79 : vector<8x8xf32> to vector<8x8xbf16>
      %c8 = arith.constant 8 : index
      %c0_44 = arith.constant 0 : index
      %81 = vector.load %arg9[%c8, %c0_44] : memref<32x32xbf16, #tpu.memory_space<vmem>>, vector<8x32xbf16>
      %cst_45 = arith.constant dense<0.000000e+00> : vector<8x32xf32>
      %82 = tpu.matmul %80, %81, %cst_45 {dimension_numbers = #tpu.dot_dimension_numbers<[1], [0], [0], [1], [0, 0, 1, 1], [], []>} : vector<8x8xbf16>, vector<8x32xbf16>, vector<8x32xf32> -> vector<8x32xf32>
      %83 = arith.addf %63, %82 : vector<8x32xf32>
      %84 = vector.extract_strided_slice %41 {offsets = [0, 16], sizes = [8, 8], strides = [1, 1]} : vector<8x32xbf16> to vector<8x8xbf16>
      %85 = vector.extract_strided_slice %40 {offsets = [16, 0], sizes = [8, 8], strides = [1, 1]} : vector<32x8xbf16> to vector<8x8xbf16>
      %86 = vector.extract_strided_slice %42 {offsets = [0, 16], sizes = [8, 8], strides = [1, 1]} : vector<8x32xbf16> to vector<8x8xbf16>
      %cst_46 = arith.constant dense<0.000000e+00> : vector<8x8xf32>
      %87 = tpu.matmul %84, %85, %cst_46 {dimension_numbers = #tpu.dot_dimension_numbers<[1], [0], [0], [1], [0, 0, 1, 1], [], []>} : vector<8x8xbf16>, vector<8x8xbf16>, vector<8x8xf32> -> vector<8x8xf32>
      %cst_47 = arith.constant dense<0xFF800000> : vector<8xf32>
      %88 = vector.multi_reduction <maximumf>, %87, %cst_47 [1] : vector<8x8xf32> to vector<8xf32>
      %89 = vector.shape_cast %88 : vector<8xf32> to vector<8x1xf32>
      %90 = vector.broadcast %89 : vector<8x1xf32> to vector<8x8xf32>
      %91 = arith.subf %87, %90 : vector<8x8xf32>
      %92 = math.exp %91 : vector<8x8xf32>
      %cst_48 = arith.constant dense<0.000000e+00> : vector<8xf32>
      %93 = vector.multi_reduction <add>, %92, %cst_48 [1] : vector<8x8xf32> to vector<8xf32>
      %94 = vector.shape_cast %93 : vector<8xf32> to vector<8x1xf32>
      %95 = tpu.reciprocal %94 {approx = true} : vector<8x1xf32> -> vector<8x1xf32>
      %96 = vector.broadcast %95 : vector<8x1xf32> to vector<8x8xf32>
      %97 = arith.mulf %92, %96 : vector<8x8xf32>
      %98 = arith.truncf %97 : vector<8x8xf32> to vector<8x8xbf16>
      %cst_49 = arith.constant dense<0.000000e+00> : vector<8x8xf32>
      %99 = tpu.matmul %98, %86, %cst_49 {dimension_numbers = #tpu.dot_dimension_numbers<[1], [0], [0], [1], [0, 0, 1, 1], [], []>} : vector<8x8xbf16>, vector<8x8xbf16>, vector<8x8xf32> -> vector<8x8xf32>
      %100 = arith.truncf %99 : vector<8x8xf32> to vector<8x8xbf16>
      %c16 = arith.constant 16 : index
      %c0_50 = arith.constant 0 : index
      %101 = vector.load %arg9[%c16, %c0_50] : memref<32x32xbf16, #tpu.memory_space<vmem>>, vector<8x32xbf16>
      %cst_51 = arith.constant dense<0.000000e+00> : vector<8x32xf32>
      %102 = tpu.matmul %100, %101, %cst_51 {dimension_numbers = #tpu.dot_dimension_numbers<[1], [0], [0], [1], [0, 0, 1, 1], [], []>} : vector<8x8xbf16>, vector<8x32xbf16>, vector<8x32xf32> -> vector<8x32xf32>
      %103 = arith.addf %83, %102 : vector<8x32xf32>
      %104 = vector.extract_strided_slice %41 {offsets = [0, 24], sizes = [8, 8], strides = [1, 1]} : vector<8x32xbf16> to vector<8x8xbf16>
      %105 = vector.extract_strided_slice %40 {offsets = [24, 0], sizes = [8, 8], strides = [1, 1]} : vector<32x8xbf16> to vector<8x8xbf16>
      %106 = vector.extract_strided_slice %42 {offsets = [0, 24], sizes = [8, 8], strides = [1, 1]} : vector<8x32xbf16> to vector<8x8xbf16>
      %cst_52 = arith.constant dense<0.000000e+00> : vector<8x8xf32>
      %107 = tpu.matmul %104, %105, %cst_52 {dimension_numbers = #tpu.dot_dimension_numbers<[1], [0], [0], [1], [0, 0, 1, 1], [], []>} : vector<8x8xbf16>, vector<8x8xbf16>, vector<8x8xf32> -> vector<8x8xf32>
      %cst_53 = arith.constant dense<0xFF800000> : vector<8xf32>
      %108 = vector.multi_reduction <maximumf>, %107, %cst_53 [1] : vector<8x8xf32> to vector<8xf32>
      %109 = vector.shape_cast %108 : vector<8xf32> to vector<8x1xf32>
      %110 = vector.broadcast %109 : vector<8x1xf32> to vector<8x8xf32>
      %111 = arith.subf %107, %110 : vector<8x8xf32>
      %112 = math.exp %111 : vector<8x8xf32>
      %cst_54 = arith.constant dense<0.000000e+00> : vector<8xf32>
      %113 = vector.multi_reduction <add>, %112, %cst_54 [1] : vector<8x8xf32> to vector<8xf32>
      %114 = vector.shape_cast %113 : vector<8xf32> to vector<8x1xf32>
      %115 = tpu.reciprocal %114 {approx = true} : vector<8x1xf32> -> vector<8x1xf32>
      %116 = vector.broadcast %115 : vector<8x1xf32> to vector<8x8xf32>
      %117 = arith.mulf %112, %116 : vector<8x8xf32>
      %118 = arith.truncf %117 : vector<8x8xf32> to vector<8x8xbf16>
      %cst_55 = arith.constant dense<0.000000e+00> : vector<8x8xf32>
      %119 = tpu.matmul %118, %106, %cst_55 {dimension_numbers = #tpu.dot_dimension_numbers<[1], [0], [0], [1], [0, 0, 1, 1], [], []>} : vector<8x8xbf16>, vector<8x8xbf16>, vector<8x8xf32> -> vector<8x8xf32>
      %120 = arith.truncf %119 : vector<8x8xf32> to vector<8x8xbf16>
      %c24 = arith.constant 24 : index
      %c0_56 = arith.constant 0 : index
      %121 = vector.load %arg9[%c24, %c0_56] : memref<32x32xbf16, #tpu.memory_space<vmem>>, vector<8x32xbf16>
      %cst_57 = arith.constant dense<0.000000e+00> : vector<8x32xf32>
      %122 = tpu.matmul %120, %121, %cst_57 {dimension_numbers = #tpu.dot_dimension_numbers<[1], [0], [0], [1], [0, 0, 1, 1], [], []>} : vector<8x8xbf16>, vector<8x32xbf16>, vector<8x32xf32> -> vector<8x32xf32>
      %123 = arith.addf %103, %122 : vector<8x32xf32>
      %c0_58 = arith.constant 0 : index
      %c0_59 = arith.constant 0 : index
      %124 = vector.load %arg10[%c0_58, %c0_59] : memref<1x32xf32, #tpu.memory_space<vmem>>, vector<1x32xf32>
      %125 = vector.broadcast %124 : vector<1x32xf32> to vector<8x32xf32>
      %126 = arith.addf %123, %125 : vector<8x32xf32>
      %127 = arith.addf %22, %126 : vector<8x32xf32>
      %c0_60 = arith.constant 0 : index
      %c0_61 = arith.constant 0 : index
      %128 = vector.load %arg11[%c0_60, %c0_61] : memref<1x32xf32, #tpu.memory_space<vmem>>, vector<1x32xf32>
      %c0_62 = arith.constant 0 : index
      %c0_63 = arith.constant 0 : index
      %129 = vector.load %arg12[%c0_62, %c0_63] : memref<1x32xf32, #tpu.memory_space<vmem>>, vector<1x32xf32>
      %cst_64 = arith.constant dense<0.000000e+00> : vector<8xf32>
      %130 = vector.multi_reduction <add>, %127, %cst_64 [1] : vector<8x32xf32> to vector<8xf32>
      %131 = vector.shape_cast %130 : vector<8xf32> to vector<8x1xf32>
      %cst_65 = arith.constant 3.200000e+01 : f32
      %132 = vector.broadcast %cst_65 : f32 to vector<8x1xf32>
      %133 = arith.divf %131, %132 : vector<8x1xf32>
      %134 = vector.broadcast %133 : vector<8x1xf32> to vector<8x32xf32>
      %135 = arith.subf %127, %134 : vector<8x32xf32>
      %136 = arith.mulf %135, %135 : vector<8x32xf32>
      %cst_66 = arith.constant dense<0.000000e+00> : vector<8xf32>
      %137 = vector.multi_reduction <add>, %136, %cst_66 [1] : vector<8x32xf32> to vector<8xf32>
      %138 = vector.shape_cast %137 : vector<8xf32> to vector<8x1xf32>
      %cst_67 = arith.constant 3.200000e+01 : f32
      %139 = vector.broadcast %cst_67 : f32 to vector<8x1xf32>
      %140 = arith.divf %138, %139 : vector<8x1xf32>
      %cst_68 = arith.constant 9.99999974E-6 : f32
      %141 = vector.broadcast %cst_68 : f32 to vector<8x1xf32>
      %142 = arith.addf %140, %141 : vector<8x1xf32>
      %143 = math.rsqrt %142 : vector<8x1xf32>
      %144 = vector.broadcast %143 : vector<8x1xf32> to vector<8x32xf32>
      %145 = arith.mulf %135, %144 : vector<8x32xf32>
      %146 = vector.broadcast %128 : vector<1x32xf32> to vector<8x32xf32>
      %147 = arith.mulf %145, %146 : vector<8x32xf32>
      %148 = vector.broadcast %129 : vector<1x32xf32> to vector<8x32xf32>
      %149 = arith.addf %147, %148 : vector<8x32xf32>
      %c0_69 = arith.constant 0 : index
      %c0_70 = arith.constant 0 : index
      %150 = vector.load %arg20[%c0_69, %c0_70] : memref<8x32xf32, #tpu.memory_space<vmem>>, vector<8x32xf32>
      tpu.vector_store %arg20[%c0_69, %c0_70], %149 {strides = array<i32>} : memref<8x32xf32, #tpu.memory_space<vmem>>, vector<8x32xf32>,
      %cst_71 = arith.constant 0.000000e+00 : f32
      %151 = vector.broadcast %cst_71 : f32 to vector<8x32xf32>
      %c0_72 = arith.constant 0 : index
      %c0_73 = arith.constant 0 : index
      %152 = vector.load %arg21[%c0_72, %c0_73] : memref<8x32xf32, #tpu.memory_space<vmem>>, vector<8x32xf32>
      tpu.vector_store %arg21[%c0_72, %c0_73], %151 {strides = array<i32>} : memref<8x32xf32, #tpu.memory_space<vmem>>, vector<8x32xf32>,
    } else {
    }
    %c0 = arith.constant 0 : index
    %c0_1 = arith.constant 0 : index
    %3 = vector.load %arg20[%c0, %c0_1] : memref<8x32xf32, #tpu.memory_space<vmem>>, vector<8x32xf32>
    %4 = arith.truncf %3 : vector<8x32xf32> to vector<8x32xbf16>
    %c0_2 = arith.constant 0 : index
    %c0_3 = arith.constant 0 : index
    %5 = vector.load %arg13[%c0_2, %c0_3] : memref<32x64xbf16, #tpu.memory_space<vmem>>, vector<32x64xbf16>
    %cst = arith.constant dense<0.000000e+00> : vector<8x64xf32>
    %6 = tpu.matmul %4, %5, %cst {dimension_numbers = #tpu.dot_dimension_numbers<[1], [0], [0], [1], [0, 0, 1, 1], [], []>} : vector<8x32xbf16>, vector<32x64xbf16>, vector<8x64xf32> -> vector<8x64xf32>
    %c0_4 = arith.constant 0 : index
    %c0_5 = arith.constant 0 : index
    %7 = vector.load %arg14[%c0_4, %c0_5] : memref<1x64xf32, #tpu.memory_space<vmem>>, vector<1x64xf32>
    %8 = vector.broadcast %7 : vector<1x64xf32> to vector<8x64xf32>
    %9 = arith.addf %6, %8 : vector<8x64xf32>
    %cst_6 = arith.constant 0.000000e+00 : f32
    %10 = vector.broadcast %cst_6 : f32 to vector<8x64xf32>
    %11 = arith.maximumf %9, %10 : vector<8x64xf32>
    %c0_7 = arith.constant 0 : index
    %c0_8 = arith.constant 0 : index
    %12 = vector.load %arg21[%c0_7, %c0_8] : memref<8x32xf32, #tpu.memory_space<vmem>>, vector<8x32xf32>
    %13 = arith.truncf %11 : vector<8x64xf32> to vector<8x64xbf16>
    %c0_9 = arith.constant 0 : index
    %c0_10 = arith.constant 0 : index
    %14 = vector.load %arg15[%c0_9, %c0_10] : memref<64x32xbf16, #tpu.memory_space<vmem>>, vector<64x32xbf16>
    %cst_11 = arith.constant dense<0.000000e+00> : vector<8x32xf32>
    %15 = tpu.matmul %13, %14, %cst_11 {dimension_numbers = #tpu.dot_dimension_numbers<[1], [0], [0], [1], [0, 0, 1, 1], [], []>} : vector<8x64xbf16>, vector<64x32xbf16>, vector<8x32xf32> -> vector<8x32xf32>
    %16 = arith.addf %12, %15 : vector<8x32xf32>
    %c0_12 = arith.constant 0 : index
    %c0_13 = arith.constant 0 : index
    %17 = vector.load %arg21[%c0_12, %c0_13] : memref<8x32xf32, #tpu.memory_space<vmem>>, vector<8x32xf32>
    tpu.vector_store %arg21[%c0_12, %c0_13], %16 {strides = array<i32>} : memref<8x32xf32, #tpu.memory_space<vmem>>, vector<8x32xf32>,
    %c0_i32_14 = arith.constant 0 : i32
    %18 = arith.cmpi eq, %arg2, %c0_i32_14 : i32
    %19 = arith.extui %18 : i1 to i32
    %c0_i32_15 = arith.constant 0 : i32
    %20 = arith.cmpi ne, %19, %c0_i32_15 : i32
    scf.if %20 {
      %c0_16 = arith.constant 0 : index
      %c0_17 = arith.constant 0 : index
      %21 = vector.load %arg21[%c0_16, %c0_17] : memref<8x32xf32, #tpu.memory_space<vmem>>, vector<8x32xf32>
      %c0_18 = arith.constant 0 : index
      %c0_19 = arith.constant 0 : index
      %22 = vector.load %arg16[%c0_18, %c0_19] : memref<1x32xf32, #tpu.memory_space<vmem>>, vector<1x32xf32>
      %23 = vector.broadcast %22 : vector<1x32xf32> to vector<8x32xf32>
      %24 = arith.addf %21, %23 : vector<8x32xf32>
      %c0_20 = arith.constant 0 : index
      %c0_21 = arith.constant 0 : index
      %25 = vector.load %arg20[%c0_20, %c0_21] : memref<8x32xf32, #tpu.memory_space<vmem>>, vector<8x32xf32>
      %26 = arith.addf %25, %24 : vector<8x32xf32>
      %c0_22 = arith.constant 0 : index
      %c0_23 = arith.constant 0 : index
      %27 = vector.load %arg17[%c0_22, %c0_23] : memref<1x32xf32, #tpu.memory_space<vmem>>, vector<1x32xf32>
      %c0_24 = arith.constant 0 : index
      %c0_25 = arith.constant 0 : index
      %28 = vector.load %arg18[%c0_24, %c0_25] : memref<1x32xf32, #tpu.memory_space<vmem>>, vector<1x32xf32>
      %cst_26 = arith.constant dense<0.000000e+00> : vector<8xf32>
      %29 = vector.multi_reduction <add>, %26, %cst_26 [1] : vector<8x32xf32> to vector<8xf32>
      %30 = vector.shape_cast %29 : vector<8xf32> to vector<8x1xf32>
      %cst_27 = arith.constant 3.200000e+01 : f32
      %31 = vector.broadcast %cst_27 : f32 to vector<8x1xf32>
      %32 = arith.divf %30, %31 : vector<8x1xf32>
      %33 = vector.broadcast %32 : vector<8x1xf32> to vector<8x32xf32>
      %34 = arith.subf %26, %33 : vector<8x32xf32>
      %35 = arith.mulf %34, %34 : vector<8x32xf32>
      %cst_28 = arith.constant dense<0.000000e+00> : vector<8xf32>
      %36 = vector.multi_reduction <add>, %35, %cst_28 [1] : vector<8x32xf32> to vector<8xf32>
      %37 = vector.shape_cast %36 : vector<8xf32> to vector<8x1xf32>
      %cst_29 = arith.constant 3.200000e+01 : f32
      %38 = vector.broadcast %cst_29 : f32 to vector<8x1xf32>
      %39 = arith.divf %37, %38 : vector<8x1xf32>
      %cst_30 = arith.constant 9.99999974E-6 : f32
      %40 = vector.broadcast %cst_30 : f32 to vector<8x1xf32>
      %41 = arith.addf %39, %40 : vector<8x1xf32>
      %42 = math.rsqrt %41 : vector<8x1xf32>
      %43 = vector.broadcast %42 : vector<8x1xf32> to vector<8x32xf32>
      %44 = arith.mulf %34, %43 : vector<8x32xf32>
      %45 = vector.broadcast %27 : vector<1x32xf32> to vector<8x32xf32>
      %46 = arith.mulf %44, %45 : vector<8x32xf32>
      %47 = vector.broadcast %28 : vector<1x32xf32> to vector<8x32xf32>
      %48 = arith.addf %46, %47 : vector<8x32xf32>
      %c0_31 = arith.constant 0 : index
      %c0_32 = arith.constant 0 : index
      %c0_33 = arith.constant 0 : index
      %49 = vector.load %arg19[%c0_31, %c0_32, %c0_33] : memref<1x8x32xf32, #tpu.memory_space<vmem>>, vector<1x8x32xf32>
      %50 = vector.shape_cast %49 : vector<1x8x32xf32> to vector<8x32xf32>
      %51 = vector.shape_cast %48 : vector<8x32xf32> to vector<1x8x32xf32>
      tpu.vector_store %arg19[%c0_31, %c0_32, %c0_33], %51 {strides = array<i32>} : memref<1x8x32xf32, #tpu.memory_space<vmem>>, vector<1x8x32xf32>,
    } else {
    }
    return
  }
  func.func @transform_0(%arg0: i32, %arg1: i32, %arg2: i32) -> (i32, i32, i32) {
    %c0_i32 = arith.constant 0 : i32
    %c0_i32_0 = arith.constant 0 : i32
    return %arg0, %arg1, %c0_i32 : i32, i32, i32
  }
  func.func @transform_1(%arg0: i32, %arg1: i32, %arg2: i32) -> (i32, i32, i32) {
    %c0_i32 = arith.constant 0 : i32
    %c0_i32_0 = arith.constant 0 : i32
    %c0_i32_1 = arith.constant 0 : i32
    return %arg0, %c0_i32, %c0_i32_0 : i32, i32, i32
  }
  func.func @transform_2(%arg0: i32, %arg1: i32, %arg2: i32) -> (i32, i32) {
    %c0_i32 = arith.constant 0 : i32
    %c0_i32_0 = arith.constant 0 : i32
    %c0_i32_1 = arith.constant 0 : i32
    return %c0_i32, %c0_i32_0 : i32, i32
  }
  func.func @transform_3(%arg0: i32, %arg1: i32, %arg2: i32) -> (i32, i32) {
    %c0_i32 = arith.constant 0 : i32
    %c0_i32_0 = arith.constant 0 : i32
    %c0_i32_1 = arith.constant 0 : i32
    return %c0_i32, %c0_i32_0 : i32, i32
  }
  func.func @transform_4(%arg0: i32, %arg1: i32, %arg2: i32) -> (i32, i32) {
    %c0_i32 = arith.constant 0 : i32
    %c0_i32_0 = arith.constant 0 : i32
    %c0_i32_1 = arith.constant 0 : i32
    return %c0_i32, %c0_i32_0 : i32, i32
  }
  func.func @transform_5(%arg0: i32, %arg1: i32, %arg2: i32) -> (i32, i32) {
    %c0_i32 = arith.constant 0 : i32
    %c0_i32_0 = arith.constant 0 : i32
    %c0_i32_1 = arith.constant 0 : i32
    return %c0_i32, %c0_i32_0 : i32, i32
  }
  func.func @transform_6(%arg0: i32, %arg1: i32, %arg2: i32) -> (i32, i32) {
    %c0_i32 = arith.constant 0 : i32
    %c0_i32_0 = arith.constant 0 : i32
    %c0_i32_1 = arith.constant 0 : i32
    return %c0_i32, %c0_i32_0 : i32, i32
  }
  func.func @transform_7(%arg0: i32, %arg1: i32, %arg2: i32) -> (i32, i32) {
    %c0_i32 = arith.constant 0 : i32
    %c0_i32_0 = arith.constant 0 : i32
    %c0_i32_1 = arith.constant 0 : i32
    return %c0_i32, %c0_i32_0 : i32, i32
  }
  func.func @transform_8(%arg0: i32, %arg1: i32, %arg2: i32) -> (i32, i32) {
    %c0_i32 = arith.constant 0 : i32
    %c0_i32_0 = arith.constant 0 : i32
    %c0_i32_1 = arith.constant 0 : i32
    return %c0_i32, %c0_i32_0 : i32, i32
  }
  func.func @transform_9(%arg0: i32, %arg1: i32, %arg2: i32) -> (i32, i32) {
    %c0_i32 = arith.constant 0 : i32
    %c0_i32_0 = arith.constant 0 : i32
    %c0_i32_1 = arith.constant 0 : i32
    return %c0_i32, %c0_i32_0 : i32, i32
  }
  func.func @transform_10(%arg0: i32, %arg1: i32, %arg2: i32) -> (i32, i32) {
    %c0_i32 = arith.constant 0 : i32
    %c0_i32_0 = arith.constant 0 : i32
    return %c0_i32, %arg2 : i32, i32
  }
  func.func @transform_11(%arg0: i32, %arg1: i32, %arg2: i32) -> (i32, i32) {
    %c0_i32 = arith.constant 0 : i32
    %c0_i32_0 = arith.constant 0 : i32
    return %c0_i32, %arg2 : i32, i32
  }
  func.func @transform_12(%arg0: i32, %arg1: i32, %arg2: i32) -> (i32, i32) {
    %c0_i32 = arith.constant 0 : i32
    %c0_i32_0 = arith.constant 0 : i32
    return %arg2, %c0_i32 : i32, i32
  }
  func.func @transform_13(%arg0: i32, %arg1: i32, %arg2: i32) -> (i32, i32) {
    %c0_i32 = arith.constant 0 : i32
    %c0_i32_0 = arith.constant 0 : i32
    %c0_i32_1 = arith.constant 0 : i32
    return %c0_i32, %c0_i32_0 : i32, i32
  }
  func.func @transform_14(%arg0: i32, %arg1: i32, %arg2: i32) -> (i32, i32) {
    %c0_i32 = arith.constant 0 : i32
    %c0_i32_0 = arith.constant 0 : i32
    %c0_i32_1 = arith.constant 0 : i32
    return %c0_i32, %c0_i32_0 : i32, i32
  }
  func.func @transform_15(%arg0: i32, %arg1: i32, %arg2: i32) -> (i32, i32) {
    %c0_i32 = arith.constant 0 : i32
    %c0_i32_0 = arith.constant 0 : i32
    %c0_i32_1 = arith.constant 0 : i32
    return %c0_i32, %c0_i32_0 : i32, i32
  }
  func.func @transform_16(%arg0: i32, %arg1: i32, %arg2: i32) -> (i32, i32, i32) {
    %c0_i32 = arith.constant 0 : i32
    %c0_i32_0 = arith.constant 0 : i32
    return %arg0, %arg1, %c0_i32 : i32, i32, i32
  }
}

</mosaic_0001>

<llo_original>
// kernel: tpu_custom_call.1
$region0: #{tpu_custom_call.1}
  #allocation0 [shape = 'u32[]', space=smem, size = 0x4, offset = 0x4, fixed_abs, tag = 'smem constant byte address 0x4 - core index']
  #allocation1 [shape = 'u32[72,128]{1,0:T(1,128)}', space=vmem, size = 0x9000, scoped, tag = 'internal scratch']
  #allocation2 [shape = 'f32[8,32]{1,0:T(8,128)}', space=vmem, size = 0x1000, scoped, tag = 'scratch operand']
  #allocation3 [shape = 'f32[8,32]{1,0:T(8,128)}', space=vmem, size = 0x1000, scoped, tag = 'scratch operand']
  %s0 = inlined_call_operand.vmem [shape: f32[2,8,32], index: 0, kind: input, shape index: {}]
  %s1 = inlined_call_operand.vmem [shape: f32[2,8,32], index: 1, kind: input, shape index: {}]
  %s2 = inlined_call_operand.vmem [shape: bf16[32,32], index: 2, kind: input, shape index: {}]
  %s3 = inlined_call_operand.vmem [shape: f32[1,32], index: 3, kind: input, shape index: {}]
  %s4 = inlined_call_operand.hbm [shape: bf16[32,64], index: 4, kind: input, shape index: {}]
  %s5 = inlined_call_operand.vmem [shape: f32[1,64], index: 5, kind: input, shape index: {}]
  %s6 = inlined_call_operand.hbm [shape: bf16[32,32], index: 6, kind: input, shape index: {}]
  %s7 = inlined_call_operand.vmem [shape: f32[1,32], index: 7, kind: input, shape index: {}]
  %s8 = inlined_call_operand.vmem [shape: f32[1,32], index: 8, kind: input, shape index: {}]
  %s9 = inlined_call_operand.vmem [shape: f32[1,32], index: 9, kind: input, shape index: {}]
  %s10 = inlined_call_operand.hbm [shape: bf16[32,64], index: 10, kind: input, shape index: {}]
  %s11 = inlined_call_operand.vmem [shape: f32[1,64], index: 11, kind: input, shape index: {}]
  %s12 = inlined_call_operand.vmem [shape: bf16[64,32], index: 12, kind: input, shape index: {}]
  %s13 = inlined_call_operand.vmem [shape: f32[1,32], index: 13, kind: input, shape index: {}]
  %s14 = inlined_call_operand.vmem [shape: f32[1,32], index: 14, kind: input, shape index: {}]
  %s15 = inlined_call_operand.vmem [shape: f32[1,32], index: 15, kind: input, shape index: {}]
  %s16 = inlined_call_operand.hbm [shape: f32[2,8,32], index: 16, kind: output, shape index: {}]
  %s17 = sld [smem:[#allocation0]]
  $region117: #{tpu_custom_call.1} parent=0
    _
  %s19 = ssub.s32 1, %s17
  %s20 = scalar_select 0, %s19, %s17
  $region1: #{tpu_custom_call.1} parent=0
    #allocation4 [shape = 'u8[8192]{0}', space=vmem, size = 0x2000, scoped, tag = 'input window, operand 4, single buffered']
    #allocation5 [shape = 's32[2]{0}', space=sflag, size = 0x8, scoped, tag = 'scoped memory for tpu_custom_call.1']
    #allocation6 [shape = 's32[2]{0}', space=sflag, size = 0x8, scoped, tag = 'scoped memory for tpu_custom_call.1']
    #allocation7 [shape = 'u8[8192]{0}', space=vmem, size = 0x2000, scoped, tag = 'input window, operand 6, single buffered']
    #allocation8 [shape = 's32[1]{0}', space=sflag, size = 0x4, scoped, tag = 'scoped memory for tpu_custom_call.1']
    #allocation9 [shape = 'u8[8192]{0}', space=vmem, size = 0x2000, scoped, tag = 'input window, operand 10, single buffered']
    #allocation10 [shape = 'u8[8192]{0}', space=vmem, size = 0x2000, scoped, tag = 'output window, operand 0']
    %21 = vsyncpa [#allocation5], 0
    %22 = vsyncpa [#allocation8], 0
    %23 = vsyncpa [#allocation6], 0
    %s24 = scalar_lea.sflag [#allocation6], 1
    %25 = vsyncpa %s24, 0
    loop: start=0, step=1, limit=4
    $region2: #{tpu_custom_call.1} parent=1 // loop_pre_header
      _
    $region3: #{tpu_custom_call.1} parent=1 // loop_header
      %s27 = sphi 0, %s31
      %p28 = scmp.ge.s32.totalorder %s27, 4
      %s34 = sphi 0, %s53
      %s35 = sphi 0, %s49
      %s36 = sphi 0, %s45
      %s37 = sphi 0, %s34
      %s38 = sphi 0, %s35
      %s39 = sphi 0, %s36
      %s40 = sphi 0, %s37
      %s41 = sphi 0, %s38
      %s42 = sphi 0, %s39
      %s58 = sphi 0, %s60
      %s61 = sphi 0, %s58
      %s62 = sphi 0, %s61
      %s78 = sphi 0, %s62
      %s84 = sphi 0, %s86
      %s87 = sphi 0, %s84
      %s88 = sphi 0, %s87
      %s104 = sphi 0, %s88
      %s108 = sphi 0, %s108
      %s110 = sphi 0, %s108
      %s111 = sphi 0, %s110
      %s125 = sphi 0, %s111
      %s129 = sphi 0, %s129
      %s131 = sphi 0, %s129
      %s132 = sphi 0, %s131
      %s146 = sphi 0, %s132
      %s150 = sphi 0, %s150
      %s152 = sphi 0, %s150
      %s153 = sphi 0, %s152
      %s167 = sphi 0, %s153
      %s171 = sphi 0, %s171
      %s173 = sphi 0, %s171
      %s174 = sphi 0, %s173
      %s188 = sphi 0, %s174
      %s192 = sphi 0, %s192
      %s194 = sphi 0, %s192
      %s195 = sphi 0, %s194
      %s209 = sphi 0, %s195
      %s213 = sphi 0, %s213
      %s215 = sphi 0, %s213
      %s216 = sphi 0, %s215
      %s230 = sphi 0, %s216
      %s234 = sphi 0, %s234
      %s236 = sphi 0, %s234
      %s237 = sphi 0, %s236
      %s251 = sphi 0, %s237
      %s255 = sphi 0, %s255
      %s257 = sphi 0, %s255
      %s258 = sphi 0, %s257
      %s272 = sphi 0, %s258
      %s278 = sphi 0, %s280
      %s281 = sphi 0, %s278
      %s282 = sphi 0, %s281
      %s298 = sphi 0, %s282
      %s304 = sphi 0, %s306
      %s307 = sphi 0, %s304
      %s308 = sphi 0, %s307
      %s324 = sphi 0, %s308
      %s330 = sphi 0, %s332
      %s333 = sphi 0, %s330
      %s334 = sphi 0, %s333
      %s350 = sphi 0, %s334
      %s354 = sphi 0, %s354
      %s356 = sphi 0, %s354
      %s357 = sphi 0, %s356
      %s371 = sphi 0, %s357
      %s375 = sphi 0, %s375
      %s377 = sphi 0, %s375
      %s378 = sphi 0, %s377
      %s392 = sphi 0, %s378
      %s396 = sphi 0, %s396
      %s398 = sphi 0, %s396
      %s399 = sphi 0, %s398
      %s413 = sphi 0, %s399
      %s421 = sphi 0, %s423
      %s424 = sphi 0, %s421
      %s425 = sphi 0, %s424
      %s441 = sphi 0, %s425
    $region4: #{tpu_custom_call.1} parent=1 // loop_header_branch
      %30 = sbr.rel (%p28) target = $region8
    $region5: #{tpu_custom_call.1} parent=1 // loop_body
      %s32 = ssub.s32 %s27, 1
      %s33 = ssub.s32 %s27, 2
      %s43 = sadd.s32 1, %s36
      %p44 = scmp.ge.s32.totalorder %s43, 1
      %s45 = scalar_select %p44, 0, %s43
      %s46 = sadd.s32 1, %s35
      %s47 = scalar_select %p44, %s46, %s35
      %p48 = scmp.ge.s32.totalorder %s47, 1
      %s49 = scalar_select %p48, 0, %s47
      %s50 = sadd.s32 1, %s34
      %s51 = scalar_select %p48, %s50, %s34
      %p52 = scmp.ge.s32.totalorder %s51, 2
      %s53 = scalar_select %p52, 0, %s51
      %s54 = ssub.s32 %s34, %s53
      %s55 = ssub.s32 %s35, %s49
      %s56 = sor.u32 %s54, %s55
      %p57 = scmp.eq.s32.totalorder %s56, 0
      %s59 = sadd.s32 %s58, 1
      %s60 = scalar_select %p57, %s58, %s59
      %p63 = pneg %p57
      %p64 = scmp.eq.s32.totalorder %s27, 1
      %p65 = por %p63, %p64
      %p66 = scmp.ne.s32.totalorder %s58, %s61
      %p67 = scmp.eq.s32.totalorder %s27, 0
      %p68 = por %p66, %p67
      %p69 = scmp.ne.s32.totalorder %s58, %s61
      %p70 = scmp.eq.s32.totalorder %s32, 1
      %p71 = por %p69, %p70
      %p72 = scmp.ne.s32.totalorder %s61, %s62
      %p73 = scmp.eq.s32.totalorder %s32, 0
      %p74 = por %p72, %p73
      %p75 = scmp.ne.s32.totalorder %s61, %s62
      %p76 = scmp.eq.s32.totalorder %s33, 1
      %p77 = por %p75, %p76
      %p79 = scmp.ne.s32.totalorder %s62, %s78
      %p80 = scmp.eq.s32.totalorder %s33, 0
      %p81 = por %p79, %p80
      %s82 = ssub.s32 %s34, %s53
      %p83 = scmp.eq.s32.totalorder %s82, 0
      %s85 = sadd.s32 %s84, 1
      %s86 = scalar_select %p83, %s84, %s85
      %p89 = pneg %p83
      %p90 = scmp.eq.s32.totalorder %s27, 1
      %p91 = por %p89, %p90
      %p92 = scmp.ne.s32.totalorder %s84, %s87
      %p93 = scmp.eq.s32.totalorder %s27, 0
      %p94 = por %p92, %p93
      %p95 = scmp.ne.s32.totalorder %s84, %s87
      %p96 = scmp.eq.s32.totalorder %s32, 1
      %p97 = por %p95, %p96
      %p98 = scmp.ne.s32.totalorder %s87, %s88
      %p99 = scmp.eq.s32.totalorder %s32, 0
      %p100 = por %p98, %p99
      %p101 = scmp.ne.s32.totalorder %s87, %s88
      %p102 = scmp.eq.s32.totalorder %s33, 1
      %p103 = por %p101, %p102
      %p105 = scmp.ne.s32.totalorder %s88, %s104
      %p106 = scmp.eq.s32.totalorder %s33, 0
      %p107 = por %p105, %p106
      %s109 = sadd.s32 %s108, 1
      %p112 = scmp.eq.s32.totalorder %s27, 1
      %p113 = scmp.ne.s32.totalorder %s108, %s110
      %p114 = scmp.eq.s32.totalorder %s27, 0
      %p115 = por %p113, %p114
      %p116 = scmp.ne.s32.totalorder %s108, %s110
      %p117 = scmp.eq.s32.totalorder %s32, 1
      %p118 = por %p116, %p117
      %p119 = scmp.ne.s32.totalorder %s110, %s111
      %p120 = scmp.eq.s32.totalorder %s32, 0
      %p121 = por %p119, %p120
      %p122 = scmp.ne.s32.totalorder %s110, %s111
      %p123 = scmp.eq.s32.totalorder %s33, 1
      %p124 = por %p122, %p123
      %p126 = scmp.ne.s32.totalorder %s111, %s125
      %p127 = scmp.eq.s32.totalorder %s33, 0
      %p128 = por %p126, %p127
      %s130 = sadd.s32 %s129, 1
      %p133 = scmp.eq.s32.totalorder %s27, 1
      %p134 = scmp.ne.s32.totalorder %s129, %s131
      %p135 = scmp.eq.s32.totalorder %s27, 0
      %p136 = por %p134, %p135
      %p137 = scmp.ne.s32.totalorder %s129, %s131
      %p138 = scmp.eq.s32.totalorder %s32, 1
      %p139 = por %p137, %p138
      %p140 = scmp.ne.s32.totalorder %s131, %s132
      %p141 = scmp.eq.s32.totalorder %s32, 0
      %p142 = por %p140, %p141
      %p143 = scmp.ne.s32.totalorder %s131, %s132
      %p144 = scmp.eq.s32.totalorder %s33, 1
      %p145 = por %p143, %p144
      %p147 = scmp.ne.s32.totalorder %s132, %s146
      %p148 = scmp.eq.s32.totalorder %s33, 0
      %p149 = por %p147, %p148
      %s151 = sadd.s32 %s150, 1
      %p154 = scmp.eq.s32.totalorder %s27, 1
      %p155 = scmp.ne.s32.totalorder %s150, %s152
      %p156 = scmp.eq.s32.totalorder %s27, 0
      %p157 = por %p155, %p156
      %p158 = scmp.ne.s32.totalorder %s150, %s152
      %p159 = scmp.eq.s32.totalorder %s32, 1
      %p160 = por %p158, %p159
      %p161 = scmp.ne.s32.totalorder %s152, %s153
      %p162 = scmp.eq.s32.totalorder %s32, 0
      %p163 = por %p161, %p162
      %p164 = scmp.ne.s32.totalorder %s152, %s153
      %p165 = scmp.eq.s32.totalorder %s33, 1
      %p166 = por %p164, %p165
      %p168 = scmp.ne.s32.totalorder %s153, %s167
      %p169 = scmp.eq.s32.totalorder %s33, 0
      %p170 = por %p168, %p169
      %s172 = sadd.s32 %s171, 1
      %p175 = scmp.eq.s32.totalorder %s27, 1
      %p176 = scmp.ne.s32.totalorder %s171, %s173
      %p177 = scmp.eq.s32.totalorder %s27, 0
      %p178 = por %p176, %p177
      %p179 = scmp.ne.s32.totalorder %s171, %s173
      %p180 = scmp.eq.s32.totalorder %s32, 1
      %p181 = por %p179, %p180
      %p182 = scmp.ne.s32.totalorder %s173, %s174
      %p183 = scmp.eq.s32.totalorder %s32, 0
      %p184 = por %p182, %p183
      %p185 = scmp.ne.s32.totalorder %s173, %s174
      %p186 = scmp.eq.s32.totalorder %s33, 1
      %p187 = por %p185, %p186
      %p189 = scmp.ne.s32.totalorder %s174, %s188
      %p190 = scmp.eq.s32.totalorder %s33, 0
      %p191 = por %p189, %p190
      %s193 = sadd.s32 %s192, 1
      %p196 = scmp.eq.s32.totalorder %s27, 1
      %p197 = scmp.ne.s32.totalorder %s192, %s194
      %p198 = scmp.eq.s32.totalorder %s27, 0
      %p199 = por %p197, %p198
      %p200 = scmp.ne.s32.totalorder %s192, %s194
      %p201 = scmp.eq.s32.totalorder %s32, 1
      %p202 = por %p200, %p201
      %p203 = scmp.ne.s32.totalorder %s194, %s195
      %p204 = scmp.eq.s32.totalorder %s32, 0
      %p205 = por %p203, %p204
      %p206 = scmp.ne.s32.totalorder %s194, %s195
      %p207 = scmp.eq.s32.totalorder %s33, 1
      %p208 = por %p206, %p207
      %p210 = scmp.ne.s32.totalorder %s195, %s209
      %p211 = scmp.eq.s32.totalorder %s33, 0
      %p212 = por %p210, %p211
      %s214 = sadd.s32 %s213, 1
      %p217 = scmp.eq.s32.totalorder %s27, 1
      %p218 = scmp.ne.s32.totalorder %s213, %s215
      %p219 = scmp.eq.s32.totalorder %s27, 0
      %p220 = por %p218, %p219
      %p221 = scmp.ne.s32.totalorder %s213, %s215
      %p222 = scmp.eq.s32.totalorder %s32, 1
      %p223 = por %p221, %p222
      %p224 = scmp.ne.s32.totalorder %s215, %s216
      %p225 = scmp.eq.s32.totalorder %s32, 0
      %p226 = por %p224, %p225
      %p227 = scmp.ne.s32.totalorder %s215, %s216
      %p228 = scmp.eq.s32.totalorder %s33, 1
      %p229 = por %p227, %p228
      %p231 = scmp.ne.s32.totalorder %s216, %s230
      %p232 = scmp.eq.s32.totalorder %s33, 0
      %p233 = por %p231, %p232
      %s235 = sadd.s32 %s234, 1
      %p238 = scmp.eq.s32.totalorder %s27, 1
      %p239 = scmp.ne.s32.totalorder %s234, %s236
      %p240 = scmp.eq.s32.totalorder %s27, 0
      %p241 = por %p239, %p240
      %p242 = scmp.ne.s32.totalorder %s234, %s236
      %p243 = scmp.eq.s32.totalorder %s32, 1
      %p244 = por %p242, %p243
      %p245 = scmp.ne.s32.totalorder %s236, %s237
      %p246 = scmp.eq.s32.totalorder %s32, 0
      %p247 = por %p245, %p246
      %p248 = scmp.ne.s32.totalorder %s236, %s237
      %p249 = scmp.eq.s32.totalorder %s33, 1
      %p250 = por %p248, %p249
      %p252 = scmp.ne.s32.totalorder %s237, %s251
      %p253 = scmp.eq.s32.totalorder %s33, 0
      %p254 = por %p252, %p253
      %s256 = sadd.s32 %s255, 1
      %p259 = scmp.eq.s32.totalorder %s27, 1
      %p260 = scmp.ne.s32.totalorder %s255, %s257
      %p261 = scmp.eq.s32.totalorder %s27, 0
      %p262 = por %p260, %p261
      %p263 = scmp.ne.s32.totalorder %s255, %s257
      %p264 = scmp.eq.s32.totalorder %s32, 1
      %p265 = por %p263, %p264
      %p266 = scmp.ne.s32.totalorder %s257, %s258
      %p267 = scmp.eq.s32.totalorder %s32, 0
      %p268 = por %p266, %p267
      %p269 = scmp.ne.s32.totalorder %s257, %s258
      %p270 = scmp.eq.s32.totalorder %s33, 1
      %p271 = por %p269, %p270
      %p273 = scmp.ne.s32.totalorder %s258, %s272
      %p274 = scmp.eq.s32.totalorder %s33, 0
      %p275 = por %p273, %p274
      %s276 = ssub.s32 %s36, %s45
      %p277 = scmp.eq.s32.totalorder %s276, 0
      %s279 = sadd.s32 %s278, 1
      %s280 = scalar_select %p277, %s278, %s279
      %p283 = pneg %p277
      %p284 = scmp.eq.s32.totalorder %s27, 1
      %p285 = por %p283, %p284
      %p286 = scmp.ne.s32.totalorder %s278, %s281
      %p287 = scmp.eq.s32.totalorder %s27, 0
      %p288 = por %p286, %p287
      %p289 = scmp.ne.s32.totalorder %s278, %s281
      %p290 = scmp.eq.s32.totalorder %s32, 1
      %p291 = por %p289, %p290
      %p292 = scmp.ne.s32.totalorder %s281, %s282
      %p293 = scmp.eq.s32.totalorder %s32, 0
      %p294 = por %p292, %p293
      %p295 = scmp.ne.s32.totalorder %s281, %s282
      %p296 = scmp.eq.s32.totalorder %s33, 1
      %p297 = por %p295, %p296
      %p299 = scmp.ne.s32.totalorder %s282, %s298
      %p300 = scmp.eq.s32.totalorder %s33, 0
      %p301 = por %p299, %p300
      %s302 = ssub.s32 %s36, %s45
      %p303 = scmp.eq.s32.totalorder %s302, 0
      %s305 = sadd.s32 %s304, 1
      %s306 = scalar_select %p303, %s304, %s305
      %p309 = pneg %p303
      %p310 = scmp.eq.s32.totalorder %s27, 1
      %p311 = por %p309, %p310
      %p312 = scmp.ne.s32.totalorder %s304, %s307
      %p313 = scmp.eq.s32.totalorder %s27, 0
      %p314 = por %p312, %p313
      %p315 = scmp.ne.s32.totalorder %s304, %s307
      %p316 = scmp.eq.s32.totalorder %s32, 1
      %p317 = por %p315, %p316
      %p318 = scmp.ne.s32.totalorder %s307, %s308
      %p319 = scmp.eq.s32.totalorder %s32, 0
      %p320 = por %p318, %p319
      %p321 = scmp.ne.s32.totalorder %s307, %s308
      %p322 = scmp.eq.s32.totalorder %s33, 1
      %p323 = por %p321, %p322
      %p325 = scmp.ne.s32.totalorder %s308, %s324
      %p326 = scmp.eq.s32.totalorder %s33, 0
      %p327 = por %p325, %p326
      %s328 = ssub.s32 %s36, %s45
      %p329 = scmp.eq.s32.totalorder %s328, 0
      %s331 = sadd.s32 %s330, 1
      %s332 = scalar_select %p329, %s330, %s331
      %p335 = pneg %p329
      %p336 = scmp.eq.s32.totalorder %s27, 1
      %p337 = por %p335, %p336
      %p338 = scmp.ne.s32.totalorder %s330, %s333
      %p339 = scmp.eq.s32.totalorder %s27, 0
      %p340 = por %p338, %p339
      %p341 = scmp.ne.s32.totalorder %s330, %s333
      %p342 = scmp.eq.s32.totalorder %s32, 1
      %p343 = por %p341, %p342
      %p344 = scmp.ne.s32.totalorder %s333, %s334
      %p345 = scmp.eq.s32.totalorder %s32, 0
      %p346 = por %p344, %p345
      %p347 = scmp.ne.s32.totalorder %s333, %s334
      %p348 = scmp.eq.s32.totalorder %s33, 1
      %p349 = por %p347, %p348
      %p351 = scmp.ne.s32.totalorder %s334, %s350
      %p352 = scmp.eq.s32.totalorder %s33, 0
      %p353 = por %p351, %p352
      %s355 = sadd.s32 %s354, 1
      %p358 = scmp.eq.s32.totalorder %s27, 1
      %p359 = scmp.ne.s32.totalorder %s354, %s356
      %p360 = scmp.eq.s32.totalorder %s27, 0
      %p361 = por %p359, %p360
      %p362 = scmp.ne.s32.totalorder %s354, %s356
      %p363 = scmp.eq.s32.totalorder %s32, 1
      %p364 = por %p362, %p363
      %p365 = scmp.ne.s32.totalorder %s356, %s357
      %p366 = scmp.eq.s32.totalorder %s32, 0
      %p367 = por %p365, %p366
      %p368 = scmp.ne.s32.totalorder %s356, %s357
      %p369 = scmp.eq.s32.totalorder %s33, 1
      %p370 = por %p368, %p369
      %p372 = scmp.ne.s32.totalorder %s357, %s371
      %p373 = scmp.eq.s32.totalorder %s33, 0
      %p374 = por %p372, %p373
      %s376 = sadd.s32 %s375, 1
      %p379 = scmp.eq.s32.totalorder %s27, 1
      %p380 = scmp.ne.s32.totalorder %s375, %s377
      %p381 = scmp.eq.s32.totalorder %s27, 0
      %p382 = por %p380, %p381
      %p383 = scmp.ne.s32.totalorder %s375, %s377
      %p384 = scmp.eq.s32.totalorder %s32, 1
      %p385 = por %p383, %p384
      %p386 = scmp.ne.s32.totalorder %s377, %s378
      %p387 = scmp.eq.s32.totalorder %s32, 0
      %p388 = por %p386, %p387
      %p389 = scmp.ne.s32.totalorder %s377, %s378
      %p390 = scmp.eq.s32.totalorder %s33, 1
      %p391 = por %p389, %p390
      %p393 = scmp.ne.s32.totalorder %s378, %s392
      %p394 = scmp.eq.s32.totalorder %s33, 0
      %p395 = por %p393, %p394
      %s397 = sadd.s32 %s396, 1
      %p400 = scmp.eq.s32.totalorder %s27, 1
      %p401 = scmp.ne.s32.totalorder %s396, %s398
      %p402 = scmp.eq.s32.totalorder %s27, 0
      %p403 = por %p401, %p402
      %p404 = scmp.ne.s32.totalorder %s396, %s398
      %p405 = scmp.eq.s32.totalorder %s32, 1
      %p406 = por %p404, %p405
      %p407 = scmp.ne.s32.totalorder %s398, %s399
      %p408 = scmp.eq.s32.totalorder %s32, 0
      %p409 = por %p407, %p408
      %p410 = scmp.ne.s32.totalorder %s398, %s399
      %p411 = scmp.eq.s32.totalorder %s33, 1
      %p412 = por %p410, %p411
      %p414 = scmp.ne.s32.totalorder %s399, %s413
      %p415 = scmp.eq.s32.totalorder %s33, 0
      %p416 = por %p414, %p415
      %s417 = ssub.s32 %s34, %s53
      %s418 = ssub.s32 %s35, %s49
      %s419 = sor.u32 %s417, %s418
      %p420 = scmp.eq.s32.totalorder %s419, 0
      %s422 = sadd.s32 %s421, 1
      %s423 = scalar_select %p420, %s421, %s422
      %p426 = pneg %p420
      %p427 = scmp.eq.s32.totalorder %s27, 1
      %p428 = por %p426, %p427
      %p429 = scmp.ne.s32.totalorder %s421, %s424
      %p430 = scmp.eq.s32.totalorder %s27, 0
      %p431 = por %p429, %p430
      %p432 = scmp.ne.s32.totalorder %s421, %s424
      %p433 = scmp.eq.s32.totalorder %s32, 1
      %p434 = por %p432, %p433
      %p435 = scmp.ne.s32.totalorder %s424, %s425
      %p436 = scmp.eq.s32.totalorder %s32, 0
      %p437 = por %p435, %p436
      %p438 = scmp.ne.s32.totalorder %s424, %s425
      %p439 = scmp.eq.s32.totalorder %s33, 1
      %p440 = por %p438, %p439
      %p442 = scmp.ne.s32.totalorder %s425, %s441
      %p443 = scmp.eq.s32.totalorder %s33, 0
      %p444 = por %p442, %p443
      %p445 = scmp.le.s32.totalorder 1, %s27
      %p446 = scmp.lt.s32.totalorder %s27, 3
      %p447 = pnand %p445, %p446
      %p448 = pneg %p447
      // Predicated region
      $region9: #{tpu_custom_call.1} parent=5 // pred_check
        _
      $region10: #{tpu_custom_call.1} parent=5 // pred_check_branch
        %450 = sbr.rel (%p447) target = $region12
      $region11: #{tpu_custom_call.1} parent=5 // pred_region
        %s451 = ssub.s32 %s27, 1
        // Predicated region
        $region13: #{tpu_custom_call.1} parent=11 // pred_check
          %p452 = pneg %p121
        $region14: #{tpu_custom_call.1} parent=11 // pred_check_branch
          %454 = sbr.rel (%p452) target = $region16
        $region15: #{tpu_custom_call.1} parent=11 // pred_region
          _
        $region16: #{tpu_custom_call.1} parent=11 // pred_fallthru
          _
        // Predicated region
        $region17: #{tpu_custom_call.1} parent=11 // pred_check
          %p455 = pneg %p142
        $region18: #{tpu_custom_call.1} parent=11 // pred_check_branch
          %457 = sbr.rel (%p455) target = $region20
        $region19: #{tpu_custom_call.1} parent=11 // pred_region
          _
        $region20: #{tpu_custom_call.1} parent=11 // pred_fallthru
          _
        // Predicated region
        $region21: #{tpu_custom_call.1} parent=11 // pred_check
          %p458 = pneg %p163
        $region22: #{tpu_custom_call.1} parent=11 // pred_check_branch
          %460 = sbr.rel (%p458) target = $region24
        $region23: #{tpu_custom_call.1} parent=11 // pred_region
          %462 = vsyncadd [#allocation5], 0
          %s463 = sshll.u32 %s4, 4
          %s464 = int_to_ptr.hbm [resolvable:$true] %s463
          %s465 = sshll.u32 [#allocation4], 4
          %s466 = int_to_ptr.vmem [resolvable:$true] %s465
          %471 = dma.hbm_to_vmem [thread:$0]  %s464, 256, %s466, [#allocation5], 64, 64, 4
        $region24: #{tpu_custom_call.1} parent=11 // pred_fallthru
          _
        // Predicated region
        $region25: #{tpu_custom_call.1} parent=11 // pred_check
          %p472 = pneg %p184
        $region26: #{tpu_custom_call.1} parent=11 // pred_check_branch
          %474 = sbr.rel (%p472) target = $region28
        $region27: #{tpu_custom_call.1} parent=11 // pred_region
          _
        $region28: #{tpu_custom_call.1} parent=11 // pred_fallthru
          _
        // Predicated region
        $region29: #{tpu_custom_call.1} parent=11 // pred_check
          %p475 = pneg %p205
        $region30: #{tpu_custom_call.1} parent=11 // pred_check_branch
          %477 = sbr.rel (%p475) target = $region32
        $region31: #{tpu_custom_call.1} parent=11 // pred_region
          %479 = vsyncadd [#allocation8], 0
          %s480 = sshll.u32 %s6, 4
          %s481 = int_to_ptr.hbm [resolvable:$true] %s480
          %s482 = sshll.u32 [#allocation7], 4
          %s483 = int_to_ptr.vmem [resolvable:$true] %s482
          %488 = dma.hbm_to_vmem [thread:$0]  %s481, 256, %s483, [#allocation8], 64, 64, 4
        $region32: #{tpu_custom_call.1} parent=11 // pred_fallthru
          _
        // Predicated region
        $region33: #{tpu_custom_call.1} parent=11 // pred_check
          %p489 = pneg %p226
        $region34: #{tpu_custom_call.1} parent=11 // pred_check_branch
          %491 = sbr.rel (%p489) target = $region36
        $region35: #{tpu_custom_call.1} parent=11 // pred_region
          _
        $region36: #{tpu_custom_call.1} parent=11 // pred_fallthru
          _
        // Predicated region
        $region37: #{tpu_custom_call.1} parent=11 // pred_check
          %p492 = pneg %p247
        $region38: #{tpu_custom_call.1} parent=11 // pred_check_branch
          %494 = sbr.rel (%p492) target = $region40
        $region39: #{tpu_custom_call.1} parent=11 // pred_region
          _
        $region40: #{tpu_custom_call.1} parent=11 // pred_fallthru
          _
        // Predicated region
        $region41: #{tpu_custom_call.1} parent=11 // pred_check
          %p495 = pneg %p268
        $region42: #{tpu_custom_call.1} parent=11 // pred_check_branch
          %497 = sbr.rel (%p495) target = $region44
        $region43: #{tpu_custom_call.1} parent=11 // pred_region
          _
        $region44: #{tpu_custom_call.1} parent=11 // pred_fallthru
          _
        // Predicated region
        $region45: #{tpu_custom_call.1} parent=11 // pred_check
          %p498 = pneg %p294
        $region46: #{tpu_custom_call.1} parent=11 // pred_check_branch
          %500 = sbr.rel (%p498) target = $region48
        $region47: #{tpu_custom_call.1} parent=11 // pred_region
          %502 = vsyncadd [#allocation8], 0
          %s503 = smul.addr %s39, 4
          %s504 = scalar_lea.hbm %s10, %s503
          %s505 = sshll.u32 %s504, 4
          %s506 = int_to_ptr.hbm [resolvable:$true] %s505
          %s507 = sshll.u32 [#allocation9], 4
          %s508 = int_to_ptr.vmem [resolvable:$true] %s507
          %513 = dma.hbm_to_vmem [thread:$0]  %s506, 256, %s508, [#allocation8], 64, 64, 4
        $region48: #{tpu_custom_call.1} parent=11 // pred_fallthru
          _
        // Predicated region
        $region49: #{tpu_custom_call.1} parent=11 // pred_check
          %p514 = pneg %p320
        $region50: #{tpu_custom_call.1} parent=11 // pred_check_branch
          %516 = sbr.rel (%p514) target = $region52
        $region51: #{tpu_custom_call.1} parent=11 // pred_region
          %p517 = scmp.lt.s32.totalorder %s39, 0
          %s518 = scalar_select %p517, %s39, 0
          %s519 = scalar_lea.vmem %s11, %s518
        $region52: #{tpu_custom_call.1} parent=11 // pred_fallthru
          _
        // Predicated region
        $region53: #{tpu_custom_call.1} parent=11 // pred_check
          %p520 = pneg %p346
        $region54: #{tpu_custom_call.1} parent=11 // pred_check_branch
          %522 = sbr.rel (%p520) target = $region56
        $region55: #{tpu_custom_call.1} parent=11 // pred_region
          %s523 = smul.u32 8, %s39
          %p524 = scmp.lt.s32.totalorder %s523, 7
          %s525 = scalar_select %p524, %s523, 7
          %s526 = smul.addr %s525, 4
          %s527 = scalar_lea.vmem %s12, %s526
          %s528 = smul.u32 8, %s39
        $region56: #{tpu_custom_call.1} parent=11 // pred_fallthru
          _
        // Predicated region
        $region57: #{tpu_custom_call.1} parent=11 // pred_check
          %p529 = pneg %p367
        $region58: #{tpu_custom_call.1} parent=11 // pred_check_branch
          %531 = sbr.rel (%p529) target = $region60
        $region59: #{tpu_custom_call.1} parent=11 // pred_region
          _
        $region60: #{tpu_custom_call.1} parent=11 // pred_fallthru
          _
        // Predicated region
        $region61: #{tpu_custom_call.1} parent=11 // pred_check
          %p532 = pneg %p388
        $region62: #{tpu_custom_call.1} parent=11 // pred_check_branch
          %534 = sbr.rel (%p532) target = $region64
        $region63: #{tpu_custom_call.1} parent=11 // pred_region
          _
        $region64: #{tpu_custom_call.1} parent=11 // pred_fallthru
          _
        // Predicated region
        $region65: #{tpu_custom_call.1} parent=11 // pred_check
          %p535 = pneg %p409
        $region66: #{tpu_custom_call.1} parent=11 // pred_check_branch
          %537 = sbr.rel (%p535) target = $region68
        $region67: #{tpu_custom_call.1} parent=11 // pred_region
          _
        $region68: #{tpu_custom_call.1} parent=11 // pred_fallthru
          _
      $region12: #{tpu_custom_call.1} parent=5 // pred_fallthru
        _
      %p538 = scmp.lt.s32.totalorder %s27, 2
      // Predicated region
      $region69: #{tpu_custom_call.1} parent=5 // pred_check
        %p539 = pneg %p538
      $region70: #{tpu_custom_call.1} parent=5 // pred_check_branch
        %541 = sbr.rel (%p539) target = $region72
      $region71: #{tpu_custom_call.1} parent=5 // pred_region
        // Predicated region
        $region73: #{tpu_custom_call.1} parent=71 // pred_check
          %p542 = pneg %p68
        $region74: #{tpu_custom_call.1} parent=71 // pred_check_branch
          %544 = sbr.rel (%p542) target = $region76
        $region75: #{tpu_custom_call.1} parent=71 // pred_region
          %p545 = scmp.lt.s32.totalorder %s34, 1
          %s546 = scalar_select %p545, %s34, 1
          %p547 = scmp.lt.s32.totalorder %s35, 0
          %s548 = scalar_select %p547, %s35, 0
          %s549 = sadd.s32 %s548, %s546
          %s550 = smul.addr %s549, 8
          %s551 = scalar_lea.vmem %s0, %s550
        $region76: #{tpu_custom_call.1} parent=71 // pred_fallthru
          _
        // Predicated region
        $region77: #{tpu_custom_call.1} parent=71 // pred_check
          %p552 = pneg %p94
        $region78: #{tpu_custom_call.1} parent=71 // pred_check_branch
          %554 = sbr.rel (%p552) target = $region80
        $region79: #{tpu_custom_call.1} parent=71 // pred_region
          %p555 = scmp.lt.s32.totalorder %s34, 1
          %s556 = scalar_select %p555, %s34, 1
          %s557 = smul.addr %s556, 8
          %s558 = scalar_lea.vmem %s1, %s557
        $region80: #{tpu_custom_call.1} parent=71 // pred_fallthru
          _
      $region72: #{tpu_custom_call.1} parent=5 // pred_fallthru
        _
      %p559 = scmp.le.s32.totalorder 1, %s27
      %p560 = scmp.lt.s32.totalorder %s27, 3
      %p561 = pnand %p559, %p560
      %p562 = pneg %p561
      // Predicated region
      $region81: #{tpu_custom_call.1} parent=5 // pred_check
        _
      $region82: #{tpu_custom_call.1} parent=5 // pred_check_branch
        %564 = sbr.rel (%p561) target = $region84
      $region83: #{tpu_custom_call.1} parent=5 // pred_region
        %s565 = ssub.s32 %s27, 1
        // Predicated region
        $region85: #{tpu_custom_call.1} parent=83 // pred_check
          %p566 = pneg %p163
        $region86: #{tpu_custom_call.1} parent=83 // pred_check_branch
          %568 = sbr.rel (%p566) target = $region88
        $region87: #{tpu_custom_call.1} parent=83 // pred_region
          %570 = dma.done [#allocation5], 256
        $region88: #{tpu_custom_call.1} parent=83 // pred_fallthru
          _
        // Predicated region
        $region89: #{tpu_custom_call.1} parent=83 // pred_check
          %p571 = pneg %p205
        $region90: #{tpu_custom_call.1} parent=83 // pred_check_branch
          %573 = sbr.rel (%p571) target = $region92
        $region91: #{tpu_custom_call.1} parent=83 // pred_region
          %575 = dma.done [#allocation8], 256
        $region92: #{tpu_custom_call.1} parent=83 // pred_fallthru
          _
        // Predicated region
        $region93: #{tpu_custom_call.1} parent=83 // pred_check
          %p576 = pneg %p294
        $region94: #{tpu_custom_call.1} parent=83 // pred_check_branch
          %578 = sbr.rel (%p576) target = $region96
        $region95: #{tpu_custom_call.1} parent=83 // pred_region
          %580 = dma.done [#allocation8], 256
        $region96: #{tpu_custom_call.1} parent=83 // pred_fallthru
          _
        %p581 = scmp.lt.s32.totalorder %s37, 1
        %s582 = scalar_select %p581, %s37, 1
        %p583 = scmp.lt.s32.totalorder %s38, 0
        %s584 = scalar_select %p583, %s38, 0
        %s585 = sadd.s32 %s584, %s582
        %s586 = smul.addr %s585, 8
        %s587 = scalar_lea.vmem %s0, %s586
        %p588 = pneg %p74
        %p589 = pneg %p71
        %p590 = scmp.lt.s32.totalorder %s37, 1
        %s591 = scalar_select %p590, %s37, 1
        %s592 = smul.addr %s591, 8
        %s593 = scalar_lea.vmem %s1, %s592
        %p594 = pneg %p100
        %p595 = pneg %p97
        %p596 = pneg %p121
        %p597 = pneg %p118
        %p598 = pneg %p142
        %p599 = pneg %p139
        %p600 = pneg %p163
        %p601 = pneg %p160
        %p602 = pneg %p184
        %p603 = pneg %p181
        %p604 = pneg %p205
        %p605 = pneg %p202
        %p606 = pneg %p226
        %p607 = pneg %p223
        %p608 = pneg %p247
        %p609 = pneg %p244
        %p610 = pneg %p268
        %p611 = pneg %p265
        %p612 = pneg %p294
        %p613 = pneg %p291
        %p614 = scmp.lt.s32.totalorder %s39, 0
        %s615 = scalar_select %p614, %s39, 0
        %s616 = scalar_lea.vmem %s11, %s615
        %p617 = pneg %p320
        %p618 = pneg %p317
        %s619 = smul.u32 8, %s39
        %p620 = scmp.lt.s32.totalorder %s619, 7
        %s621 = scalar_select %p620, %s619, 7
        %s622 = smul.addr %s621, 4
        %s623 = scalar_lea.vmem %s12, %s622
        %p624 = pneg %p346
        %p625 = pneg %p343
        %p626 = pneg %p367
        %p627 = pneg %p364
        %p628 = pneg %p388
        %p629 = pneg %p385
        %p630 = pneg %p409
        %p631 = pneg %p406
        %p632 = pneg %p437
        %p633 = pneg %p434
        %s634 = sand.u32 %s424, 1
        %s635 = scalar_lea.sflag [#allocation6], %s634
        %s636 = sand.u32 %s424, 1
        %s637 = smul.addr %s636, 8
        %s638 = scalar_lea.vmem [#allocation10], %s637
        %p639 = scmp.lt.s32.totalorder %s37, 1
        %s640 = scalar_select %p639, %s37, 1
        %p641 = scmp.lt.s32.totalorder %s38, 0
        %s642 = scalar_select %p641, %s38, 0
        %s643 = sadd.s32 %s642, %s640
        %s644 = smul.addr %s643, 8
        %s645 = scalar_lea.vmem %s0, %s644
        %p646 = scmp.lt.s32.totalorder %s37, 1
        %s647 = scalar_select %p646, %s37, 1
        %s648 = smul.addr %s647, 8
        %s649 = scalar_lea.vmem %s1, %s648
        %p650 = scmp.lt.s32.totalorder %s39, 0
        %s651 = scalar_select %p650, %s39, 0
        %s652 = scalar_lea.vmem %s11, %s651
        %s653 = smul.u32 8, %s39
        %p654 = scmp.lt.s32.totalorder %s653, 7
        %s655 = scalar_select %p654, %s653, 7
        %s656 = smul.addr %s655, 4
        %s657 = scalar_lea.vmem %s12, %s656
        %s658 = smul.u32 8, %s39
        %p660 = scmp.eq.s32.totalorder %s39, 0
        // Predicated region
        $region97: #{tpu_custom_call.1} parent=83 // pred_check
          %p661 = pneg %p660
        $region98: #{tpu_custom_call.1} parent=83 // pred_check_branch
          %663 = sbr.rel (%p661) target = $region100
        $region99: #{tpu_custom_call.1} parent=83 // pred_region
          %v664 = vld [vmem:[%s645] sm:$0xff]
          %v665 = vld [vmem:[%s649] sm:$0xff]
          %v666 = vpack.c.bf16 %v664, %v664
          %v667 = vld [vmem:[%s2] sm:$0xf]
          %v668 = vld [vmem:[%s2 + $0x4] sm:$0xf]
          %v669 = vld [vmem:[%s2 + $0x8] sm:$0xf]
          %v670 = vld [vmem:[%s2 + $0xc] sm:$0xf]
          %v671 = vld [vmem:[%s3] sm:$0x1]
          %v673 = vperm.slane %v671, 0
          %v679 = vunpack.c.l.b16 %v667
          %v680 = vunpack.c.l.b16 %v668
          %v681 = vunpack.c.l.b16 %v669
          %v682 = vunpack.c.l.b16 %v670
          %v683 = vpack.c.b16 %v680, %v679
          %v684 = vpack.c.b16 %v682, %v681
          %vm687 = vcmask 261120
          %v689 = vsel %vm687, %v666, 0
          %691 = vmatpush.bf16.msra.mxu0 0
          %692 = vmatpush.bf16.msra.mxu0 0
          %693 = vmatpush.bf16.msra.mxu0 0
          %694 = vmatpush.bf16.msra.mxu0 0
          %695 = vmatpush.bf16.msra.mxu0 0
          %696 = vmatpush.bf16.msra.mxu0 0
          %697 = vmatpush.bf16.msra.mxu0 %v684
          %698 = vmatpush.bf16.msra.mxu0 %v683
          %699 = vmatmul.bf16.gmra.mxu0 %v689
          %v700 = vpop.f32.mrf.mxu0
          %v701 = vadd.f32 %v673, %v700
          %v702 = vpop.f32.mrf.mxu0
          %703 = vdwg.mxu0
          %v704 = vpack.c.bf16 %v665, %v665
          %v705 = vld [vmem:[#allocation4] sm:$0xf]
          %v706 = vld [vmem:[#allocation4 + $0x4] sm:$0xf]
          %v707 = vld [vmem:[#allocation4 + $0x8] sm:$0xf]
          %v708 = vld [vmem:[#allocation4 + $0xc] sm:$0xf]
          %v709 = vld [vmem:[%s5] sm:$0x1]
          %v711 = vperm.slane %v709, 0
          %v717 = vunpack.c.l.b16 %v705
          %v718 = vunpack.c.l.b16 %v706
          %v719 = vunpack.c.l.b16 %v707
          %v720 = vunpack.c.l.b16 %v708
          %v721 = vpack.c.b16 %v718, %v717
          %v722 = vpack.c.b16 %v720, %v719
          %v726 = vsel %vm687, %v704, 0
          %728 = vmatpush.bf16.msra.mxu0 0
          %729 = vmatpush.bf16.msra.mxu0 0
          %730 = vmatpush.bf16.msra.mxu0 0
          %731 = vmatpush.bf16.msra.mxu0 0
          %732 = vmatpush.bf16.msra.mxu0 0
          %733 = vmatpush.bf16.msra.mxu0 0
          %734 = vmatpush.bf16.msra.mxu0 %v722
          %735 = vmatpush.bf16.msra.mxu0 %v721
          %736 = vmatmul.bf16.gmra.mxu0 %v726
          %v737 = vpop.f32.mrf.mxu0
          %v738 = vadd.f32 %v711, %v737
          %v739 = vpop.f32.mrf.mxu0
          %740 = vdwg.mxu0
          %741 = vxpose.xlu0.b32.start [1/16] %v738, 128
          %742 = vxpose.xlu0.b32.cont [2/16] 0.0, 128
          %743 = vxpose.xlu0.b32.cont [3/16] 0.0, 128
          %744 = vxpose.xlu0.b32.cont [4/16] 0.0, 128
          %745 = vxpose.xlu0.b32.cont [5/16] 0.0, 128
          %746 = vxpose.xlu0.b32.cont [6/16] 0.0, 128
          %747 = vxpose.xlu0.b32.cont [7/16] 0.0, 128
          %748 = vxpose.xlu0.b32.cont [8/16] 0.0, 128
          %749 = vxpose.xlu0.b32.cont [9/16] 0.0, 128
          %750 = vxpose.xlu0.b32.cont [10/16] 0.0, 128
          %751 = vxpose.xlu0.b32.cont [11/16] 0.0, 128
          %752 = vxpose.xlu0.b32.cont [12/16] 0.0, 128
          %753 = vxpose.xlu0.b32.cont [13/16] 0.0, 128
          %754 = vxpose.xlu0.b32.cont [14/16] 0.0, 128
          %755 = vxpose.xlu0.b32.cont [15/16] 0.0, 128
          %756 = vxpose.xlu0.b32.end [16/16] 0.0, 128
          %v757 = vpop.trf.xlu0
          %v758 = vpop.trf.xlu0
          %v759 = vpop.trf.xlu0
          %v760 = vpop.trf.xlu0
          %v761 = vpop.trf.xlu0
          %v762 = vpop.trf.xlu0
          %v763 = vpop.trf.xlu0
          %v764 = vpop.trf.xlu0
          %v765 = vpop.trf.xlu0
          %v766 = vpop.trf.xlu0
          %v767 = vpop.trf.xlu0
          %v768 = vpop.trf.xlu0
          %v769 = vpop.trf.xlu0
          %v770 = vpop.trf.xlu0
          %v771 = vpop.trf.xlu0
          %v772 = vpop.trf.xlu0
          %v773 = vpack.c.bf16 %v757, %v757
          %v774 = vpack.c.bf16 %v758, %v758
          %v775 = vpack.c.bf16 %v759, %v759
          %v776 = vpack.c.bf16 %v760, %v760
          %v777 = vpack.c.bf16 %v701, %v701
          %v778 = vpack.c.bf16 %v738, %v738
          %vm779 = vcmask 64512
          %v781 = vsel %vm779, %v777, 0
          %vm783 = vcmask 1043456
          %v785 = vsel %vm783, %v773, 0
          %787 = vmatpush.bf16.msra.mxu0 0
          %788 = vmatpush.bf16.msra.mxu0 0
          %789 = vmatpush.bf16.msra.mxu0 0
          %790 = vmatpush.bf16.msra.mxu0 0
          %791 = vmatpush.bf16.msra.mxu0 0
          %792 = vmatpush.bf16.msra.mxu0 0
          %793 = vmatpush.bf16.msra.mxu0 0
          %794 = vmatpush.bf16.msra.mxu0 %v785
          %795 = vmatmul.bf16.gmra.mxu0 %v781
          %v796 = vpop.f32.mrf.mxu0
          %v797 = vadd.f32 0.0, %v796
          %v798 = vpop.f32.mrf.mxu0
          %799 = vdwg.mxu0
          %v800 = vsel %vm779, %v797, -inf
          %801 = vmax.xlane.f32.xlu0 %v800
          %v802 = vpop.xlane.xlu0 %801
          %v803 = vsub.f32 %v797, %v802
          %v804 = vmul.f32 %v803, 1.442695
          %v805 = vpow.pop %v804
          %v806 = vsel %vm779, %v805, 0.0
          %807 = vadd.xlane.f32.xlu0 %v806
          %v808 = vpop.xlane.xlu0 %807
          %v809 = vrcp.pop %v808
          %v810 = vmul.f32 %v805, %v809
          %v811 = vpack.c.bf16 %v810, %v810
          %v813 = vunpack.c.l.b16 %v778
          %v814 = vpack.c.b16 %v813, %v813
          %815 = vrot.lane.b32.xlu0 %v814, 96
          %v816 = vpop.permute.xlu0 %815
          %v818 = vsel %vm779, %v811, 0
          %v821 = vsel %vm783, %v816, 0
          %823 = vmatpush.bf16.msra.mxu0 0
          %824 = vmatpush.bf16.msra.mxu0 0
          %825 = vmatpush.bf16.msra.mxu0 0
          %826 = vmatpush.bf16.msra.mxu0 0
          %827 = vmatpush.bf16.msra.mxu0 0
          %828 = vmatpush.bf16.msra.mxu0 0
          %829 = vmatpush.bf16.msra.mxu0 0
          %830 = vmatpush.bf16.msra.mxu0 %v821
          %831 = vmatmul.bf16.gmra.mxu0 %v818
          %v832 = vpop.f32.mrf.mxu0
          %v833 = vadd.f32 0.0, %v832
          %v834 = vpop.f32.mrf.mxu0
          %835 = vdwg.mxu0
          %v836 = vpack.c.bf16 %v833, %v833
          %v837 = vld [vmem:[#allocation7] sm:$0xf]
          %v839 = vunpack.c.l.b16 %v777
          %v840 = vpack.c.b16 %v839, %v839
          %841 = vrot.lane.b32.xlu0 %v840, 120
          %v842 = vpop.permute.xlu0 %841
          %v844 = vsel %vm779, %v842, 0
          %v847 = vsel %vm783, %v774, 0
          %849 = vmatpush.bf16.msra.mxu0 0
          %850 = vmatpush.bf16.msra.mxu0 0
          %851 = vmatpush.bf16.msra.mxu0 0
          %852 = vmatpush.bf16.msra.mxu0 0
          %853 = vmatpush.bf16.msra.mxu0 0
          %854 = vmatpush.bf16.msra.mxu0 0
          %855 = vmatpush.bf16.msra.mxu0 0
          %856 = vmatpush.bf16.msra.mxu0 %v847
          %857 = vmatmul.bf16.gmra.mxu0 %v844
          %v858 = vpop.f32.mrf.mxu0
          %v859 = vadd.f32 0.0, %v858
          %v860 = vpop.f32.mrf.mxu0
          %861 = vdwg.mxu0
          %v862 = vsel %vm779, %v859, -inf
          %863 = vmax.xlane.f32.xlu0 %v862
          %v864 = vpop.xlane.xlu0 %863
          %v865 = vsub.f32 %v859, %v864
          %v866 = vmul.f32 %v865, 1.442695
          %v867 = vpow.pop %v866
          %v868 = vsel %vm779, %v867, 0.0
          %869 = vadd.xlane.f32.xlu0 %v868
          %v870 = vpop.xlane.xlu0 %869
          %v871 = vrcp.pop %v870
          %v872 = vmul.f32 %v867, %v871
          %v873 = vpack.c.bf16 %v872, %v872
          %874 = vrot.lane.b32.xlu0 %v814, 88
          %v875 = vpop.permute.xlu0 %874
          %v877 = vsel %vm779, %v873, 0
          %v880 = vsel %vm783, %v875, 0
          %882 = vmatpush.bf16.msra.mxu0 0
          %883 = vmatpush.bf16.msra.mxu0 0
          %884 = vmatpush.bf16.msra.mxu0 0
          %885 = vmatpush.bf16.msra.mxu0 0
          %886 = vmatpush.bf16.msra.mxu0 0
          %887 = vmatpush.bf16.msra.mxu0 0
          %888 = vmatpush.bf16.msra.mxu0 0
          %889 = vmatpush.bf16.msra.mxu0 %v880
          %890 = vmatmul.bf16.gmra.mxu0 %v877
          %v891 = vpop.f32.mrf.mxu0
          %v892 = vadd.f32 0.0, %v891
          %v893 = vpop.f32.mrf.mxu0
          %894 = vdwg.mxu0
          %v895 = vpack.c.bf16 %v892, %v892
          %v896 = vld [vmem:[#allocation7 + $0x4] sm:$0xf]
          %v898 = vsel %vm779, %v895, 0
          %v901 = vsel %vm783, %v896, 0
          %903 = vmatpush.bf16.msra.mxu0 0
          %904 = vmatpush.bf16.msra.mxu0 0
          %905 = vmatpush.bf16.msra.mxu0 0
          %906 = vmatpush.bf16.msra.mxu0 0
          %907 = vmatpush.bf16.msra.mxu0 0
          %908 = vmatpush.bf16.msra.mxu0 0
          %909 = vmatpush.bf16.msra.mxu0 0
          %910 = vmatpush.bf16.msra.mxu0 %v901
          %911 = vmatmul.bf16.gmra.mxu0 %v898
          %v912 = vpop.f32.mrf.mxu0
          %v913 = vadd.f32 0.0, %v912
          %v914 = vpop.f32.mrf.mxu0
          %915 = vdwg.mxu0
          %v917 = vsel %vm779, %v836, 0
          %v920 = vsel %vm783, %v837, 0
          %922 = vmatpush.bf16.msra.mxu0 0
          %923 = vmatpush.bf16.msra.mxu0 0
          %924 = vmatpush.bf16.msra.mxu0 0
          %925 = vmatpush.bf16.msra.mxu0 0
          %926 = vmatpush.bf16.msra.mxu0 0
          %927 = vmatpush.bf16.msra.mxu0 0
          %928 = vmatpush.bf16.msra.mxu0 0
          %929 = vmatpush.bf16.msra.mxu0 %v920
          %930 = vmatmul.bf16.gmra.mxu0 %v917
          %v931 = vpop.f32.mrf.mxu0
          %v932 = vadd.f32 %v913, %v931
          %v933 = vpop.f32.mrf.mxu0
          %934 = vdwg.mxu0
          %935 = vrot.lane.b32.xlu0 %v840, 112
          %v936 = vpop.permute.xlu0 %935
          %v938 = vsel %vm779, %v936, 0
          %v941 = vsel %vm783, %v775, 0
          %943 = vmatpush.bf16.msra.mxu0 0
          %944 = vmatpush.bf16.msra.mxu0 0
          %945 = vmatpush.bf16.msra.mxu0 0
          %946 = vmatpush.bf16.msra.mxu0 0
          %947 = vmatpush.bf16.msra.mxu0 0
          %948 = vmatpush.bf16.msra.mxu0 0
          %949 = vmatpush.bf16.msra.mxu0 0
          %950 = vmatpush.bf16.msra.mxu0 %v941
          %951 = vmatmul.bf16.gmra.mxu0 %v938
          %v952 = vpop.f32.mrf.mxu0
          %v953 = vadd.f32 0.0, %v952
          %v954 = vpop.f32.mrf.mxu0
          %955 = vdwg.mxu0
          %v956 = vsel %vm779, %v953, -inf
          %957 = vmax.xlane.f32.xlu0 %v956
          %v958 = vpop.xlane.xlu0 %957
          %v959 = vsub.f32 %v953, %v958
          %v960 = vmul.f32 %v959, 1.442695
          %v961 = vpow.pop %v960
          %v962 = vsel %vm779, %v961, 0.0
          %963 = vadd.xlane.f32.xlu0 %v962
          %v964 = vpop.xlane.xlu0 %963
          %v965 = vrcp.pop %v964
          %v966 = vmul.f32 %v961, %v965
          %v967 = vpack.c.bf16 %v966, %v966
          %968 = vrot.lane.b32.xlu0 %v814, 80
          %v969 = vpop.permute.xlu0 %968
          %v971 = vsel %vm779, %v967, 0
          %v974 = vsel %vm783, %v969, 0
          %976 = vmatpush.bf16.msra.mxu0 0
          %977 = vmatpush.bf16.msra.mxu0 0
          %978 = vmatpush.bf16.msra.mxu0 0
          %979 = vmatpush.bf16.msra.mxu0 0
          %980 = vmatpush.bf16.msra.mxu0 0
          %981 = vmatpush.bf16.msra.mxu0 0
          %982 = vmatpush.bf16.msra.mxu0 0
          %983 = vmatpush.bf16.msra.mxu0 %v974
          %984 = vmatmul.bf16.gmra.mxu0 %v971
          %v985 = vpop.f32.mrf.mxu0
          %v986 = vadd.f32 0.0, %v985
          %v987 = vpop.f32.mrf.mxu0
          %988 = vdwg.mxu0
          %v989 = vpack.c.bf16 %v986, %v986
          %v990 = vld [vmem:[#allocation7 + $0x8] sm:$0xf]
          %v992 = vsel %vm779, %v989, 0
          %v995 = vsel %vm783, %v990, 0
          %997 = vmatpush.bf16.msra.mxu0 0
          %998 = vmatpush.bf16.msra.mxu0 0
          %999 = vmatpush.bf16.msra.mxu0 0
          %1000 = vmatpush.bf16.msra.mxu0 0
          %1001 = vmatpush.bf16.msra.mxu0 0
          %1002 = vmatpush.bf16.msra.mxu0 0
          %1003 = vmatpush.bf16.msra.mxu0 0
          %1004 = vmatpush.bf16.msra.mxu0 %v995
          %1005 = vmatmul.bf16.gmra.mxu0 %v992
          %v1006 = vpop.f32.mrf.mxu0
          %v1007 = vadd.f32 0.0, %v1006
          %v1008 = vpop.f32.mrf.mxu0
          %1009 = vdwg.mxu0
          %v1010 = vadd.f32 %v932, %v1007
          %1011 = vrot.lane.b32.xlu0 %v840, 104
          %v1012 = vpop.permute.xlu0 %1011
          %v1014 = vsel %vm779, %v1012, 0
          %v1017 = vsel %vm783, %v776, 0
          %1019 = vmatpush.bf16.msra.mxu0 0
          %1020 = vmatpush.bf16.msra.mxu0 0
          %1021 = vmatpush.bf16.msra.mxu0 0
          %1022 = vmatpush.bf16.msra.mxu0 0
          %1023 = vmatpush.bf16.msra.mxu0 0
          %1024 = vmatpush.bf16.msra.mxu0 0
          %1025 = vmatpush.bf16.msra.mxu0 0
          %1026 = vmatpush.bf16.msra.mxu0 %v1017
          %1027 = vmatmul.bf16.gmra.mxu0 %v1014
          %v1028 = vpop.f32.mrf.mxu0
          %v1029 = vadd.f32 0.0, %v1028
          %v1030 = vpop.f32.mrf.mxu0
          %1031 = vdwg.mxu0
          %v1032 = vsel %vm779, %v1029, -inf
          %1033 = vmax.xlane.f32.xlu0 %v1032
          %v1034 = vpop.xlane.xlu0 %1033
          %v1035 = vsub.f32 %v1029, %v1034
          %v1036 = vmul.f32 %v1035, 1.442695
          %v1037 = vpow.pop %v1036
          %v1038 = vsel %vm779, %v1037, 0.0
          %1039 = vadd.xlane.f32.xlu0 %v1038
          %v1040 = vpop.xlane.xlu0 %1039
          %v1041 = vrcp.pop %v1040
          %v1042 = vmul.f32 %v1037, %v1041
          %v1043 = vpack.c.bf16 %v1042, %v1042
          %1044 = vrot.lane.b32.xlu0 %v814, 72
          %v1045 = vpop.permute.xlu0 %1044
          %v1047 = vsel %vm779, %v1043, 0
          %v1050 = vsel %vm783, %v1045, 0
          %1052 = vmatpush.bf16.msra.mxu0 0
          %1053 = vmatpush.bf16.msra.mxu0 0
          %1054 = vmatpush.bf16.msra.mxu0 0
          %1055 = vmatpush.bf16.msra.mxu0 0
          %1056 = vmatpush.bf16.msra.mxu0 0
          %1057 = vmatpush.bf16.msra.mxu0 0
          %1058 = vmatpush.bf16.msra.mxu0 0
          %1059 = vmatpush.bf16.msra.mxu0 %v1050
          %1060 = vmatmul.bf16.gmra.mxu0 %v1047
          %v1061 = vpop.f32.mrf.mxu0
          %v1062 = vadd.f32 0.0, %v1061
          %v1063 = vpop.f32.mrf.mxu0
          %1064 = vdwg.mxu0
          %v1065 = vpack.c.bf16 %v1062, %v1062
          %v1066 = vld [vmem:[#allocation7 + $0xc] sm:$0xf]
          %v1068 = vsel %vm779, %v1065, 0
          %v1071 = vsel %vm783, %v1066, 0
          %1073 = vmatpush.bf16.msra.mxu0 0
          %1074 = vmatpush.bf16.msra.mxu0 0
          %1075 = vmatpush.bf16.msra.mxu0 0
          %1076 = vmatpush.bf16.msra.mxu0 0
          %1077 = vmatpush.bf16.msra.mxu0 0
          %1078 = vmatpush.bf16.msra.mxu0 0
          %1079 = vmatpush.bf16.msra.mxu0 0
          %1080 = vmatpush.bf16.msra.mxu0 %v1071
          %1081 = vmatmul.bf16.gmra.mxu0 %v1068
          %v1082 = vpop.f32.mrf.mxu0
          %v1083 = vadd.f32 0.0, %v1082
          %v1084 = vpop.f32.mrf.mxu0
          %1085 = vdwg.mxu0
          %v1086 = vadd.f32 %v1010, %v1083
          %v1087 = vld [vmem:[%s7] sm:$0x1]
          %v1089 = vperm.slane %v1087, 0
          %v1091 = vadd.f32 %v1086, %v1089
          %v1092 = vadd.f32 %v664, %v1091
          %v1093 = vld [vmem:[%s8] sm:$0x1]
          %v1094 = vld [vmem:[%s9] sm:$0x1]
          %v1095 = vsel %vm687, %v1092, 0.0
          %1096 = vadd.xlane.f32.xlu0 %v1095
          %v1097 = vpop.xlane.xlu0 %1096
          %v1098 = vrcp.pop 32.0
          %v1099 = vmul.f32 32.0, %v1098
          %v1100 = vsub.f32 1.0, %v1099
          %v1101 = vmul.f32 %v1098, %v1100
          %v1102 = vadd.f32 %v1098, %v1101
          %vm1103 = vweird.f32 %v1098
          %v1104 = vsel %vm1103, %v1098, %v1102
          %v1105 = vmul.f32 %v1097, %v1104
          %v1106 = vsub.f32 %v1092, %v1105
          %v1107 = vmul.f32 %v1106, %v1106
          %v1108 = vsel %vm687, %v1107, 0.0
          %1109 = vadd.xlane.f32.xlu0 %v1108
          %v1110 = vpop.xlane.xlu0 %1109
          %v1111 = vmul.f32 %v1110, %v1104
          %v1112 = vadd.f32 %v1111, 1e-05
          %v1113 = vrsqrt.pop %v1112
          %v1114 = vmul.f32 %v1113, %v1112
          %v1115 = vmul.f32 %v1114, %v1113
          %v1116 = vmul.f32 0.5, %v1115
          %v1117 = vsub.f32 1.5, %v1116
          %v1118 = vmul.f32 %v1113, %v1117
          %vm1119 = vweird.f32 %v1112
          %vm1120 = vweird.f32 %v1113
          %vm1121 = vmor %vm1119, %vm1120
          %v1122 = vsel %vm1121, %v1113, %v1118
          %v1123 = vmul.f32 %v1106, %v1122
          %v1125 = vperm.slane %v1093, 0
          %v1127 = vmul.f32 %v1123, %v1125
          %v1129 = vperm.slane %v1094, 0
          %v1131 = vadd.f32 %v1127, %v1129
          %1132 = vst.msk [vmem:[#allocation2] sm:$0xff] %vm687, %v1131
          %1133 = vst.msk [vmem:[#allocation3] sm:$0xff] %vm687, 0.0
        $region100: #{tpu_custom_call.1} parent=83 // pred_fallthru
          _
        %v1134 = vld [vmem:[#allocation2] sm:$0xff]
        %v1135 = vpack.c.bf16 %v1134, %v1134
        %v1136 = vld [vmem:[#allocation9] sm:$0xf]
        %v1137 = vld [vmem:[#allocation9 + $0x4] sm:$0xf]
        %v1138 = vld [vmem:[#allocation9 + $0x8] sm:$0xf]
        %v1139 = vld [vmem:[#allocation9 + $0xc] sm:$0xf]
        %v1140 = vld [vmem:[%s652] sm:$0x1]
        %v1142 = vperm.slane %v1140, 0
        %v1148 = vunpack.c.l.b16 %v1136
        %v1149 = vunpack.c.l.b16 %v1137
        %v1150 = vunpack.c.l.b16 %v1138
        %v1151 = vunpack.c.l.b16 %v1139
        %v1152 = vpack.c.b16 %v1149, %v1148
        %v1153 = vpack.c.b16 %v1151, %v1150
        %vm1156 = vcmask 261120
        %v1158 = vsel %vm1156, %v1135, 0
        %1160 = vmatpush.bf16.msra.mxu0 0
        %1161 = vmatpush.bf16.msra.mxu0 0
        %1162 = vmatpush.bf16.msra.mxu0 0
        %1163 = vmatpush.bf16.msra.mxu0 0
        %1164 = vmatpush.bf16.msra.mxu0 0
        %1165 = vmatpush.bf16.msra.mxu0 0
        %1166 = vmatpush.bf16.msra.mxu0 %v1153
        %1167 = vmatpush.bf16.msra.mxu0 %v1152
        %1168 = vmatmul.bf16.gmra.mxu0 %v1158
        %v1169 = vpop.f32.mrf.mxu0
        %v1170 = vadd.f32 %v1142, %v1169
        %v1171 = vpop.f32.mrf.mxu0
        %1172 = vdwg.mxu0
        %v1173 = vmax.f32 %v1170, 0.0
        %v1174 = vld [vmem:[#allocation3] sm:$0xff]
        %v1175 = vpack.c.bf16 %v1173, %v1173
        %v1176 = vld [vmem:[%s657] sm:$0xf]
        %v1177 = vld [vmem:[%s657 + $0x4] sm:$0xf]
        %v1178 = vld [vmem:[%s657 + $0x8] sm:$0xf]
        %v1179 = vld [vmem:[%s657 + $0xc] sm:$0xf]
        %v1180 = vld [vmem:[%s657 + $0x10] sm:$0xf]
        %v1181 = vld [vmem:[%s657 + $0x14] sm:$0xf]
        %v1182 = vld [vmem:[%s657 + $0x18] sm:$0xf]
        %v1183 = vld [vmem:[%s657 + $0x1c] sm:$0xf]
        %v1192 = vunpack.c.l.b16 %v1176
        %v1193 = vunpack.c.l.b16 %v1177
        %v1194 = vunpack.c.l.b16 %v1178
        %v1195 = vunpack.c.l.b16 %v1179
        %v1196 = vunpack.c.l.b16 %v1180
        %v1197 = vunpack.c.l.b16 %v1181
        %v1198 = vunpack.c.l.b16 %v1182
        %v1199 = vunpack.c.l.b16 %v1183
        %v1200 = vpack.c.b16 %v1193, %v1192
        %v1201 = vpack.c.b16 %v1195, %v1194
        %v1202 = vpack.c.b16 %v1197, %v1196
        %v1203 = vpack.c.b16 %v1199, %v1198
        %vm1208 = vcmask 523264
        %v1210 = vsel %vm1208, %v1175, 0
        %1212 = vmatpush.bf16.msra.mxu0 0
        %1213 = vmatpush.bf16.msra.mxu0 0
        %1214 = vmatpush.bf16.msra.mxu0 0
        %1215 = vmatpush.bf16.msra.mxu0 0
        %1216 = vmatpush.bf16.msra.mxu0 %v1203
        %1217 = vmatpush.bf16.msra.mxu0 %v1202
        %1218 = vmatpush.bf16.msra.mxu0 %v1201
        %1219 = vmatpush.bf16.msra.mxu0 %v1200
        %1220 = vmatmul.bf16.gmra.mxu0 %v1210
        %v1221 = vpop.f32.mrf.mxu0
        %v1222 = vadd.f32 0.0, %v1221
        %v1223 = vpop.f32.mrf.mxu0
        %1224 = vdwg.mxu0
        %v1225 = vadd.f32 %v1174, %v1222
        %1226 = vst.msk [vmem:[#allocation3] sm:$0xff] %vm1156, %v1225
        // Predicated region
        $region101: #{tpu_custom_call.1} parent=83 // pred_check
          %p1227 = pneg %p660
        $region102: #{tpu_custom_call.1} parent=83 // pred_check_branch
          %1229 = sbr.rel (%p1227) target = $region104
        $region103: #{tpu_custom_call.1} parent=83 // pred_region
          %v1230 = vld [vmem:[#allocation3] sm:$0xff]
          %v1231 = vld [vmem:[%s13] sm:$0x1]
          %v1233 = vperm.slane %v1231, 0
          %v1235 = vadd.f32 %v1230, %v1233
          %v1236 = vld [vmem:[#allocation2] sm:$0xff]
          %v1237 = vadd.f32 %v1236, %v1235
          %v1238 = vld [vmem:[%s14] sm:$0x1]
          %v1239 = vld [vmem:[%s15] sm:$0x1]
          %v1240 = vsel %vm1156, %v1237, 0.0
          %1241 = vadd.xlane.f32.xlu0 %v1240
          %v1242 = vpop.xlane.xlu0 %1241
          %v1243 = vrcp.pop 32.0
          %v1244 = vmul.f32 32.0, %v1243
          %v1245 = vsub.f32 1.0, %v1244
          %v1246 = vmul.f32 %v1243, %v1245
          %v1247 = vadd.f32 %v1243, %v1246
          %vm1248 = vweird.f32 %v1243
          %v1249 = vsel %vm1248, %v1243, %v1247
          %v1250 = vmul.f32 %v1242, %v1249
          %v1251 = vsub.f32 %v1237, %v1250
          %v1252 = vmul.f32 %v1251, %v1251
          %v1253 = vsel %vm1156, %v1252, 0.0
          %1254 = vadd.xlane.f32.xlu0 %v1253
          %v1255 = vpop.xlane.xlu0 %1254
          %v1256 = vmul.f32 %v1255, %v1249
          %v1257 = vadd.f32 %v1256, 1e-05
          %v1258 = vrsqrt.pop %v1257
          %v1259 = vmul.f32 %v1258, %v1257
          %v1260 = vmul.f32 %v1259, %v1258
          %v1261 = vmul.f32 0.5, %v1260
          %v1262 = vsub.f32 1.5, %v1261
          %v1263 = vmul.f32 %v1258, %v1262
          %vm1264 = vweird.f32 %v1257
          %vm1265 = vweird.f32 %v1258
          %vm1266 = vmor %vm1264, %vm1265
          %v1267 = vsel %vm1266, %v1258, %v1263
          %v1268 = vmul.f32 %v1251, %v1267
          %v1270 = vperm.slane %v1238, 0
          %v1272 = vmul.f32 %v1268, %v1270
          %v1274 = vperm.slane %v1239, 0
          %v1276 = vadd.f32 %v1272, %v1274
          %1277 = vst.msk [vmem:[%s638] sm:$0xff] %vm1156, %v1276
        $region104: #{tpu_custom_call.1} parent=83 // pred_fallthru
          _
        %s1278 = sand.u32 %s424, 1
        %s1279 = scalar_lea.sflag [#allocation6], %s1278
        %s1280 = sand.u32 %s424, 1
        %s1281 = smul.addr %s1280, 8
        %s1282 = scalar_lea.vmem [#allocation10], %s1281
        // Predicated region
        $region105: #{tpu_custom_call.1} parent=83 // pred_check
          %p1283 = pneg %p434
        $region106: #{tpu_custom_call.1} parent=83 // pred_check_branch
          %1285 = sbr.rel (%p1283) target = $region108
        $region107: #{tpu_custom_call.1} parent=83 // pred_region
          %1287 = vsyncadd %s1279, 0
          %s1288 = sadd.s32 %s38, %s37
          %s1289 = smul.addr %s1288, 8
          %s1290 = scalar_lea.hbm %s16, %s1289
          %s1292 = sshll.u32 %s1282, 4
          %s1293 = int_to_ptr.vmem [resolvable:$true] %s1292
          %s1294 = sshll.u32 %s1290, 4
          %s1295 = int_to_ptr.hbm [resolvable:$true] %s1294
          %1297 = dma.vmem_to_hbm [thread:$0]  %s1293, 128, %s1295, %s1279
        $region108: #{tpu_custom_call.1} parent=83 // pred_fallthru
          _
      $region84: #{tpu_custom_call.1} parent=5 // pred_fallthru
        _
      %p1298 = scmp.le.s32.totalorder 2, %s27
      // Predicated region
      $region109: #{tpu_custom_call.1} parent=5 // pred_check
        %p1299 = pneg %p1298
      $region110: #{tpu_custom_call.1} parent=5 // pred_check_branch
        %1301 = sbr.rel (%p1299) target = $region112
      $region111: #{tpu_custom_call.1} parent=5 // pred_region
        %s1302 = ssub.s32 %s27, 2
        // Predicated region
        $region113: #{tpu_custom_call.1} parent=111 // pred_check
          %p1303 = pneg %p440
        $region114: #{tpu_custom_call.1} parent=111 // pred_check_branch
          %1305 = sbr.rel (%p1303) target = $region116
        $region115: #{tpu_custom_call.1} parent=111 // pred_region
          %s1306 = sand.u32 %s425, 1
          %s1307 = scalar_lea.sflag [#allocation6], %s1306
          %s1308 = sand.u32 %s425, 1
          %s1309 = smul.addr %s1308, 8
          %s1310 = scalar_lea.vmem [#allocation10], %s1309
          %1312 = dma.done %s1307, 128
        $region116: #{tpu_custom_call.1} parent=111 // pred_fallthru
          _
      $region112: #{tpu_custom_call.1} parent=5 // pred_fallthru
        _
    $region6: #{tpu_custom_call.1} parent=1 // loop_footer
      %s31 = sadd.s32 1, %s27
    $region7: #{tpu_custom_call.1} parent=1 // loop_footer_branch
      %26 = sbr.rel target = $region3
    $region8: #{tpu_custom_call.1} parent=1 // loop_exit
      _
    %1313 = vsyncpa [#allocation5], 1
    %s1314 = scalar_lea.sflag [#allocation5], 1
    %1315 = vsyncpa %s1314, 1
    %1316 = vsyncpa [#allocation8], 1
    %1317 = vsyncpa [#allocation6], 1
    %s1318 = scalar_lea.sflag [#allocation6], 1
    %1319 = vsyncpa %s1318, 1

// kernel: tpu_custom_call.1
$region0: #{tpu_custom_call.1}
  #allocation0 [shape = 'u32[]', space=smem, size = 0x4, offset = 0x4, fixed_abs, tag = 'smem constant byte address 0x4 - core index']
  #allocation1 [shape = 'u32[72,128]{1,0:T(1,128)}', space=vmem, size = 0x9000, scoped, tag = 'internal scratch']
  #allocation2 [shape = 'f32[8,32]{1,0:T(8,128)}', space=vmem, size = 0x1000, scoped, tag = 'scratch operand']
  #allocation3 [shape = 'f32[8,32]{1,0:T(8,128)}', space=vmem, size = 0x1000, scoped, tag = 'scratch operand']
  %s0 = inlined_call_operand.vmem [shape: f32[2,8,32], index: 0, kind: input, shape index: {}]
  %s1 = inlined_call_operand.vmem [shape: f32[2,8,32], index: 1, kind: input, shape index: {}]
  %s2 = inlined_call_operand.vmem [shape: bf16[32,32], index: 2, kind: input, shape index: {}]
  %s3 = inlined_call_operand.vmem [shape: f32[1,32], index: 3, kind: input, shape index: {}]
  %s4 = inlined_call_operand.hbm [shape: bf16[32,64], index: 4, kind: input, shape index: {}]
  %s5 = inlined_call_operand.vmem [shape: f32[1,64], index: 5, kind: input, shape index: {}]
  %s6 = inlined_call_operand.hbm [shape: bf16[32,32], index: 6, kind: input, shape index: {}]
  %s7 = inlined_call_operand.vmem [shape: f32[1,32], index: 7, kind: input, shape index: {}]
  %s8 = inlined_call_operand.vmem [shape: f32[1,32], index: 8, kind: input, shape index: {}]
  %s9 = inlined_call_operand.vmem [shape: f32[1,32], index: 9, kind: input, shape index: {}]
  %s10 = inlined_call_operand.hbm [shape: bf16[32,64], index: 10, kind: input, shape index: {}]
  %s11 = inlined_call_operand.vmem [shape: f32[1,64], index: 11, kind: input, shape index: {}]
  %s12 = inlined_call_operand.vmem [shape: bf16[64,32], index: 12, kind: input, shape index: {}]
  %s13 = inlined_call_operand.vmem [shape: f32[1,32], index: 13, kind: input, shape index: {}]
  %s14 = inlined_call_operand.vmem [shape: f32[1,32], index: 14, kind: input, shape index: {}]
  %s15 = inlined_call_operand.vmem [shape: f32[1,32], index: 15, kind: input, shape index: {}]
  %s16 = inlined_call_operand.hbm [shape: f32[2,8,32], index: 16, kind: output, shape index: {}]
  %s17 = sld [smem:[#allocation0]]
  $region117: #{tpu_custom_call.1} parent=0
    _
  %s19 = ssub.s32 1, %s17
  %s20 = scalar_select 0, %s19, %s17
  $region1: #{tpu_custom_call.1} parent=0
    #allocation4 [shape = 'u8[8192]{0}', space=vmem, size = 0x2000, scoped, tag = 'input window, operand 4, single buffered']
    #allocation5 [shape = 's32[2]{0}', space=sflag, size = 0x8, scoped, tag = 'scoped memory for tpu_custom_call.1']
    #allocation6 [shape = 's32[2]{0}', space=sflag, size = 0x8, scoped, tag = 'scoped memory for tpu_custom_call.1']
    #allocation7 [shape = 'u8[8192]{0}', space=vmem, size = 0x2000, scoped, tag = 'input window, operand 6, single buffered']
    #allocation8 [shape = 's32[1]{0}', space=sflag, size = 0x4, scoped, tag = 'scoped memory for tpu_custom_call.1']
    #allocation9 [shape = 'u8[8192]{0}', space=vmem, size = 0x2000, scoped, tag = 'input window, operand 10, single buffered']
    #allocation10 [shape = 'u8[8192]{0}', space=vmem, size = 0x2000, scoped, tag = 'output window, operand 0']
    %21 = vsyncpa [#allocation5], 0
    %22 = vsyncpa [#allocation8], 0
    %23 = vsyncpa [#allocation6], 0
    %s24 = scalar_lea.sflag [#allocation6], 1
    %25 = vsyncpa %s24, 0
    loop: start=0, step=1, limit=4
    $region2: #{tpu_custom_call.1} parent=1 // loop_pre_header
      _
    $region3: #{tpu_custom_call.1} parent=1 // loop_header
      %s27 = sphi 0, %s31
      %p28 = scmp.ge.s32.totalorder %s27, 4
      %s34 = sphi 0, %s53
      %s35 = sphi 0, %s49
      %s36 = sphi 0, %s45
      %s37 = sphi 0, %s34
      %s38 = sphi 0, %s35
      %s39 = sphi 0, %s36
      %s40 = sphi 0, %s37
      %s41 = sphi 0, %s38
      %s42 = sphi 0, %s39
      %s58 = sphi 0, %s60
      %s61 = sphi 0, %s58
      %s62 = sphi 0, %s61
      %s78 = sphi 0, %s62
      %s84 = sphi 0, %s86
      %s87 = sphi 0, %s84
      %s88 = sphi 0, %s87
      %s104 = sphi 0, %s88
      %s108 = sphi 0, %s108
      %s110 = sphi 0, %s108
      %s111 = sphi 0, %s110
      %s125 = sphi 0, %s111
      %s129 = sphi 0, %s129
      %s131 = sphi 0, %s129
      %s132 = sphi 0, %s131
      %s146 = sphi 0, %s132
      %s150 = sphi 0, %s150
      %s152 = sphi 0, %s150
      %s153 = sphi 0, %s152
      %s167 = sphi 0, %s153
      %s171 = sphi 0, %s171
      %s173 = sphi 0, %s171
      %s174 = sphi 0, %s173
      %s188 = sphi 0, %s174
      %s192 = sphi 0, %s192
      %s194 = sphi 0, %s192
      %s195 = sphi 0, %s194
      %s209 = sphi 0, %s195
      %s213 = sphi 0, %s213
      %s215 = sphi 0, %s213
      %s216 = sphi 0, %s215
      %s230 = sphi 0, %s216
      %s234 = sphi 0, %s234
      %s236 = sphi 0, %s234
      %s237 = sphi 0, %s236
      %s251 = sphi 0, %s237
      %s255 = sphi 0, %s255
      %s257 = sphi 0, %s255
      %s258 = sphi 0, %s257
      %s272 = sphi 0, %s258
      %s278 = sphi 0, %s280
      %s281 = sphi 0, %s278
      %s282 = sphi 0, %s281
      %s298 = sphi 0, %s282
      %s304 = sphi 0, %s306
      %s307 = sphi 0, %s304
      %s308 = sphi 0, %s307
      %s324 = sphi 0, %s308
      %s330 = sphi 0, %s332
      %s333 = sphi 0, %s330
      %s334 = sphi 0, %s333
      %s350 = sphi 0, %s334
      %s354 = sphi 0, %s354
      %s356 = sphi 0, %s354
      %s357 = sphi 0, %s356
      %s371 = sphi 0, %s357
      %s375 = sphi 0, %s375
      %s377 = sphi 0, %s375
      %s378 = sphi 0, %s377
      %s392 = sphi 0, %s378
      %s396 = sphi 0, %s396
      %s398 = sphi 0, %s396
      %s399 = sphi 0, %s398
      %s413 = sphi 0, %s399
      %s421 = sphi 0, %s423
      %s424 = sphi 0, %s421
      %s425 = sphi 0, %s424
      %s441 = sphi 0, %s425
    $region4: #{tpu_custom_call.1} parent=1 // loop_header_branch
      %30 = sbr.rel (%p28) target = $region8
    $region5: #{tpu_custom_call.1} parent=1 // loop_body
      %s32 = ssub.s32 %s27, 1
      %s33 = ssub.s32 %s27, 2
      %s43 = sadd.s32 1, %s36
      %p44 = scmp.ge.s32.totalorder %s43, 1
      %s45 = scalar_select %p44, 0, %s43
      %s46 = sadd.s32 1, %s35
      %s47 = scalar_select %p44, %s46, %s35
      %p48 = scmp.ge.s32.totalorder %s47, 1
      %s49 = scalar_select %p48, 0, %s47
      %s50 = sadd.s32 1, %s34
      %s51 = scalar_select %p48, %s50, %s34
      %p52 = scmp.ge.s32.totalorder %s51, 2
      %s53 = scalar_select %p52, 0, %s51
      %s54 = ssub.s32 %s34, %s53
      %s55 = ssub.s32 %s35, %s49
      %s56 = sor.u32 %s54, %s55
      %p57 = scmp.eq.s32.totalorder %s56, 0
      %s59 = sadd.s32 %s58, 1
      %s60 = scalar_select %p57, %s58, %s59
      %p63 = pneg %p57
      %p64 = scmp.eq.s32.totalorder %s27, 1
      %p65 = por %p63, %p64
      %p66 = scmp.ne.s32.totalorder %s58, %s61
      %p67 = scmp.eq.s32.totalorder %s27, 0
      %p68 = por %p66, %p67
      %p69 = scmp.ne.s32.totalorder %s58, %s61
      %p70 = scmp.eq.s32.totalorder %s32, 1
      %p71 = por %p69, %p70
      %p72 = scmp.ne.s32.totalorder %s61, %s62
      %p73 = scmp.eq.s32.totalorder %s32, 0
      %p74 = por %p72, %p73
      %p75 = scmp.ne.s32.totalorder %s61, %s62
      %p76 = scmp.eq.s32.totalorder %s33, 1
      %p77 = por %p75, %p76
      %p79 = scmp.ne.s32.totalorder %s62, %s78
      %p80 = scmp.eq.s32.totalorder %s33, 0
      %p81 = por %p79, %p80
      %s82 = ssub.s32 %s34, %s53
      %p83 = scmp.eq.s32.totalorder %s82, 0
      %s85 = sadd.s32 %s84, 1
      %s86 = scalar_select %p83, %s84, %s85
      %p89 = pneg %p83
      %p90 = scmp.eq.s32.totalorder %s27, 1
      %p91 = por %p89, %p90
      %p92 = scmp.ne.s32.totalorder %s84, %s87
      %p93 = scmp.eq.s32.totalorder %s27, 0
      %p94 = por %p92, %p93
      %p95 = scmp.ne.s32.totalorder %s84, %s87
      %p96 = scmp.eq.s32.totalorder %s32, 1
      %p97 = por %p95, %p96
      %p98 = scmp.ne.s32.totalorder %s87, %s88
      %p99 = scmp.eq.s32.totalorder %s32, 0
      %p100 = por %p98, %p99
      %p101 = scmp.ne.s32.totalorder %s87, %s88
      %p102 = scmp.eq.s32.totalorder %s33, 1
      %p103 = por %p101, %p102
      %p105 = scmp.ne.s32.totalorder %s88, %s104
      %p106 = scmp.eq.s32.totalorder %s33, 0
      %p107 = por %p105, %p106
      %s109 = sadd.s32 %s108, 1
      %p112 = scmp.eq.s32.totalorder %s27, 1
      %p113 = scmp.ne.s32.totalorder %s108, %s110
      %p114 = scmp.eq.s32.totalorder %s27, 0
      %p115 = por %p113, %p114
      %p116 = scmp.ne.s32.totalorder %s108, %s110
      %p117 = scmp.eq.s32.totalorder %s32, 1
      %p118 = por %p116, %p117
      %p119 = scmp.ne.s32.totalorder %s110, %s111
      %p120 = scmp.eq.s32.totalorder %s32, 0
      %p121 = por %p119, %p120
      %p122 = scmp.ne.s32.totalorder %s110, %s111
      %p123 = scmp.eq.s32.totalorder %s33, 1
      %p124 = por %p122, %p123
      %p126 = scmp.ne.s32.totalorder %s111, %s125
      %p127 = scmp.eq.s32.totalorder %s33, 0
      %p128 = por %p126, %p127
      %s130 = sadd.s32 %s129, 1
      %p133 = scmp.eq.s32.totalorder %s27, 1
      %p134 = scmp.ne.s32.totalorder %s129, %s131
      %p135 = scmp.eq.s32.totalorder %s27, 0
      %p136 = por %p134, %p135
      %p137 = scmp.ne.s32.totalorder %s129, %s131
      %p138 = scmp.eq.s32.totalorder %s32, 1
      %p139 = por %p137, %p138
      %p140 = scmp.ne.s32.totalorder %s131, %s132
      %p141 = scmp.eq.s32.totalorder %s32, 0
      %p142 = por %p140, %p141
      %p143 = scmp.ne.s32.totalorder %s131, %s132
      %p144 = scmp.eq.s32.totalorder %s33, 1
      %p145 = por %p143, %p144
      %p147 = scmp.ne.s32.totalorder %s132, %s146
      %p148 = scmp.eq.s32.totalorder %s33, 0
      %p149 = por %p147, %p148
      %s151 = sadd.s32 %s150, 1
      %p154 = scmp.eq.s32.totalorder %s27, 1
      %p155 = scmp.ne.s32.totalorder %s150, %s152
      %p156 = scmp.eq.s32.totalorder %s27, 0
      %p157 = por %p155, %p156
      %p158 = scmp.ne.s32.totalorder %s150, %s152
      %p159 = scmp.eq.s32.totalorder %s32, 1
      %p160 = por %p158, %p159
      %p161 = scmp.ne.s32.totalorder %s152, %s153
      %p162 = scmp.eq.s32.totalorder %s32, 0
      %p163 = por %p161, %p162
      %p164 = scmp.ne.s32.totalorder %s152, %s153
      %p165 = scmp.eq.s32.totalorder %s33, 1
      %p166 = por %p164, %p165
      %p168 = scmp.ne.s32.totalorder %s153, %s167
      %p169 = scmp.eq.s32.totalorder %s33, 0
      %p170 = por %p168, %p169
      %s172 = sadd.s32 %s171, 1
      %p175 = scmp.eq.s32.totalorder %s27, 1
      %p176 = scmp.ne.s32.totalorder %s171, %s173
      %p177 = scmp.eq.s32.totalorder %s27, 0
      %p178 = por %p176, %p177
      %p179 = scmp.ne.s32.totalorder %s171, %s173
      %p180 = scmp.eq.s32.totalorder %s32, 1
      %p181 = por %p179, %p180
      %p182 = scmp.ne.s32.totalorder %s173, %s174
      %p183 = scmp.eq.s32.totalorder %s32, 0
      %p184 = por %p182, %p183
      %p185 = scmp.ne.s32.totalorder %s173, %s174
      %p186 = scmp.eq.s32.totalorder %s33, 1
      %p187 = por %p185, %p186
      %p189 = scmp.ne.s32.totalorder %s174, %s188
      %p190 = scmp.eq.s32.totalorder %s33, 0
      %p191 = por %p189, %p190
      %s193 = sadd.s32 %s192, 1
      %p196 = scmp.eq.s32.totalorder %s27, 1
      %p197 = scmp.ne.s32.totalorder %s192, %s194
      %p198 = scmp.eq.s32.totalorder %s27, 0
      %p199 = por %p197, %p198
      %p200 = scmp.ne.s32.totalorder %s192, %s194
      %p201 = scmp.eq.s32.totalorder %s32, 1
      %p202 = por %p200, %p201
      %p203 = scmp.ne.s32.totalorder %s194, %s195
      %p204 = scmp.eq.s32.totalorder %s32, 0
      %p205 = por %p203, %p204
      %p206 = scmp.ne.s32.totalorder %s194, %s195
      %p207 = scmp.eq.s32.totalorder %s33, 1
      %p208 = por %p206, %p207
      %p210 = scmp.ne.s32.totalorder %s195, %s209
      %p211 = scmp.eq.s32.totalorder %s33, 0
      %p212 = por %p210, %p211
      %s214 = sadd.s32 %s213, 1
      %p217 = scmp.eq.s32.totalorder %s27, 1
      %p218 = scmp.ne.s32.totalorder %s213, %s215
      %p219 = scmp.eq.s32.totalorder %s27, 0
      %p220 = por %p218, %p219
      %p221 = scmp.ne.s32.totalorder %s213, %s215
      %p222 = scmp.eq.s32.totalorder %s32, 1
      %p223 = por %p221, %p222
      %p224 = scmp.ne.s32.totalorder %s215, %s216
      %p225 = scmp.eq.s32.totalorder %s32, 0
      %p226 = por %p224, %p225
      %p227 = scmp.ne.s32.totalorder %s215, %s216
      %p228 = scmp.eq.s32.totalorder %s33, 1
      %p229 = por %p227, %p228
      %p231 = scmp.ne.s32.totalorder %s216, %s230
      %p232 = scmp.eq.s32.totalorder %s33, 0
      %p233 = por %p231, %p232
      %s235 = sadd.s32 %s234, 1
      %p238 = scmp.eq.s32.totalorder %s27, 1
      %p239 = scmp.ne.s32.totalorder %s234, %s236
      %p240 = scmp.eq.s32.totalorder %s27, 0
      %p241 = por %p239, %p240
      %p242 = scmp.ne.s32.totalorder %s234, %s236
      %p243 = scmp.eq.s32.totalorder %s32, 1
      %p244 = por %p242, %p243
      %p245 = scmp.ne.s32.totalorder %s236, %s237
      %p246 = scmp.eq.s32.totalorder %s32, 0
      %p247 = por %p245, %p246
      %p248 = scmp.ne.s32.totalorder %s236, %s237
      %p249 = scmp.eq.s32.totalorder %s33, 1
      %p250 = por %p248, %p249
      %p252 = scmp.ne.s32.totalorder %s237, %s251
      %p253 = scmp.eq.s32.totalorder %s33, 0
      %p254 = por %p252, %p253
      %s256 = sadd.s32 %s255, 1
      %p259 = scmp.eq.s32.totalorder %s27, 1
      %p260 = scmp.ne.s32.totalorder %s255, %s257
      %p261 = scmp.eq.s32.totalorder %s27, 0
      %p262 = por %p260, %p261
      %p263 = scmp.ne.s32.totalorder %s255, %s257
      %p264 = scmp.eq.s32.totalorder %s32, 1
      %p265 = por %p263, %p264
      %p266 = scmp.ne.s32.totalorder %s257, %s258
      %p267 = scmp.eq.s32.totalorder %s32, 0
      %p268 = por %p266, %p267
      %p269 = scmp.ne.s32.totalorder %s257, %s258
      %p270 = scmp.eq.s32.totalorder %s33, 1
      %p271 = por %p269, %p270
      %p273 = scmp.ne.s32.totalorder %s258, %s272
      %p274 = scmp.eq.s32.totalorder %s33, 0
      %p275 = por %p273, %p274
      %s276 = ssub.s32 %s36, %s45
      %p277 = scmp.eq.s32.totalorder %s276, 0
      %s279 = sadd.s32 %s278, 1
      %s280 = scalar_select %p277, %s278, %s279
      %p283 = pneg %p277
      %p284 = scmp.eq.s32.totalorder %s27, 1
      %p285 = por %p283, %p284
      %p286 = scmp.ne.s32.totalorder %s278, %s281
      %p287 = scmp.eq.s32.totalorder %s27, 0
      %p288 = por %p286, %p287
      %p289 = scmp.ne.s32.totalorder %s278, %s281
      %p290 = scmp.eq.s32.totalorder %s32, 1
      %p291 = por %p289, %p290
      %p292 = scmp.ne.s32.totalorder %s281, %s282
      %p293 = scmp.eq.s32.totalorder %s32, 0
      %p294 = por %p292, %p293
      %p295 = scmp.ne.s32.totalorder %s281, %s282
      %p296 = scmp.eq.s32.totalorder %s33, 1
      %p297 = por %p295, %p296
      %p299 = scmp.ne.s32.totalorder %s282, %s298
      %p300 = scmp.eq.s32.totalorder %s33, 0
      %p301 = por %p299, %p300
      %s302 = ssub.s32 %s36, %s45
      %p303 = scmp.eq.s32.totalorder %s302, 0
      %s305 = sadd.s32 %s304, 1
      %s306 = scalar_select %p303, %s304, %s305
      %p309 = pneg %p303
      %p310 = scmp.eq.s32.totalorder %s27, 1
      %p311 = por %p309, %p310
      %p312 = scmp.ne.s32.totalorder %s304, %s307
      %p313 = scmp.eq.s32.totalorder %s27, 0
      %p314 = por %p312, %p313
      %p315 = scmp.ne.s32.totalorder %s304, %s307
      %p316 = scmp.eq.s32.totalorder %s32, 1
      %p317 = por %p315, %p316
      %p318 = scmp.ne.s32.totalorder %s307, %s308
      %p319 = scmp.eq.s32.totalorder %s32, 0
      %p320 = por %p318, %p319
      %p321 = scmp.ne.s32.totalorder %s307, %s308
      %p322 = scmp.eq.s32.totalorder %s33, 1
      %p323 = por %p321, %p322
      %p325 = scmp.ne.s32.totalorder %s308, %s324
      %p326 = scmp.eq.s32.totalorder %s33, 0
      %p327 = por %p325, %p326
      %s328 = ssub.s32 %s36, %s45
      %p329 = scmp.eq.s32.totalorder %s328, 0
      %s331 = sadd.s32 %s330, 1
      %s332 = scalar_select %p329, %s330, %s331
      %p335 = pneg %p329
      %p336 = scmp.eq.s32.totalorder %s27, 1
      %p337 = por %p335, %p336
      %p338 = scmp.ne.s32.totalorder %s330, %s333
      %p339 = scmp.eq.s32.totalorder %s27, 0
      %p340 = por %p338, %p339
      %p341 = scmp.ne.s32.totalorder %s330, %s333
      %p342 = scmp.eq.s32.totalorder %s32, 1
      %p343 = por %p341, %p342
      %p344 = scmp.ne.s32.totalorder %s333, %s334
      %p345 = scmp.eq.s32.totalorder %s32, 0
      %p346 = por %p344, %p345
      %p347 = scmp.ne.s32.totalorder %s333, %s334
      %p348 = scmp.eq.s32.totalorder %s33, 1
      %p349 = por %p347, %p348
      %p351 = scmp.ne.s32.totalorder %s334, %s350
      %p352 = scmp.eq.s32.totalorder %s33, 0
      %p353 = por %p351, %p352
      %s355 = sadd.s32 %s354, 1
      %p358 = scmp.eq.s32.totalorder %s27, 1
      %p359 = scmp.ne.s32.totalorder %s354, %s356
      %p360 = scmp.eq.s32.totalorder %s27, 0
      %p361 = por %p359, %p360
      %p362 = scmp.ne.s32.totalorder %s354, %s356
      %p363 = scmp.eq.s32.totalorder %s32, 1
      %p364 = por %p362, %p363
      %p365 = scmp.ne.s32.totalorder %s356, %s357
      %p366 = scmp.eq.s32.totalorder %s32, 0
      %p367 = por %p365, %p366
      %p368 = scmp.ne.s32.totalorder %s356, %s357
      %p369 = scmp.eq.s32.totalorder %s33, 1
      %p370 = por %p368, %p369
      %p372 = scmp.ne.s32.totalorder %s357, %s371
      %p373 = scmp.eq.s32.totalorder %s33, 0
      %p374 = por %p372, %p373
      %s376 = sadd.s32 %s375, 1
      %p379 = scmp.eq.s32.totalorder %s27, 1
      %p380 = scmp.ne.s32.totalorder %s375, %s377
      %p381 = scmp.eq.s32.totalorder %s27, 0
      %p382 = por %p380, %p381
      %p383 = scmp.ne.s32.totalorder %s375, %s377
      %p384 = scmp.eq.s32.totalorder %s32, 1
      %p385 = por %p383, %p384
      %p386 = scmp.ne.s32.totalorder %s377, %s378
      %p387 = scmp.eq.s32.totalorder %s32, 0
      %p388 = por %p386, %p387
      %p389 = scmp.ne.s32.totalorder %s377, %s378
      %p390 = scmp.eq.s32.totalorder %s33, 1
      %p391 = por %p389, %p390
      %p393 = scmp.ne.s32.totalorder %s378, %s392
      %p394 = scmp.eq.s32.totalorder %s33, 0
      %p395 = por %p393, %p394
      %s397 = sadd.s32 %s396, 1
      %p400 = scmp.eq.s32.totalorder %s27, 1
      %p401 = scmp.ne.s32.totalorder %s396, %s398
      %p402 = scmp.eq.s32.totalorder %s27, 0
      %p403 = por %p401, %p402
      %p404 = scmp.ne.s32.totalorder %s396, %s398
      %p405 = scmp.eq.s32.totalorder %s32, 1
      %p406 = por %p404, %p405
      %p407 = scmp.ne.s32.totalorder %s398, %s399
      %p408 = scmp.eq.s32.totalorder %s32, 0
      %p409 = por %p407, %p408
      %p410 = scmp.ne.s32.totalorder %s398, %s399
      %p411 = scmp.eq.s32.totalorder %s33, 1
      %p412 = por %p410, %p411
      %p414 = scmp.ne.s32.totalorder %s399, %s413
      %p415 = scmp.eq.s32.totalorder %s33, 0
      %p416 = por %p414, %p415
      %s417 = ssub.s32 %s34, %s53
      %s418 = ssub.s32 %s35, %s49
      %s419 = sor.u32 %s417, %s418
      %p420 = scmp.eq.s32.totalorder %s419, 0
      %s422 = sadd.s32 %s421, 1
      %s423 = scalar_select %p420, %s421, %s422
      %p426 = pneg %p420
      %p427 = scmp.eq.s32.totalorder %s27, 1
      %p428 = por %p426, %p427
      %p429 = scmp.ne.s32.totalorder %s421, %s424
      %p430 = scmp.eq.s32.totalorder %s27, 0
      %p431 = por %p429, %p430
      %p432 = scmp.ne.s32.totalorder %s421, %s424
      %p433 = scmp.eq.s32.totalorder %s32, 1
      %p434 = por %p432, %p433
      %p435 = scmp.ne.s32.totalorder %s424, %s425
      %p436 = scmp.eq.s32.totalorder %s32, 0
      %p437 = por %p435, %p436
      %p438 = scmp.ne.s32.totalorder %s424, %s425
      %p439 = scmp.eq.s32.totalorder %s33, 1
      %p440 = por %p438, %p439
      %p442 = scmp.ne.s32.totalorder %s425, %s441
      %p443 = scmp.eq.s32.totalorder %s33, 0
      %p444 = por %p442, %p443
      %p445 = scmp.le.s32.totalorder 1, %s27
      %p446 = scmp.lt.s32.totalorder %s27, 3
      %p447 = pnand %p445, %p446
      %p448 = pneg %p447
      // Predicated region
      $region9: #{tpu_custom_call.1} parent=5 // pred_check
        _
      $region10: #{tpu_custom_call.1} parent=5 // pred_check_branch
        %450 = sbr.rel (%p447) target = $region12
      $region11: #{tpu_custom_call.1} parent=5 // pred_region
        %s451 = ssub.s32 %s27, 1
        // Predicated region
        $region13: #{tpu_custom_call.1} parent=11 // pred_check
          %p452 = pneg %p121
        $region14: #{tpu_custom_call.1} parent=11 // pred_check_branch
          %454 = sbr.rel (%p452) target = $region16
        $region15: #{tpu_custom_call.1} parent=11 // pred_region
          _
        $region16: #{tpu_custom_call.1} parent=11 // pred_fallthru
          _
        // Predicated region
        $region17: #{tpu_custom_call.1} parent=11 // pred_check
          %p455 = pneg %p142
        $region18: #{tpu_custom_call.1} parent=11 // pred_check_branch
          %457 = sbr.rel (%p455) target = $region20
        $region19: #{tpu_custom_call.1} parent=11 // pred_region
          _
        $region20: #{tpu_custom_call.1} parent=11 // pred_fallthru
          _
        // Predicated region
        $region21: #{tpu_custom_call.1} parent=11 // pred_check
          %p458 = pneg %p163
        $region22: #{tpu_custom_call.1} parent=11 // pred_check_branch
          %460 = sbr.rel (%p458) target = $region24
        $region23: #{tpu_custom_call.1} parent=11 // pred_region
          %462 = vsyncadd [#allocation5], 0
          %s463 = sshll.u32 %s4, 4
          %s464 = int_to_ptr.hbm [resolvable:$true] %s463
          %s465 = sshll.u32 [#allocation4], 4
          %s466 = int_to_ptr.vmem [resolvable:$true] %s465
          %471 = dma.hbm_to_vmem [thread:$0]  %s464, 256, %s466, [#allocation5], 64, 64, 4
        $region24: #{tpu_custom_call.1} parent=11 // pred_fallthru
          _
        // Predicated region
        $region25: #{tpu_custom_call.1} parent=11 // pred_check
          %p472 = pneg %p184
        $region26: #{tpu_custom_call.1} parent=11 // pred_check_branch
          %474 = sbr.rel (%p472) target = $region28
        $region27: #{tpu_custom_call.1} parent=11 // pred_region
          _
        $region28: #{tpu_custom_call.1} parent=11 // pred_fallthru
          _
        // Predicated region
        $region29: #{tpu_custom_call.1} parent=11 // pred_check
          %p475 = pneg %p205
        $region30: #{tpu_custom_call.1} parent=11 // pred_check_branch
          %477 = sbr.rel (%p475) target = $region32
        $region31: #{tpu_custom_call.1} parent=11 // pred_region
          %479 = vsyncadd [#allocation8], 0
          %s480 = sshll.u32 %s6, 4
          %s481 = int_to_ptr.hbm [resolvable:$true] %s480
          %s482 = sshll.u32 [#allocation7], 4
          %s483 = int_to_ptr.vmem [resolvable:$true] %s482
          %488 = dma.hbm_to_vmem [thread:$0]  %s481, 256, %s483, [#allocation8], 64, 64, 4
        $region32: #{tpu_custom_call.1} parent=11 // pred_fallthru
          _
        // Predicated region
        $region33: #{tpu_custom_call.1} parent=11 // pred_check
          %p489 = pneg %p226
        $region34: #{tpu_custom_call.1} parent=11 // pred_check_branch
          %491 = sbr.rel (%p489) target = $region36
        $region35: #{tpu_custom_call.1} parent=11 // pred_region
          _
        $region36: #{tpu_custom_call.1} parent=11 // pred_fallthru
          _
        // Predicated region
        $region37: #{tpu_custom_call.1} parent=11 // pred_check
          %p492 = pneg %p247
        $region38: #{tpu_custom_call.1} parent=11 // pred_check_branch
          %494 = sbr.rel (%p492) target = $region40
        $region39: #{tpu_custom_call.1} parent=11 // pred_region
          _
        $region40: #{tpu_custom_call.1} parent=11 // pred_fallthru
          _
        // Predicated region
        $region41: #{tpu_custom_call.1} parent=11 // pred_check
          %p495 = pneg %p268
        $region42: #{tpu_custom_call.1} parent=11 // pred_check_branch
          %497 = sbr.rel (%p495) target = $region44
        $region43: #{tpu_custom_call.1} parent=11 // pred_region
          _
        $region44: #{tpu_custom_call.1} parent=11 // pred_fallthru
          _
        // Predicated region
        $region45: #{tpu_custom_call.1} parent=11 // pred_check
          %p498 = pneg %p294
        $region46: #{tpu_custom_call.1} parent=11 // pred_check_branch
          %500 = sbr.rel (%p498) target = $region48
        $region47: #{tpu_custom_call.1} parent=11 // pred_region
          %502 = vsyncadd [#allocation8], 0
          %s503 = smul.addr %s39, 4
          %s504 = scalar_lea.hbm %s10, %s503
          %s505 = sshll.u32 %s504, 4
          %s506 = int_to_ptr.hbm [resolvable:$true] %s505
          %s507 = sshll.u32 [#allocation9], 4
          %s508 = int_to_ptr.vmem [resolvable:$true] %s507
          %513 = dma.hbm_to_vmem [thread:$0]  %s506, 256, %s508, [#allocation8], 64, 64, 4
        $region48: #{tpu_custom_call.1} parent=11 // pred_fallthru
          _
        // Predicated region
        $region49: #{tpu_custom_call.1} parent=11 // pred_check
          %p514 = pneg %p320
        $region50: #{tpu_custom_call.1} parent=11 // pred_check_branch
          %516 = sbr.rel (%p514) target = $region52
        $region51: #{tpu_custom_call.1} parent=11 // pred_region
          %p517 = scmp.lt.s32.totalorder %s39, 0
          %s518 = scalar_select %p517, %s39, 0
          %s519 = scalar_lea.vmem %s11, %s518
        $region52: #{tpu_custom_call.1} parent=11 // pred_fallthru
          _
        // Predicated region
        $region53: #{tpu_custom_call.1} parent=11 // pred_check
          %p520 = pneg %p346
        $region54: #{tpu_custom_call.1} parent=11 // pred_check_branch
          %522 = sbr.rel (%p520) target = $region56
        $region55: #{tpu_custom_call.1} parent=11 // pred_region
          %s523 = smul.u32 8, %s39
          %p524 = scmp.lt.s32.totalorder %s523, 7
          %s525 = scalar_select %p524, %s523, 7
          %s526 = smul.addr %s525, 4
          %s527 = scalar_lea.vmem %s12, %s526
          %s528 = smul.u32 8, %s39
        $region56: #{tpu_custom_call.1} parent=11 // pred_fallthru
          _
        // Predicated region
        $region57: #{tpu_custom_call.1} parent=11 // pred_check
          %p529 = pneg %p367
        $region58: #{tpu_custom_call.1} parent=11 // pred_check_branch
          %531 = sbr.rel (%p529) target = $region60
        $region59: #{tpu_custom_call.1} parent=11 // pred_region
          _
        $region60: #{tpu_custom_call.1} parent=11 // pred_fallthru
          _
        // Predicated region
        $region61: #{tpu_custom_call.1} parent=11 // pred_check
          %p532 = pneg %p388
        $region62: #{tpu_custom_call.1} parent=11 // pred_check_branch
          %534 = sbr.rel (%p532) target = $region64
        $region63: #{tpu_custom_call.1} parent=11 // pred_region
          _
        $region64: #{tpu_custom_call.1} parent=11 // pred_fallthru
          _
        // Predicated region
        $region65: #{tpu_custom_call.1} parent=11 // pred_check
          %p535 = pneg %p409
        $region66: #{tpu_custom_call.1} parent=11 // pred_check_branch
          %537 = sbr.rel (%p535) target = $region68
        $region67: #{tpu_custom_call.1} parent=11 // pred_region
          _
        $region68: #{tpu_custom_call.1} parent=11 // pred_fallthru
          _
      $region12: #{tpu_custom_call.1} parent=5 // pred_fallthru
        _
      %p538 = scmp.lt.s32.totalorder %s27, 2
      // Predicated region
      $region69: #{tpu_custom_call.1} parent=5 // pred_check
        %p539 = pneg %p538
      $region70: #{tpu_custom_call.1} parent=5 // pred_check_branch
        %541 = sbr.rel (%p539) target = $region72
      $region71: #{tpu_custom_call.1} parent=5 // pred_region
        // Predicated region
        $region73: #{tpu_custom_call.1} parent=71 // pred_check
          %p542 = pneg %p68
        $region74: #{tpu_custom_call.1} parent=71 // pred_check_branch
          %544 = sbr.rel (%p542) target = $region76
        $region75: #{tpu_custom_call.1} parent=71 // pred_region
          %p545 = scmp.lt.s32.totalorder %s34, 1
          %s546 = scalar_select %p545, %s34, 1
          %p547 = scmp.lt.s32.totalorder %s35, 0
          %s548 = scalar_select %p547, %s35, 0
          %s549 = sadd.s32 %s548, %s546
          %s550 = smul.addr %s549, 8
          %s551 = scalar_lea.vmem %s0, %s550
        $region76: #{tpu_custom_call.1} parent=71 // pred_fallthru
          _
        // Predicated region
        $region77: #{tpu_custom_call.1} parent=71 // pred_check
          %p552 = pneg %p94
        $region78: #{tpu_custom_call.1} parent=71 // pred_check_branch
          %554 = sbr.rel (%p552) target = $region80
        $region79: #{tpu_custom_call.1} parent=71 // pred_region
          %p555 = scmp.lt.s32.totalorder %s34, 1
          %s556 = scalar_select %p555, %s34, 1
          %s557 = smul.addr %s556, 8
          %s558 = scalar_lea.vmem %s1, %s557
        $region80: #{tpu_custom_call.1} parent=71 // pred_fallthru
          _
      $region72: #{tpu_custom_call.1} parent=5 // pred_fallthru
        _
      %p559 = scmp.le.s32.totalorder 1, %s27
      %p560 = scmp.lt.s32.totalorder %s27, 3
      %p561 = pnand %p559, %p560
      %p562 = pneg %p561
      // Predicated region
      $region81: #{tpu_custom_call.1} parent=5 // pred_check
        _
      $region82: #{tpu_custom_call.1} parent=5 // pred_check_branch
        %564 = sbr.rel (%p561) target = $region84
      $region83: #{tpu_custom_call.1} parent=5 // pred_region
        %s565 = ssub.s32 %s27, 1
        // Predicated region
        $region85: #{tpu_custom_call.1} parent=83 // pred_check
          %p566 = pneg %p163
        $region86: #{tpu_custom_call.1} parent=83 // pred_check_branch
          %568 = sbr.rel (%p566) target = $region88
        $region87: #{tpu_custom_call.1} parent=83 // pred_region
          %570 = dma.done [#allocation5], 256
        $region88: #{tpu_custom_call.1} parent=83 // pred_fallthru
          _
        // Predicated region
        $region89: #{tpu_custom_call.1} parent=83 // pred_check
          %p571 = pneg %p205
        $region90: #{tpu_custom_call.1} parent=83 // pred_check_branch
          %573 = sbr.rel (%p571) target = $region92
        $region91: #{tpu_custom_call.1} parent=83 // pred_region
          %575 = dma.done [#allocation8], 256
        $region92: #{tpu_custom_call.1} parent=83 // pred_fallthru
          _
        // Predicated region
        $region93: #{tpu_custom_call.1} parent=83 // pred_check
          %p576 = pneg %p294
        $region94: #{tpu_custom_call.1} parent=83 // pred_check_branch
          %578 = sbr.rel (%p576) target = $region96
        $region95: #{tpu_custom_call.1} parent=83 // pred_region
          %580 = dma.done [#allocation8], 256
        $region96: #{tpu_custom_call.1} parent=83 // pred_fallthru
          _
        %p581 = scmp.lt.s32.totalorder %s37, 1
        %s582 = scalar_select %p581, %s37, 1
        %p583 = scmp.lt.s32.totalorder %s38, 0
        %s584 = scalar_select %p583, %s38, 0
        %s585 = sadd.s32 %s584, %s582
        %s586 = smul.addr %s585, 8
        %s587 = scalar_lea.vmem %s0, %s586
        %p588 = pneg %p74
        %p589 = pneg %p71
        %p590 = scmp.lt.s32.totalorder %s37, 1
        %s591 = scalar_select %p590, %s37, 1
        %s592 = smul.addr %s591, 8
        %s593 = scalar_lea.vmem %s1, %s592
        %p594 = pneg %p100
        %p595 = pneg %p97
        %p596 = pneg %p121
        %p597 = pneg %p118
        %p598 = pneg %p142
        %p599 = pneg %p139
        %p600 = pneg %p163
        %p601 = pneg %p160
        %p602 = pneg %p184
        %p603 = pneg %p181
        %p604 = pneg %p205
        %p605 = pneg %p202
        %p606 = pneg %p226
        %p607 = pneg %p223
        %p608 = pneg %p247
        %p609 = pneg %p244
        %p610 = pneg %p268
        %p611 = pneg %p265
        %p612 = pneg %p294
        %p613 = pneg %p291
        %p614 = scmp.lt.s32.totalorder %s39, 0
        %s615 = scalar_select %p614, %s39, 0
        %s616 = scalar_lea.vmem %s11, %s615
        %p617 = pneg %p320
        %p618 = pneg %p317
        %s619 = smul.u32 8, %s39
        %p620 = scmp.lt.s32.totalorder %s619, 7
        %s621 = scalar_select %p620, %s619, 7
        %s622 = smul.addr %s621, 4
        %s623 = scalar_lea.vmem %s12, %s622
        %p624 = pneg %p346
        %p625 = pneg %p343
        %p626 = pneg %p367
        %p627 = pneg %p364
        %p628 = pneg %p388
        %p629 = pneg %p385
        %p630 = pneg %p409
        %p631 = pneg %p406
        %p632 = pneg %p437
        %p633 = pneg %p434
        %s634 = sand.u32 %s424, 1
        %s635 = scalar_lea.sflag [#allocation6], %s634
        %s636 = sand.u32 %s424, 1
        %s637 = smul.addr %s636, 8
        %s638 = scalar_lea.vmem [#allocation10], %s637
        %p639 = scmp.lt.s32.totalorder %s37, 1
        %s640 = scalar_select %p639, %s37, 1
        %p641 = scmp.lt.s32.totalorder %s38, 0
        %s642 = scalar_select %p641, %s38, 0
        %s643 = sadd.s32 %s642, %s640
        %s644 = smul.addr %s643, 8
        %s645 = scalar_lea.vmem %s0, %s644
        %p646 = scmp.lt.s32.totalorder %s37, 1
        %s647 = scalar_select %p646, %s37, 1
        %s648 = smul.addr %s647, 8
        %s649 = scalar_lea.vmem %s1, %s648
        %p650 = scmp.lt.s32.totalorder %s39, 0
        %s651 = scalar_select %p650, %s39, 0
        %s652 = scalar_lea.vmem %s11, %s651
        %s653 = smul.u32 8, %s39
        %p654 = scmp.lt.s32.totalorder %s653, 7
        %s655 = scalar_select %p654, %s653, 7
        %s656 = smul.addr %s655, 4
        %s657 = scalar_lea.vmem %s12, %s656
        %s658 = smul.u32 8, %s39
        %p660 = scmp.eq.s32.totalorder %s39, 0
        // Predicated region
        $region97: #{tpu_custom_call.1} parent=83 // pred_check
          %p661 = pneg %p660
        $region98: #{tpu_custom_call.1} parent=83 // pred_check_branch
          %663 = sbr.rel (%p661) target = $region100
        $region99: #{tpu_custom_call.1} parent=83 // pred_region
          %v664 = vld [vmem:[%s645] sm:$0xff]
          %v665 = vld [vmem:[%s649] sm:$0xff]
          %v666 = vpack.c.bf16 %v664, %v664
          %v667 = vld [vmem:[%s2] sm:$0xf]
          %v668 = vld [vmem:[%s2 + $0x4] sm:$0xf]
          %v669 = vld [vmem:[%s2 + $0x8] sm:$0xf]
          %v670 = vld [vmem:[%s2 + $0xc] sm:$0xf]
          %v671 = vld [vmem:[%s3] sm:$0x1]
          %v673 = vperm.slane %v671, 0
          %v679 = vunpack.c.l.b16 %v667
          %v680 = vunpack.c.l.b16 %v668
          %v681 = vunpack.c.l.b16 %v669
          %v682 = vunpack.c.l.b16 %v670
          %v683 = vpack.c.b16 %v680, %v679
          %v684 = vpack.c.b16 %v682, %v681
          %vm687 = vcmask 261120
          %v689 = vsel %vm687, %v666, 0
          %691 = vmatpush.bf16.msra.mxu0 0
          %692 = vmatpush.bf16.msra.mxu0 0
          %693 = vmatpush.bf16.msra.mxu0 0
          %694 = vmatpush.bf16.msra.mxu0 0
          %695 = vmatpush.bf16.msra.mxu0 0
          %696 = vmatpush.bf16.msra.mxu0 0
          %697 = vmatpush.bf16.msra.mxu0 %v684
          %698 = vmatpush.bf16.msra.mxu0 %v683
          %699 = vmatmul.bf16.gmra.mxu0 %v689
          %v700 = vpop.f32.mrf.mxu0
          %v701 = vadd.f32 %v673, %v700
          %v702 = vpop.f32.mrf.mxu0
          %703 = vdwg.mxu0
          %v704 = vpack.c.bf16 %v665, %v665
          %v705 = vld [vmem:[#allocation4] sm:$0xf]
          %v706 = vld [vmem:[#allocation4 + $0x4] sm:$0xf]
          %v707 = vld [vmem:[#allocation4 + $0x8] sm:$0xf]
          %v708 = vld [vmem:[#allocation4 + $0xc] sm:$0xf]
          %v709 = vld [vmem:[%s5] sm:$0x1]
          %v711 = vperm.slane %v709, 0
          %v717 = vunpack.c.l.b16 %v705
          %v718 = vunpack.c.l.b16 %v706
          %v719 = vunpack.c.l.b16 %v707
          %v720 = vunpack.c.l.b16 %v708
          %v721 = vpack.c.b16 %v718, %v717
          %v722 = vpack.c.b16 %v720, %v719
          %v726 = vsel %vm687, %v704, 0
          %728 = vmatpush.bf16.msra.mxu0 0
          %729 = vmatpush.bf16.msra.mxu0 0
          %730 = vmatpush.bf16.msra.mxu0 0
          %731 = vmatpush.bf16.msra.mxu0 0
          %732 = vmatpush.bf16.msra.mxu0 0
          %733 = vmatpush.bf16.msra.mxu0 0
          %734 = vmatpush.bf16.msra.mxu0 %v722
          %735 = vmatpush.bf16.msra.mxu0 %v721
          %736 = vmatmul.bf16.gmra.mxu0 %v726
          %v737 = vpop.f32.mrf.mxu0
          %v738 = vadd.f32 %v711, %v737
          %v739 = vpop.f32.mrf.mxu0
          %740 = vdwg.mxu0
          %741 = vxpose.xlu0.b32.start [1/16] %v738, 128
          %742 = vxpose.xlu0.b32.cont [2/16] 0.0, 128
          %743 = vxpose.xlu0.b32.cont [3/16] 0.0, 128
          %744 = vxpose.xlu0.b32.cont [4/16] 0.0, 128
          %745 = vxpose.xlu0.b32.cont [5/16] 0.0, 128
          %746 = vxpose.xlu0.b32.cont [6/16] 0.0, 128
          %747 = vxpose.xlu0.b32.cont [7/16] 0.0, 128
          %748 = vxpose.xlu0.b32.cont [8/16] 0.0, 128
          %749 = vxpose.xlu0.b32.cont [9/16] 0.0, 128
          %750 = vxpose.xlu0.b32.cont [10/16] 0.0, 128
          %751 = vxpose.xlu0.b32.cont [11/16] 0.0, 128
          %752 = vxpose.xlu0.b32.cont [12/16] 0.0, 128
          %753 = vxpose.xlu0.b32.cont [13/16] 0.0, 128
          %754 = vxpose.xlu0.b32.cont [14/16] 0.0, 128
          %755 = vxpose.xlu0.b32.cont [15/16] 0.0, 128
          %756 = vxpose.xlu0.b32.end [16/16] 0.0, 128
          %v757 = vpop.trf.xlu0
          %v758 = vpop.trf.xlu0
          %v759 = vpop.trf.xlu0
          %v760 = vpop.trf.xlu0
          %v761 = vpop.trf.xlu0
          %v762 = vpop.trf.xlu0
          %v763 = vpop.trf.xlu0
          %v764 = vpop.trf.xlu0
          %v765 = vpop.trf.xlu0
          %v766 = vpop.trf.xlu0
          %v767 = vpop.trf.xlu0
          %v768 = vpop.trf.xlu0
          %v769 = vpop.trf.xlu0
          %v770 = vpop.trf.xlu0
          %v771 = vpop.trf.xlu0
          %v772 = vpop.trf.xlu0
          %v773 = vpack.c.bf16 %v757, %v757
          %v774 = vpack.c.bf16 %v758, %v758
          %v775 = vpack.c.bf16 %v759, %v759
          %v776 = vpack.c.bf16 %v760, %v760
          %v777 = vpack.c.bf16 %v701, %v701
          %v778 = vpack.c.bf16 %v738, %v738
          %vm779 = vcmask 64512
          %v781 = vsel %vm779, %v777, 0
          %vm783 = vcmask 1043456
          %v785 = vsel %vm783, %v773, 0
          %787 = vmatpush.bf16.msra.mxu0 0
          %788 = vmatpush.bf16.msra.mxu0 0
          %789 = vmatpush.bf16.msra.mxu0 0
          %790 = vmatpush.bf16.msra.mxu0 0
          %791 = vmatpush.bf16.msra.mxu0 0
          %792 = vmatpush.bf16.msra.mxu0 0
          %793 = vmatpush.bf16.msra.mxu0 0
          %794 = vmatpush.bf16.msra.mxu0 %v785
          %795 = vmatmul.bf16.gmra.mxu0 %v781
          %v796 = vpop.f32.mrf.mxu0
          %v797 = vadd.f32 0.0, %v796
          %v798 = vpop.f32.mrf.mxu0
          %799 = vdwg.mxu0
          %v800 = vsel %vm779, %v797, -inf
          %801 = vmax.xlane.f32.xlu0 %v800
          %v802 = vpop.xlane.xlu0 %801
          %v803 = vsub.f32 %v797, %v802
          %v804 = vmul.f32 %v803, 1.442695
          %v805 = vpow.pop %v804
          %v806 = vsel %vm779, %v805, 0.0
          %807 = vadd.xlane.f32.xlu0 %v806
          %v808 = vpop.xlane.xlu0 %807
          %v809 = vrcp.pop %v808
          %v810 = vmul.f32 %v805, %v809
          %v811 = vpack.c.bf16 %v810, %v810
          %v813 = vunpack.c.l.b16 %v778
          %v814 = vpack.c.b16 %v813, %v813
          %815 = vrot.lane.b32.xlu0 %v814, 96
          %v816 = vpop.permute.xlu0 %815
          %v818 = vsel %vm779, %v811, 0
          %v821 = vsel %vm783, %v816, 0
          %823 = vmatpush.bf16.msra.mxu0 0
          %824 = vmatpush.bf16.msra.mxu0 0
          %825 = vmatpush.bf16.msra.mxu0 0
          %826 = vmatpush.bf16.msra.mxu0 0
          %827 = vmatpush.bf16.msra.mxu0 0
          %828 = vmatpush.bf16.msra.mxu0 0
          %829 = vmatpush.bf16.msra.mxu0 0
          %830 = vmatpush.bf16.msra.mxu0 %v821
          %831 = vmatmul.bf16.gmra.mxu0 %v818
          %v832 = vpop.f32.mrf.mxu0
          %v833 = vadd.f32 0.0, %v832
          %v834 = vpop.f32.mrf.mxu0
          %835 = vdwg.mxu0
          %v836 = vpack.c.bf16 %v833, %v833
          %v837 = vld [vmem:[#allocation7] sm:$0xf]
          %v839 = vunpack.c.l.b16 %v777
          %v840 = vpack.c.b16 %v839, %v839
          %841 = vrot.lane.b32.xlu0 %v840, 120
          %v842 = vpop.permute.xlu0 %841
          %v844 = vsel %vm779, %v842, 0
          %v847 = vsel %vm783, %v774, 0
          %849 = vmatpush.bf16.msra.mxu0 0
          %850 = vmatpush.bf16.msra.mxu0 0
          %851 = vmatpush.bf16.msra.mxu0 0
          %852 = vmatpush.bf16.msra.mxu0 0
          %853 = vmatpush.bf16.msra.mxu0 0
          %854 = vmatpush.bf16.msra.mxu0 0
          %855 = vmatpush.bf16.msra.mxu0 0
          %856 = vmatpush.bf16.msra.mxu0 %v847
          %857 = vmatmul.bf16.gmra.mxu0 %v844
          %v858 = vpop.f32.mrf.mxu0
          %v859 = vadd.f32 0.0, %v858
          %v860 = vpop.f32.mrf.mxu0
          %861 = vdwg.mxu0
          %v862 = vsel %vm779, %v859, -inf
          %863 = vmax.xlane.f32.xlu0 %v862
          %v864 = vpop.xlane.xlu0 %863
          %v865 = vsub.f32 %v859, %v864
          %v866 = vmul.f32 %v865, 1.442695
          %v867 = vpow.pop %v866
          %v868 = vsel %vm779, %v867, 0.0
          %869 = vadd.xlane.f32.xlu0 %v868
          %v870 = vpop.xlane.xlu0 %869
          %v871 = vrcp.pop %v870
          %v872 = vmul.f32 %v867, %v871
          %v873 = vpack.c.bf16 %v872, %v872
          %874 = vrot.lane.b32.xlu0 %v814, 88
          %v875 = vpop.permute.xlu0 %874
          %v877 = vsel %vm779, %v873, 0
          %v880 = vsel %vm783, %v875, 0
          %882 = vmatpush.bf16.msra.mxu0 0
          %883 = vmatpush.bf16.msra.mxu0 0
          %884 = vmatpush.bf16.msra.mxu0 0
          %885 = vmatpush.bf16.msra.mxu0 0
          %886 = vmatpush.bf16.msra.mxu0 0
          %887 = vmatpush.bf16.msra.mxu0 0
          %888 = vmatpush.bf16.msra.mxu0 0
          %889 = vmatpush.bf16.msra.mxu0 %v880
          %890 = vmatmul.bf16.gmra.mxu0 %v877
          %v891 = vpop.f32.mrf.mxu0
          %v892 = vadd.f32 0.0, %v891
          %v893 = vpop.f32.mrf.mxu0
          %894 = vdwg.mxu0
          %v895 = vpack.c.bf16 %v892, %v892
          %v896 = vld [vmem:[#allocation7 + $0x4] sm:$0xf]
          %v898 = vsel %vm779, %v895, 0
          %v901 = vsel %vm783, %v896, 0
          %903 = vmatpush.bf16.msra.mxu0 0
          %904 = vmatpush.bf16.msra.mxu0 0
          %905 = vmatpush.bf16.msra.mxu0 0
          %906 = vmatpush.bf16.msra.mxu0 0
          %907 = vmatpush.bf16.msra.mxu0 0
          %908 = vmatpush.bf16.msra.mxu0 0
          %909 = vmatpush.bf16.msra.mxu0 0
          %910 = vmatpush.bf16.msra.mxu0 %v901
          %911 = vmatmul.bf16.gmra.mxu0 %v898
          %v912 = vpop.f32.mrf.mxu0
          %v913 = vadd.f32 0.0, %v912
          %v914 = vpop.f32.mrf.mxu0
          %915 = vdwg.mxu0
          %v917 = vsel %vm779, %v836, 0
          %v920 = vsel %vm783, %v837, 0
          %922 = vmatpush.bf16.msra.mxu0 0
          %923 = vmatpush.bf16.msra.mxu0 0
          %924 = vmatpush.bf16.msra.mxu0 0
          %925 = vmatpush.bf16.msra.mxu0 0
          %926 = vmatpush.bf16.msra.mxu0 0
          %927 = vmatpush.bf16.msra.mxu0 0
          %928 = vmatpush.bf16.msra.mxu0 0
          %929 = vmatpush.bf16.msra.mxu0 %v920
          %930 = vmatmul.bf16.gmra.mxu0 %v917
          %v931 = vpop.f32.mrf.mxu0
          %v932 = vadd.f32 %v913, %v931
          %v933 = vpop.f32.mrf.mxu0
          %934 = vdwg.mxu0
          %935 = vrot.lane.b32.xlu0 %v840, 112
          %v936 = vpop.permute.xlu0 %935
          %v938 = vsel %vm779, %v936, 0
          %v941 = vsel %vm783, %v775, 0
          %943 = vmatpush.bf16.msra.mxu0 0
          %944 = vmatpush.bf16.msra.mxu0 0
          %945 = vmatpush.bf16.msra.mxu0 0
          %946 = vmatpush.bf16.msra.mxu0 0
          %947 = vmatpush.bf16.msra.mxu0 0
          %948 = vmatpush.bf16.msra.mxu0 0
          %949 = vmatpush.bf16.msra.mxu0 0
          %950 = vmatpush.bf16.msra.mxu0 %v941
          %951 = vmatmul.bf16.gmra.mxu0 %v938
          %v952 = vpop.f32.mrf.mxu0
          %v953 = vadd.f32 0.0, %v952
          %v954 = vpop.f32.mrf.mxu0
          %955 = vdwg.mxu0
          %v956 = vsel %vm779, %v953, -inf
          %957 = vmax.xlane.f32.xlu0 %v956
          %v958 = vpop.xlane.xlu0 %957
          %v959 = vsub.f32 %v953, %v958
          %v960 = vmul.f32 %v959, 1.442695
          %v961 = vpow.pop %v960
          %v962 = vsel %vm779, %v961, 0.0
          %963 = vadd.xlane.f32.xlu0 %v962
          %v964 = vpop.xlane.xlu0 %963
          %v965 = vrcp.pop %v964
          %v966 = vmul.f32 %v961, %v965
          %v967 = vpack.c.bf16 %v966, %v966
          %968 = vrot.lane.b32.xlu0 %v814, 80
          %v969 = vpop.permute.xlu0 %968
          %v971 = vsel %vm779, %v967, 0
          %v974 = vsel %vm783, %v969, 0
          %976 = vmatpush.bf16.msra.mxu0 0
          %977 = vmatpush.bf16.msra.mxu0 0
          %978 = vmatpush.bf16.msra.mxu0 0
          %979 = vmatpush.bf16.msra.mxu0 0
          %980 = vmatpush.bf16.msra.mxu0 0
          %981 = vmatpush.bf16.msra.mxu0 0
          %982 = vmatpush.bf16.msra.mxu0 0
          %983 = vmatpush.bf16.msra.mxu0 %v974
          %984 = vmatmul.bf16.gmra.mxu0 %v971
          %v985 = vpop.f32.mrf.mxu0
          %v986 = vadd.f32 0.0, %v985
          %v987 = vpop.f32.mrf.mxu0
          %988 = vdwg.mxu0
          %v989 = vpack.c.bf16 %v986, %v986
          %v990 = vld [vmem:[#allocation7 + $0x8] sm:$0xf]
          %v992 = vsel %vm779, %v989, 0
          %v995 = vsel %vm783, %v990, 0
          %997 = vmatpush.bf16.msra.mxu0 0
          %998 = vmatpush.bf16.msra.mxu0 0
          %999 = vmatpush.bf16.msra.mxu0 0
          %1000 = vmatpush.bf16.msra.mxu0 0
          %1001 = vmatpush.bf16.msra.mxu0 0
          %1002 = vmatpush.bf16.msra.mxu0 0
          %1003 = vmatpush.bf16.msra.mxu0 0
          %1004 = vmatpush.bf16.msra.mxu0 %v995
          %1005 = vmatmul.bf16.gmra.mxu0 %v992
          %v1006 = vpop.f32.mrf.mxu0
          %v1007 = vadd.f32 0.0, %v1006
          %v1008 = vpop.f32.mrf.mxu0
          %1009 = vdwg.mxu0
          %v1010 = vadd.f32 %v932, %v1007
          %1011 = vrot.lane.b32.xlu0 %v840, 104
          %v1012 = vpop.permute.xlu0 %1011
          %v1014 = vsel %vm779, %v1012, 0
          %v1017 = vsel %vm783, %v776, 0
          %1019 = vmatpush.bf16.msra.mxu0 0
          %1020 = vmatpush.bf16.msra.mxu0 0
          %1021 = vmatpush.bf16.msra.mxu0 0
          %1022 = vmatpush.bf16.msra.mxu0 0
          %1023 = vmatpush.bf16.msra.mxu0 0
          %1024 = vmatpush.bf16.msra.mxu0 0
          %1025 = vmatpush.bf16.msra.mxu0 0
          %1026 = vmatpush.bf16.msra.mxu0 %v1017
          %1027 = vmatmul.bf16.gmra.mxu0 %v1014
          %v1028 = vpop.f32.mrf.mxu0
          %v1029 = vadd.f32 0.0, %v1028
          %v1030 = vpop.f32.mrf.mxu0
          %1031 = vdwg.mxu0
          %v1032 = vsel %vm779, %v1029, -inf
          %1033 = vmax.xlane.f32.xlu0 %v1032
          %v1034 = vpop.xlane.xlu0 %1033
          %v1035 = vsub.f32 %v1029, %v1034
          %v1036 = vmul.f32 %v1035, 1.442695
          %v1037 = vpow.pop %v1036
          %v1038 = vsel %vm779, %v1037, 0.0
          %1039 = vadd.xlane.f32.xlu0 %v1038
          %v1040 = vpop.xlane.xlu0 %1039
          %v1041 = vrcp.pop %v1040
          %v1042 = vmul.f32 %v1037, %v1041
          %v1043 = vpack.c.bf16 %v1042, %v1042
          %1044 = vrot.lane.b32.xlu0 %v814, 72
          %v1045 = vpop.permute.xlu0 %1044
          %v1047 = vsel %vm779, %v1043, 0
          %v1050 = vsel %vm783, %v1045, 0
          %1052 = vmatpush.bf16.msra.mxu0 0
          %1053 = vmatpush.bf16.msra.mxu0 0
          %1054 = vmatpush.bf16.msra.mxu0 0
          %1055 = vmatpush.bf16.msra.mxu0 0
          %1056 = vmatpush.bf16.msra.mxu0 0
          %1057 = vmatpush.bf16.msra.mxu0 0
          %1058 = vmatpush.bf16.msra.mxu0 0
          %1059 = vmatpush.bf16.msra.mxu0 %v1050
          %1060 = vmatmul.bf16.gmra.mxu0 %v1047
          %v1061 = vpop.f32.mrf.mxu0
          %v1062 = vadd.f32 0.0, %v1061
          %v1063 = vpop.f32.mrf.mxu0
          %1064 = vdwg.mxu0
          %v1065 = vpack.c.bf16 %v1062, %v1062
          %v1066 = vld [vmem:[#allocation7 + $0xc] sm:$0xf]
          %v1068 = vsel %vm779, %v1065, 0
          %v1071 = vsel %vm783, %v1066, 0
          %1073 = vmatpush.bf16.msra.mxu0 0
          %1074 = vmatpush.bf16.msra.mxu0 0
          %1075 = vmatpush.bf16.msra.mxu0 0
          %1076 = vmatpush.bf16.msra.mxu0 0
          %1077 = vmatpush.bf16.msra.mxu0 0
          %1078 = vmatpush.bf16.msra.mxu0 0
          %1079 = vmatpush.bf16.msra.mxu0 0
          %1080 = vmatpush.bf16.msra.mxu0 %v1071
          %1081 = vmatmul.bf16.gmra.mxu0 %v1068
          %v1082 = vpop.f32.mrf.mxu0
          %v1083 = vadd.f32 0.0, %v1082
          %v1084 = vpop.f32.mrf.mxu0
          %1085 = vdwg.mxu0
          %v1086 = vadd.f32 %v1010, %v1083
          %v1087 = vld [vmem:[%s7] sm:$0x1]
          %v1089 = vperm.slane %v1087, 0
          %v1091 = vadd.f32 %v1086, %v1089
          %v1092 = vadd.f32 %v664, %v1091
          %v1093 = vld [vmem:[%s8] sm:$0x1]
          %v1094 = vld [vmem:[%s9] sm:$0x1]
          %v1095 = vsel %vm687, %v1092, 0.0
          %1096 = vadd.xlane.f32.xlu0 %v1095
          %v1097 = vpop.xlane.xlu0 %1096
          %v1098 = vrcp.pop 32.0
          %v1099 = vmul.f32 32.0, %v1098
          %v1100 = vsub.f32 1.0, %v1099
          %v1101 = vmul.f32 %v1098, %v1100
          %v1102 = vadd.f32 %v1098, %v1101
          %vm1103 = vweird.f32 %v1098
          %v1104 = vsel %vm1103, %v1098, %v1102
          %v1105 = vmul.f32 %v1097, %v1104
          %v1106 = vsub.f32 %v1092, %v1105
          %v1107 = vmul.f32 %v1106, %v1106
          %v1108 = vsel %vm687, %v1107, 0.0
          %1109 = vadd.xlane.f32.xlu0 %v1108
          %v1110 = vpop.xlane.xlu0 %1109
          %v1111 = vmul.f32 %v1110, %v1104
          %v1112 = vadd.f32 %v1111, 1e-05
          %v1113 = vrsqrt.pop %v1112
          %v1114 = vmul.f32 %v1113, %v1112
          %v1115 = vmul.f32 %v1114, %v1113
          %v1116 = vmul.f32 0.5, %v1115
          %v1117 = vsub.f32 1.5, %v1116
          %v1118 = vmul.f32 %v1113, %v1117
          %vm1119 = vweird.f32 %v1112
          %vm1120 = vweird.f32 %v1113
          %vm1121 = vmor %vm1119, %vm1120
          %v1122 = vsel %vm1121, %v1113, %v1118
          %v1123 = vmul.f32 %v1106, %v1122
          %v1125 = vperm.slane %v1093, 0
          %v1127 = vmul.f32 %v1123, %v1125
          %v1129 = vperm.slane %v1094, 0
          %v1131 = vadd.f32 %v1127, %v1129
          %1132 = vst.msk [vmem:[#allocation2] sm:$0xff] %vm687, %v1131
          %1133 = vst.msk [vmem:[#allocation3] sm:$0xff] %vm687, 0.0
        $region100: #{tpu_custom_call.1} parent=83 // pred_fallthru
          _
        %v1134 = vld [vmem:[#allocation2] sm:$0xff]
        %v1135 = vpack.c.bf16 %v1134, %v1134
        %v1136 = vld [vmem:[#allocation9] sm:$0xf]
        %v1137 = vld [vmem:[#allocation9 + $0x4] sm:$0xf]
        %v1138 = vld [vmem:[#allocation9 + $0x8] sm:$0xf]
        %v1139 = vld [vmem:[#allocation9 + $0xc] sm:$0xf]
        %v1140 = vld [vmem:[%s652] sm:$0x1]
        %v1142 = vperm.slane %v1140, 0
        %v1148 = vunpack.c.l.b16 %v1136
        %v1149 = vunpack.c.l.b16 %v1137
        %v1150 = vunpack.c.l.b16 %v1138
        %v1151 = vunpack.c.l.b16 %v1139
        %v1152 = vpack.c.b16 %v1149, %v1148
        %v1153 = vpack.c.b16 %v1151, %v1150
        %vm1156 = vcmask 261120
        %v1158 = vsel %vm1156, %v1135, 0
        %1160 = vmatpush.bf16.msra.mxu0 0
        %1161 = vmatpush.bf16.msra.mxu0 0
        %1162 = vmatpush.bf16.msra.mxu0 0
        %1163 = vmatpush.bf16.msra.mxu0 0
        %1164 = vmatpush.bf16.msra.mxu0 0
        %1165 = vmatpush.bf16.msra.mxu0 0
        %1166 = vmatpush.bf16.msra.mxu0 %v1153
        %1167 = vmatpush.bf16.msra.mxu0 %v1152
        %1168 = vmatmul.bf16.gmra.mxu0 %v1158
        %v1169 = vpop.f32.mrf.mxu0
        %v1170 = vadd.f32 %v1142, %v1169
        %v1171 = vpop.f32.mrf.mxu0
        %1172 = vdwg.mxu0
        %v1173 = vmax.f32 %v1170, 0.0
        %v1174 = vld [vmem:[#allocation3] sm:$0xff]
        %v1175 = vpack.c.bf16 %v1173, %v1173
        %v1176 = vld [vmem:[%s657] sm:$0xf]
        %v1177 = vld [vmem:[%s657 + $0x4] sm:$0xf]
        %v1178 = vld [vmem:[%s657 + $0x8] sm:$0xf]
        %v1179 = vld [vmem:[%s657 + $0xc] sm:$0xf]
        %v1180 = vld [vmem:[%s657 + $0x10] sm:$0xf]
        %v1181 = vld [vmem:[%s657 + $0x14] sm:$0xf]
        %v1182 = vld [vmem:[%s657 + $0x18] sm:$0xf]
        %v1183 = vld [vmem:[%s657 + $0x1c] sm:$0xf]
        %v1192 = vunpack.c.l.b16 %v1176
        %v1193 = vunpack.c.l.b16 %v1177
        %v1194 = vunpack.c.l.b16 %v1178
        %v1195 = vunpack.c.l.b16 %v1179
        %v1196 = vunpack.c.l.b16 %v1180
        %v1197 = vunpack.c.l.b16 %v1181
        %v1198 = vunpack.c.l.b16 %v1182
        %v1199 = vunpack.c.l.b16 %v1183
        %v1200 = vpack.c.b16 %v1193, %v1192
        %v1201 = vpack.c.b16 %v1195, %v1194
        %v1202 = vpack.c.b16 %v1197, %v1196
        %v1203 = vpack.c.b16 %v1199, %v1198
        %vm1208 = vcmask 523264
        %v1210 = vsel %vm1208, %v1175, 0
        %1212 = vmatpush.bf16.msra.mxu0 0
        %1213 = vmatpush.bf16.msra.mxu0 0
        %1214 = vmatpush.bf16.msra.mxu0 0
        %1215 = vmatpush.bf16.msra.mxu0 0
        %1216 = vmatpush.bf16.msra.mxu0 %v1203
        %1217 = vmatpush.bf16.msra.mxu0 %v1202
        %1218 = vmatpush.bf16.msra.mxu0 %v1201
        %1219 = vmatpush.bf16.msra.mxu0 %v1200
        %1220 = vmatmul.bf16.gmra.mxu0 %v1210
        %v1221 = vpop.f32.mrf.mxu0
        %v1222 = vadd.f32 0.0, %v1221
        %v1223 = vpop.f32.mrf.mxu0
        %1224 = vdwg.mxu0
        %v1225 = vadd.f32 %v1174, %v1222
        %1226 = vst.msk [vmem:[#allocation3] sm:$0xff] %vm1156, %v1225
        // Predicated region
        $region101: #{tpu_custom_call.1} parent=83 // pred_check
          %p1227 = pneg %p660
        $region102: #{tpu_custom_call.1} parent=83 // pred_check_branch
          %1229 = sbr.rel (%p1227) target = $region104
        $region103: #{tpu_custom_call.1} parent=83 // pred_region
          %v1230 = vld [vmem:[#allocation3] sm:$0xff]
          %v1231 = vld [vmem:[%s13] sm:$0x1]
          %v1233 = vperm.slane %v1231, 0
          %v1235 = vadd.f32 %v1230, %v1233
          %v1236 = vld [vmem:[#allocation2] sm:$0xff]
          %v1237 = vadd.f32 %v1236, %v1235
          %v1238 = vld [vmem:[%s14] sm:$0x1]
          %v1239 = vld [vmem:[%s15] sm:$0x1]
          %v1240 = vsel %vm1156, %v1237, 0.0
          %1241 = vadd.xlane.f32.xlu0 %v1240
          %v1242 = vpop.xlane.xlu0 %1241
          %v1243 = vrcp.pop 32.0
          %v1244 = vmul.f32 32.0, %v1243
          %v1245 = vsub.f32 1.0, %v1244
          %v1246 = vmul.f32 %v1243, %v1245
          %v1247 = vadd.f32 %v1243, %v1246
          %vm1248 = vweird.f32 %v1243
          %v1249 = vsel %vm1248, %v1243, %v1247
          %v1250 = vmul.f32 %v1242, %v1249
          %v1251 = vsub.f32 %v1237, %v1250
          %v1252 = vmul.f32 %v1251, %v1251
          %v1253 = vsel %vm1156, %v1252, 0.0
          %1254 = vadd.xlane.f32.xlu0 %v1253
          %v1255 = vpop.xlane.xlu0 %1254
          %v1256 = vmul.f32 %v1255, %v1249
          %v1257 = vadd.f32 %v1256, 1e-05
          %v1258 = vrsqrt.pop %v1257
          %v1259 = vmul.f32 %v1258, %v1257
          %v1260 = vmul.f32 %v1259, %v1258
          %v1261 = vmul.f32 0.5, %v1260
          %v1262 = vsub.f32 1.5, %v1261
          %v1263 = vmul.f32 %v1258, %v1262
          %vm1264 = vweird.f32 %v1257
          %vm1265 = vweird.f32 %v1258
          %vm1266 = vmor %vm1264, %vm1265
          %v1267 = vsel %vm1266, %v1258, %v1263
          %v1268 = vmul.f32 %v1251, %v1267
          %v1270 = vperm.slane %v1238, 0
          %v1272 = vmul.f32 %v1268, %v1270
          %v1274 = vperm.slane %v1239, 0
          %v1276 = vadd.f32 %v1272, %v1274
          %1277 = vst.msk [vmem:[%s638] sm:$0xff] %vm1156, %v1276
        $region104: #{tpu_custom_call.1} parent=83 // pred_fallthru
          _
        %s1278 = sand.u32 %s424, 1
        %s1279 = scalar_lea.sflag [#allocation6], %s1278
        %s1280 = sand.u32 %s424, 1
        %s1281 = smul.addr %s1280, 8
        %s1282 = scalar_lea.vmem [#allocation10], %s1281
        // Predicated region
        $region105: #{tpu_custom_call.1} parent=83 // pred_check
          %p1283 = pneg %p434
        $region106: #{tpu_custom_call.1} parent=83 // pred_check_branch
          %1285 = sbr.rel (%p1283) target = $region108
        $region107: #{tpu_custom_call.1} parent=83 // pred_region
          %1287 = vsyncadd %s1279, 0
          %s1288 = sadd.s32 %s38, %s37
          %s1289 = smul.addr %s1288, 8
          %s1290 = scalar_lea.hbm %s16, %s1289
          %s1292 = sshll.u32 %s1282, 4
          %s1293 = int_to_ptr.vmem [resolvable:$true] %s1292
          %s1294 = sshll.u32 %s1290, 4
          %s1295 = int_to_ptr.hbm [resolvable:$true] %s1294
          %1297 = dma.vmem_to_hbm [thread:$0]  %s1293, 128, %s1295, %s1279
        $region108: #{tpu_custom_call.1} parent=83 // pred_fallthru
          _
      $region84: #{tpu_custom_call.1} parent=5 // pred_fallthru
        _
      %p1298 = scmp.le.s32.totalorder 2, %s27
      // Predicated region
      $region109: #{tpu_custom_call.1} parent=5 // pred_check
        %p1299 = pneg %p1298
      $region110: #{tpu_custom_call.1} parent=5 // pred_check_branch
        %1301 = sbr.rel (%p1299) target = $region112
      $region111: #{tpu_custom_call.1} parent=5 // pred_region
        %s1302 = ssub.s32 %s27, 2
        // Predicated region
        $region113: #{tpu_custom_call.1} parent=111 // pred_check
          %p1303 = pneg %p440
        $region114: #{tpu_custom_call.1} parent=111 // pred_check_branch
          %1305 = sbr.rel (%p1303) target = $region116
        $region115: #{tpu_custom_call.1} parent=111 // pred_region
          %s1306 = sand.u32 %s425, 1
          %s1307 = scalar_lea.sflag [#allocation6], %s1306
          %s1308 = sand.u32 %s425, 1
          %s1309 = smul.addr %s1308, 8
          %s1310 = scalar_lea.vmem [#allocation10], %s1309
          %1312 = dma.done %s1307, 128
        $region116: #{tpu_custom_call.1} parent=111 // pred_fallthru
          _
      $region112: #{tpu_custom_call.1} parent=5 // pred_fallthru
        _
    $region6: #{tpu_custom_call.1} parent=1 // loop_footer
      %s31 = sadd.s32 1, %s27
    $region7: #{tpu_custom_call.1} parent=1 // loop_footer_branch
      %26 = sbr.rel target = $region3
    $region8: #{tpu_custom_call.1} parent=1 // loop_exit
      _
    %1313 = vsyncpa [#allocation5], 1
    %s1314 = scalar_lea.sflag [#allocation5], 1
    %1315 = vsyncpa %s1314, 1
    %1316 = vsyncpa [#allocation8], 1
    %1317 = vsyncpa [#allocation6], 1
    %s1318 = scalar_lea.sflag [#allocation6], 1
    %1319 = vsyncpa %s1318, 1

</llo_original>
